<compile_context>
chip_gen: v7x
topology: tpu7x:2x2x1
jax: 0.10.0
libtpu: 0.0.40
codegen_flags: <defaults>
</compile_context>

<pallas_src>
import jax
import jax.numpy as jnp
from jax.experimental import pallas as pl
from jax.experimental.pallas import tpu as pltpu

DIM = 784   # 'dim' in the PyTorch module (token / P axis), fixed by the Linear layers
HID = 512   # 'hidden_dim'
EPS = 1e-5  # nn.LayerNorm default eps

# nn.GELU() default is the exact erf form.  The tanh approximation deviates by at
# most ~1e-3 (well below the bf16 matmul noise already accepted) but moves the
# transcendental to the EUP slot — per the performance review.  Set False for
# bit-closer numerics to the PyTorch module.
USE_TANH_GELU = True


def _gelu_exact(x):
    return 0.5 * x * (1.0 + jax.lax.erf(x * 0.7071067811865476))


def _gelu(x):
    if USE_TANH_GELU:
        c = 0.7978845608028654  # sqrt(2/pi)
        return 0.5 * x * (1.0 + jnp.tanh(c * (x + 0.044715 * (x * x * x))))
    return _gelu_exact(x)


def tokenmix_kernel(x_ref, gamma_ref, beta_ref,
                    w1_ref, b1_ref, w2_ref, b2_ref, w3_ref, b3_ref,
                    o_ref):
    x = x_ref[...].astype(jnp.float32)                     # [Bblk, C, P], lane-dense (P on lanes)
    bb, c, p = x.shape

    # --- LayerNorm over the channel axis C (== last dim of the original [B, P, C]) ---
    mean = jnp.mean(x, axis=1, keepdims=True)              # [Bblk, 1, P]
    var = jnp.mean(jnp.square(x - mean), axis=1, keepdims=True)
    xn = (x - mean) * jax.lax.rsqrt(var + EPS)
    xn = xn * gamma_ref[...] + beta_ref[...]                # (C, 1) broadcasts over (Bblk, C, P)

    # --- collapse (Bblk, C) -> M rows so the MXU sees M = Bblk*C; bf16 operands, f32 accum ---
    xm = xn.reshape(bb * c, p).astype(jnp.bfloat16)         # [M, P]

    h1 = jnp.dot(xm, w1_ref[...],
                 preferred_element_type=jnp.float32) + b1_ref[...]   # [M, HID] f32
    h1 = _gelu(h1).astype(jnp.bfloat16)

    h2 = jnp.dot(h1, w2_ref[...],
                 preferred_element_type=jnp.float32) + b2_ref[...]   # [M, HID] f32
    h2 = _gelu(h2).astype(jnp.bfloat16)

    y = jnp.dot(h2, w3_ref[...],
                preferred_element_type=jnp.float32) + b3_ref[...]    # [M, P] f32

    # --- residual add in the lane-dense [Bblk, C, P] layout; transpose back happens in XLA ---
    o_ref[...] = (x + y.reshape(bb, c, p)).astype(o_ref.dtype)


def _cdiv(a, b):
    return -(-a // b)


def _chip_caps():
    """Per-generation (vmem_limit_bytes, target_rows, tensorcores_per_chip)."""
    vmem_phys = 64 << 20                       # conservative default = v7x per-core VMEM
    try:
        vmem_phys = int(pltpu.get_tpu_info().vmem_capacity_bytes)
    except Exception:
        pass
    # Leave headroom below physical: ~48 MiB on v7x (64 MiB), ~96 MiB on v5e/v6e (128 MiB).
    vmem_limit = min((vmem_phys * 3) // 4, 96 << 20)
    # Per-M-row VMEM (conservative): 2x in + 2x out f32 blocks (784*4 B each) + temporaries.
    per_row = 36 << 10
    fixed = 6 << 20                            # bf16 weights (double-buffered) + biases + slack
    target_rows = max(256, min(2048, (vmem_limit - fixed) // per_row))
    n_cores = 1
    try:
        if "v7" in jax.devices()[0].device_kind.lower():
            n_cores = 2                        # v7x: 2 TensorCores per chip
    except Exception:
        pass
    return int(vmem_limit), int(target_rows), n_cores


def _pick_blocking(B, C, target_rows, n_cores):
    """cdiv-based batch blocking: (Bblk, n_blocks); never forces M below the whole batch."""
    cap = max(1, target_rows // max(C, 1))     # max batches per grid step from the row target
    n_blocks = max(1, _cdiv(B, cap))
    # v7x only: keep >=2 grid steps for the two TensorCores, but only when each step
    # still has M = Bblk*C >= 256 rows (otherwise splitting just starves the MXU).
    if n_cores > 1 and n_blocks == 1 and B >= n_cores and (B // n_cores) * C >= 256:
        n_blocks = n_cores
    bblk = _cdiv(B, n_blocks)
    return bblk, n_blocks


def tokenmix(x, gamma, beta, w1, b1, w2, b2, w3, b3):
    """x: [B, 784, C]; Linear weights given in (in, out) layout (== PyTorch weight.T)."""
    B, P, C = x.shape
    assert P == DIM and w1.shape == (DIM, HID) and w2.shape == (HID, HID) and w3.shape == (HID, DIM)

    vmem_limit, target_rows, n_cores = _chip_caps()
    bblk, n_blocks = _pick_blocking(B, C, target_rows, n_cores)
    b_pad = bblk * n_blocks

    # Lane-dense layout: do 'b p c -> b c p' once in XLA so P=784 sits on the lane axis.
    # TODO(synk): for very large B these two wrapper transposes are ~2 extra HBM passes;
    # an in-kernel XLU transpose of the [P, C] minor tile would remove them.
    x_bcp = jnp.swapaxes(x, 1, 2)                           # [B, C, P]
    if b_pad > B:
        x_bcp = jnp.pad(x_bcp, ((0, b_pad - B), (0, 0), (0, 0)))

    bf16 = jnp.bfloat16

    def const_spec(shape):
        return pl.BlockSpec(shape, lambda b: (0,) * len(shape))

    grid_spec = pltpu.PrefetchScalarGridSpec(
        num_scalar_prefetch=0,
        grid=(n_blocks,),
        in_specs=[
            pl.BlockSpec((bblk, C, P), lambda b: (b, 0, 0)),   # x (b c p)
            const_spec((C, 1)),        # gamma
            const_spec((C, 1)),        # beta
            const_spec((P, HID)),      # w1 (bf16)
            const_spec((1, HID)),      # b1
            const_spec((HID, HID)),    # w2 (bf16)
            const_spec((1, HID)),      # b2
            const_spec((HID, P)),      # w3 (bf16)
            const_spec((1, P)),        # b3
        ],
        out_specs=pl.BlockSpec((bblk, C, P), lambda b: (b, 0, 0)),
    )

    out_bcp = pl.pallas_call(
        tokenmix_kernel,
        out_shape=jax.ShapeDtypeStruct((b_pad, C, P), x.dtype),
        grid_spec=grid_spec,
        compiler_params=pltpu.CompilerParams(
            dimension_semantics=("parallel",),
            vmem_limit_bytes=vmem_limit,
        ),
    )(x_bcp,
      gamma.astype(jnp.float32).reshape(C, 1), beta.astype(jnp.float32).reshape(C, 1),
      w1.astype(bf16), b1.astype(jnp.float32).reshape(1, HID),
      w2.astype(bf16), b2.astype(jnp.float32).reshape(1, HID),
      w3.astype(bf16), b3.astype(jnp.float32).reshape(1, P))

    if b_pad > B:
        out_bcp = out_bcp[:B]
    return jnp.swapaxes(out_bcp, 1, 2)                      # [B, P, C]


def tokenmix_ref(x, gamma, beta, w1, b1, w2, b2, w3, b3):
    """Pure-JAX f32 reference of the PyTorch forward (exact-erf GELU)."""
    mean = jnp.mean(x, axis=-1, keepdims=True)
    var = jnp.mean(jnp.square(x - mean), axis=-1, keepdims=True)
    xn = (x - mean) * jax.lax.rsqrt(var + EPS) * gamma + beta
    t = jnp.swapaxes(xn, 1, 2)                   # b p c -> b c p
    h = _gelu_exact(t @ w1 + b1)
    h = _gelu_exact(h @ w2 + b2)
    y = h @ w3 + b3
    return x + jnp.swapaxes(y, 1, 2)             # b c p -> b p c


if __name__ == "__main__":
    B, C = 2, 8          # batch=2, np (channels)=8; P is fixed at 784 by the module
    key = jax.random.PRNGKey(0)
    ks = jax.random.split(key, 8)

    x = jax.random.normal(ks[0], (B, DIM, C), jnp.float32)

    # deterministic synthetic parameters (Linear weights stored as (in, out) == weight.T)
    gamma = jnp.ones((C,), jnp.float32)
    beta = jnp.zeros((C,), jnp.float32)
    w1 = 0.02 * jax.random.normal(ks[1], (DIM, HID), jnp.float32)
    b1 = 0.02 * jax.random.normal(ks[2], (HID,), jnp.float32)
    w2 = 0.02 * jax.random.normal(ks[3], (HID, HID), jnp.float32)
    b2 = 0.02 * jax.random.normal(ks[4], (HID,), jnp.float32)
    w3 = 0.02 * jax.random.normal(ks[5], (HID, DIM), jnp.float32)
    b3 = 0.02 * jax.random.normal(ks[6], (DIM,), jnp.float32)

    fn = jax.jit(tokenmix)
    out = fn(x, gamma, beta, w1, b1, w2, b2, w3, b3)
    out = jax.block_until_ready(out)

    ref = tokenmix_ref(x, gamma, beta, w1, b1, w2, b2, w3, b3)
    assert out.shape == (B, DIM, C)
    # tolerance absorbs bf16 MXU operands (f32 accumulation) and the tanh-approx GELU
    # (~1e-3 max deviation); LN, biases and the residual path stay f32
    assert jnp.allclose(out, ref, atol=2e-2, rtol=2e-2), "mismatch vs reference"

    print("KERNEL_OK")
</pallas_src>

<mosaic_0001>
module attributes {stable_mosaic.version = 11 : i64} {
  func.func @tokenmix_kernel(%arg0: i32, %arg1: memref<2x8x784xf32, #tpu.memory_space<vmem>>, %arg2: memref<8x1xf32, #tpu.memory_space<vmem>>, %arg3: memref<8x1xf32, #tpu.memory_space<vmem>>, %arg4: memref<784x512xbf16, #tpu.memory_space<vmem>>, %arg5: memref<1x512xf32, #tpu.memory_space<vmem>>, %arg6: memref<512x512xbf16, #tpu.memory_space<vmem>>, %arg7: memref<1x512xf32, #tpu.memory_space<vmem>>, %arg8: memref<512x784xbf16, #tpu.memory_space<vmem>>, %arg9: memref<1x784xf32, #tpu.memory_space<vmem>>, %arg10: memref<2x8x784xf32, #tpu.memory_space<vmem>>) attributes {dimension_semantics = [#tpu.dimension_semantics<parallel>], iteration_bounds = array<i64: 1>, scalar_prefetch = 0 : i64, scratch_operands = 0 : i64, tpu.core_type = #tpu.core_type<tc>, window_params = [{transform_indices = @transform_0, window_bounds = array<i64: 2, 8, 784>}, {pipeline_mode = #tpu.pipeline_mode<synchronous>, transform_indices = @transform_1, window_bounds = array<i64: 8, 1>}, {pipeline_mode = #tpu.pipeline_mode<synchronous>, transform_indices = @transform_2, window_bounds = array<i64: 8, 1>}, {pipeline_mode = #tpu.pipeline_mode<synchronous>, transform_indices = @transform_3, window_bounds = array<i64: 784, 512>}, {pipeline_mode = #tpu.pipeline_mode<synchronous>, transform_indices = @transform_4, window_bounds = array<i64: 1, 512>}, {pipeline_mode = #tpu.pipeline_mode<synchronous>, transform_indices = @transform_5, window_bounds = array<i64: 512, 512>}, {pipeline_mode = #tpu.pipeline_mode<synchronous>, transform_indices = @transform_6, window_bounds = array<i64: 1, 512>}, {pipeline_mode = #tpu.pipeline_mode<synchronous>, transform_indices = @transform_7, window_bounds = array<i64: 512, 784>}, {pipeline_mode = #tpu.pipeline_mode<synchronous>, transform_indices = @transform_8, window_bounds = array<i64: 1, 784>}, {transform_indices = @transform_9, window_bounds = array<i64: 2, 8, 784>}]} {
    %c0 = arith.constant 0 : index
    %c0_0 = arith.constant 0 : index
    %c0_1 = arith.constant 0 : index
    %0 = vector.load %arg1[%c0, %c0_0, %c0_1] : memref<2x8x784xf32, #tpu.memory_space<vmem>>, vector<2x8x784xf32>
    %cst = arith.constant dense<0.000000e+00> : vector<2x784xf32>
    %1 = vector.multi_reduction <add>, %0, %cst [1] : vector<2x8x784xf32> to vector<2x784xf32>
    %2 = vector.shape_cast %1 : vector<2x784xf32> to vector<2x1x784xf32>
    %cst_2 = arith.constant 8.000000e+00 : f32
    %3 = vector.broadcast %cst_2 : f32 to vector<2x1x784xf32>
    %4 = arith.divf %2, %3 : vector<2x1x784xf32>
    %5 = vector.broadcast %4 : vector<2x1x784xf32> to vector<2x8x784xf32>
    %6 = arith.subf %0, %5 : vector<2x8x784xf32>
    %7 = arith.mulf %6, %6 : vector<2x8x784xf32>
    %cst_3 = arith.constant dense<0.000000e+00> : vector<2x784xf32>
    %8 = vector.multi_reduction <add>, %7, %cst_3 [1] : vector<2x8x784xf32> to vector<2x784xf32>
    %9 = vector.shape_cast %8 : vector<2x784xf32> to vector<2x1x784xf32>
    %cst_4 = arith.constant 8.000000e+00 : f32
    %10 = vector.broadcast %cst_4 : f32 to vector<2x1x784xf32>
    %11 = arith.divf %9, %10 : vector<2x1x784xf32>
    %12 = vector.broadcast %4 : vector<2x1x784xf32> to vector<2x8x784xf32>
    %13 = arith.subf %0, %12 : vector<2x8x784xf32>
    %cst_5 = arith.constant 9.99999974E-6 : f32
    %14 = vector.broadcast %cst_5 : f32 to vector<2x1x784xf32>
    %15 = arith.addf %11, %14 : vector<2x1x784xf32>
    %16 = math.rsqrt %15 : vector<2x1x784xf32>
    %17 = vector.broadcast %16 : vector<2x1x784xf32> to vector<2x8x784xf32>
    %18 = arith.mulf %13, %17 : vector<2x8x784xf32>
    %c0_6 = arith.constant 0 : index
    %c0_7 = arith.constant 0 : index
    %19 = vector.load %arg2[%c0_6, %c0_7] : memref<8x1xf32, #tpu.memory_space<vmem>>, vector<8x1xf32>
    %20 = vector.shape_cast %19 : vector<8x1xf32> to vector<1x8x1xf32>
    %21 = vector.broadcast %20 : vector<1x8x1xf32> to vector<2x8x784xf32>
    %22 = arith.mulf %18, %21 : vector<2x8x784xf32>
    %c0_8 = arith.constant 0 : index
    %c0_9 = arith.constant 0 : index
    %23 = vector.load %arg3[%c0_8, %c0_9] : memref<8x1xf32, #tpu.memory_space<vmem>>, vector<8x1xf32>
    %24 = vector.shape_cast %23 : vector<8x1xf32> to vector<1x8x1xf32>
    %25 = vector.broadcast %24 : vector<1x8x1xf32> to vector<2x8x784xf32>
    %26 = arith.addf %22, %25 : vector<2x8x784xf32>
    %27 = vector.shape_cast %26 : vector<2x8x784xf32> to vector<16x784xf32>
    %28 = arith.truncf %27 : vector<16x784xf32> to vector<16x784xbf16>
    %c0_10 = arith.constant 0 : index
    %c0_11 = arith.constant 0 : index
    %29 = vector.load %arg4[%c0_10, %c0_11] : memref<784x512xbf16, #tpu.memory_space<vmem>>, vector<784x512xbf16>
    %cst_12 = arith.constant dense<0.000000e+00> : vector<16x512xf32>
    %30 = tpu.matmul %28, %29, %cst_12 {dimension_numbers = #tpu.dot_dimension_numbers<[1], [0], [0], [1], [0, 0, 1, 1], [], []>} : vector<16x784xbf16>, vector<784x512xbf16>, vector<16x512xf32> -> vector<16x512xf32>
    %c0_13 = arith.constant 0 : index
    %c0_14 = arith.constant 0 : index
    %31 = vector.load %arg5[%c0_13, %c0_14] : memref<1x512xf32, #tpu.memory_space<vmem>>, vector<1x512xf32>
    %32 = vector.broadcast %31 : vector<1x512xf32> to vector<16x512xf32>
    %33 = arith.addf %30, %32 : vector<16x512xf32>
    %cst_15 = arith.constant 5.000000e-01 : f32
    %34 = vector.broadcast %cst_15 : f32 to vector<16x512xf32>
    %35 = arith.mulf %34, %33 : vector<16x512xf32>
    %36 = arith.mulf %33, %33 : vector<16x512xf32>
    %37 = arith.mulf %36, %33 : vector<16x512xf32>
    %cst_16 = arith.constant 4.471500e-02 : f32
    %38 = vector.broadcast %cst_16 : f32 to vector<16x512xf32>
    %39 = arith.mulf %38, %37 : vector<16x512xf32>
    %40 = arith.addf %33, %39 : vector<16x512xf32>
    %cst_17 = arith.constant 0.797884583 : f32
    %41 = vector.broadcast %cst_17 : f32 to vector<16x512xf32>
    %42 = arith.mulf %41, %40 : vector<16x512xf32>
    %43 = math.tanh %42 : vector<16x512xf32>
    %cst_18 = arith.constant 1.000000e+00 : f32
    %44 = vector.broadcast %cst_18 : f32 to vector<16x512xf32>
    %45 = arith.addf %44, %43 : vector<16x512xf32>
    %46 = arith.mulf %35, %45 : vector<16x512xf32>
    %47 = arith.truncf %46 : vector<16x512xf32> to vector<16x512xbf16>
    %c0_19 = arith.constant 0 : index
    %c0_20 = arith.constant 0 : index
    %48 = vector.load %arg6[%c0_19, %c0_20] : memref<512x512xbf16, #tpu.memory_space<vmem>>, vector<512x512xbf16>
    %cst_21 = arith.constant dense<0.000000e+00> : vector<16x512xf32>
    %49 = tpu.matmul %47, %48, %cst_21 {dimension_numbers = #tpu.dot_dimension_numbers<[1], [0], [0], [1], [0, 0, 1, 1], [], []>} : vector<16x512xbf16>, vector<512x512xbf16>, vector<16x512xf32> -> vector<16x512xf32>
    %c0_22 = arith.constant 0 : index
    %c0_23 = arith.constant 0 : index
    %50 = vector.load %arg7[%c0_22, %c0_23] : memref<1x512xf32, #tpu.memory_space<vmem>>, vector<1x512xf32>
    %51 = vector.broadcast %50 : vector<1x512xf32> to vector<16x512xf32>
    %52 = arith.addf %49, %51 : vector<16x512xf32>
    %cst_24 = arith.constant 5.000000e-01 : f32
    %53 = vector.broadcast %cst_24 : f32 to vector<16x512xf32>
    %54 = arith.mulf %53, %52 : vector<16x512xf32>
    %55 = arith.mulf %52, %52 : vector<16x512xf32>
    %56 = arith.mulf %55, %52 : vector<16x512xf32>
    %cst_25 = arith.constant 4.471500e-02 : f32
    %57 = vector.broadcast %cst_25 : f32 to vector<16x512xf32>
    %58 = arith.mulf %57, %56 : vector<16x512xf32>
    %59 = arith.addf %52, %58 : vector<16x512xf32>
    %cst_26 = arith.constant 0.797884583 : f32
    %60 = vector.broadcast %cst_26 : f32 to vector<16x512xf32>
    %61 = arith.mulf %60, %59 : vector<16x512xf32>
    %62 = math.tanh %61 : vector<16x512xf32>
    %cst_27 = arith.constant 1.000000e+00 : f32
    %63 = vector.broadcast %cst_27 : f32 to vector<16x512xf32>
    %64 = arith.addf %63, %62 : vector<16x512xf32>
    %65 = arith.mulf %54, %64 : vector<16x512xf32>
    %66 = arith.truncf %65 : vector<16x512xf32> to vector<16x512xbf16>
    %c0_28 = arith.constant 0 : index
    %c0_29 = arith.constant 0 : index
    %67 = vector.load %arg8[%c0_28, %c0_29] : memref<512x784xbf16, #tpu.memory_space<vmem>>, vector<512x784xbf16>
    %cst_30 = arith.constant dense<0.000000e+00> : vector<16x784xf32>
    %68 = tpu.matmul %66, %67, %cst_30 {dimension_numbers = #tpu.dot_dimension_numbers<[1], [0], [0], [1], [0, 0, 1, 1], [], []>} : vector<16x512xbf16>, vector<512x784xbf16>, vector<16x784xf32> -> vector<16x784xf32>
    %c0_31 = arith.constant 0 : index
    %c0_32 = arith.constant 0 : index
    %69 = vector.load %arg9[%c0_31, %c0_32] : memref<1x784xf32, #tpu.memory_space<vmem>>, vector<1x784xf32>
    %70 = vector.broadcast %69 : vector<1x784xf32> to vector<16x784xf32>
    %71 = arith.addf %68, %70 : vector<16x784xf32>
    %72 = vector.shape_cast %71 : vector<16x784xf32> to vector<2x8x784xf32>
    %73 = arith.addf %0, %72 : vector<2x8x784xf32>
    %c0_33 = arith.constant 0 : index
    %c0_34 = arith.constant 0 : index
    %c0_35 = arith.constant 0 : index
    %74 = vector.load %arg10[%c0_33, %c0_34, %c0_35] : memref<2x8x784xf32, #tpu.memory_space<vmem>>, vector<2x8x784xf32>
    tpu.vector_store %arg10[%c0_33, %c0_34, %c0_35], %73 {strides = array<i32>} : memref<2x8x784xf32, #tpu.memory_space<vmem>>, vector<2x8x784xf32>,
    return
  }
  func.func @transform_0(%arg0: i32) -> (i32, i32, i32) {
    %c0_i32 = arith.constant 0 : i32
    %c0_i32_0 = arith.constant 0 : i32
    %c0_i32_1 = arith.constant 0 : i32
    return %arg0, %c0_i32, %c0_i32_0 : i32, i32, i32
  }
  func.func @transform_1(%arg0: i32) -> (i32, i32) {
    %c0_i32 = arith.constant 0 : i32
    %c0_i32_0 = arith.constant 0 : i32
    %c0_i32_1 = arith.constant 0 : i32
    return %c0_i32, %c0_i32_0 : i32, i32
  }
  func.func @transform_2(%arg0: i32) -> (i32, i32) {
    %c0_i32 = arith.constant 0 : i32
    %c0_i32_0 = arith.constant 0 : i32
    %c0_i32_1 = arith.constant 0 : i32
    return %c0_i32, %c0_i32_0 : i32, i32
  }
  func.func @transform_3(%arg0: i32) -> (i32, i32) {
    %c0_i32 = arith.constant 0 : i32
    %c0_i32_0 = arith.constant 0 : i32
    %c0_i32_1 = arith.constant 0 : i32
    return %c0_i32, %c0_i32_0 : i32, i32
  }
  func.func @transform_4(%arg0: i32) -> (i32, i32) {
    %c0_i32 = arith.constant 0 : i32
    %c0_i32_0 = arith.constant 0 : i32
    %c0_i32_1 = arith.constant 0 : i32
    return %c0_i32, %c0_i32_0 : i32, i32
  }
  func.func @transform_5(%arg0: i32) -> (i32, i32) {
    %c0_i32 = arith.constant 0 : i32
    %c0_i32_0 = arith.constant 0 : i32
    %c0_i32_1 = arith.constant 0 : i32
    return %c0_i32, %c0_i32_0 : i32, i32
  }
  func.func @transform_6(%arg0: i32) -> (i32, i32) {
    %c0_i32 = arith.constant 0 : i32
    %c0_i32_0 = arith.constant 0 : i32
    %c0_i32_1 = arith.constant 0 : i32
    return %c0_i32, %c0_i32_0 : i32, i32
  }
  func.func @transform_7(%arg0: i32) -> (i32, i32) {
    %c0_i32 = arith.constant 0 : i32
    %c0_i32_0 = arith.constant 0 : i32
    %c0_i32_1 = arith.constant 0 : i32
    return %c0_i32, %c0_i32_0 : i32, i32
  }
  func.func @transform_8(%arg0: i32) -> (i32, i32) {
    %c0_i32 = arith.constant 0 : i32
    %c0_i32_0 = arith.constant 0 : i32
    %c0_i32_1 = arith.constant 0 : i32
    return %c0_i32, %c0_i32_0 : i32, i32
  }
  func.func @transform_9(%arg0: i32) -> (i32, i32, i32) {
    %c0_i32 = arith.constant 0 : i32
    %c0_i32_0 = arith.constant 0 : i32
    %c0_i32_1 = arith.constant 0 : i32
    return %arg0, %c0_i32, %c0_i32_0 : i32, i32, i32
  }
}

</mosaic_0001>

<llo_original>
// kernel: tokenmix.1
$region0: #{tokenmix.1}
  #allocation0 [shape = 'u32[]', space=smem, size = 0x4, offset = 0x4, fixed_abs, tag = 'smem constant byte address 0x4 - core index']
  #allocation1 [shape = 'u32[144,128]{1,0:T(1,128)}', space=vmem, size = 0x12000, scoped, tag = 'internal scratch']
  %s0 = inlined_call_operand.vmem [shape: f32[2,8,784], index: 0, kind: input, shape index: {}]
  %s1 = inlined_call_operand.vmem [shape: f32[8,1], index: 1, kind: input, shape index: {}]
  %s2 = inlined_call_operand.vmem [shape: f32[8,1], index: 2, kind: input, shape index: {}]
  %s3 = inlined_call_operand.vmem [shape: bf16[784,512], index: 3, kind: input, shape index: {}]
  %s4 = inlined_call_operand.vmem [shape: f32[1,512], index: 4, kind: input, shape index: {}]
  %s5 = inlined_call_operand.vmem [shape: bf16[512,512], index: 5, kind: input, shape index: {}]
  %s6 = inlined_call_operand.vmem [shape: f32[1,512], index: 6, kind: input, shape index: {}]
  %s7 = inlined_call_operand.vmem [shape: bf16[512,784], index: 7, kind: input, shape index: {}]
  %s8 = inlined_call_operand.vmem [shape: f32[1,784], index: 8, kind: input, shape index: {}]
  %s9 = inlined_call_operand.hbm [shape: f32[2,8,784], index: 9, kind: output, shape index: {}]
  %s10 = sld [smem:[#allocation0]]
  $region46: #{tokenmix.1} parent=0
    _
  %s12 = ssub.s32 1, %s10
  %s13 = scalar_select 0, %s12, %s10
  $region1: #{tokenmix.1} parent=0
    #allocation2 [shape = 'u8[57344]{0}', space=vmem, size = 0xe000, scoped, tag = 'output window, operand 0, single buffered']
    #allocation3 [shape = 's32[1]{0}', space=sflag, size = 0x4, scoped, tag = 'scoped memory for tokenmix.1']
    %14 = vsyncpa [#allocation3], 0
    // Predicated region
    $region2: #{tokenmix.1} parent=1 // pred_check
      _
    $region3: #{tokenmix.1} parent=1 // pred_check_branch
      %16 = sbr.rel (0) target = $region5
    $region4: #{tokenmix.1} parent=1 // pred_region
      _
    $region5: #{tokenmix.1} parent=1 // pred_fallthru
      _
    // Predicated region
    $region6: #{tokenmix.1} parent=1 // pred_check
      _
    $region7: #{tokenmix.1} parent=1 // pred_check_branch
      %18 = sbr.rel (0) target = $region9
    $region8: #{tokenmix.1} parent=1 // pred_region
      _
    $region9: #{tokenmix.1} parent=1 // pred_fallthru
      _
    // Predicated region
    $region10: #{tokenmix.1} parent=1 // pred_check
      _
    $region11: #{tokenmix.1} parent=1 // pred_check_branch
      %20 = sbr.rel (0) target = $region13
    $region12: #{tokenmix.1} parent=1 // pred_region
      _
    $region13: #{tokenmix.1} parent=1 // pred_fallthru
      _
    // Predicated region
    $region14: #{tokenmix.1} parent=1 // pred_check
      _
    $region15: #{tokenmix.1} parent=1 // pred_check_branch
      %22 = sbr.rel (0) target = $region17
    $region16: #{tokenmix.1} parent=1 // pred_region
      _
    $region17: #{tokenmix.1} parent=1 // pred_fallthru
      _
    // Predicated region
    $region18: #{tokenmix.1} parent=1 // pred_check
      _
    $region19: #{tokenmix.1} parent=1 // pred_check_branch
      %24 = sbr.rel (0) target = $region21
    $region20: #{tokenmix.1} parent=1 // pred_region
      _
    $region21: #{tokenmix.1} parent=1 // pred_fallthru
      _
    // Predicated region
    $region22: #{tokenmix.1} parent=1 // pred_check
      _
    $region23: #{tokenmix.1} parent=1 // pred_check_branch
      %26 = sbr.rel (0) target = $region25
    $region24: #{tokenmix.1} parent=1 // pred_region
      _
    $region25: #{tokenmix.1} parent=1 // pred_fallthru
      _
    // Predicated region
    $region26: #{tokenmix.1} parent=1 // pred_check
      _
    $region27: #{tokenmix.1} parent=1 // pred_check_branch
      %28 = sbr.rel (0) target = $region29
    $region28: #{tokenmix.1} parent=1 // pred_region
      _
    $region29: #{tokenmix.1} parent=1 // pred_fallthru
      _
    // Predicated region
    $region30: #{tokenmix.1} parent=1 // pred_check
      _
    $region31: #{tokenmix.1} parent=1 // pred_check_branch
      %30 = sbr.rel (0) target = $region33
    $region32: #{tokenmix.1} parent=1 // pred_region
      _
    $region33: #{tokenmix.1} parent=1 // pred_fallthru
      _
    // Predicated region
    $region34: #{tokenmix.1} parent=1 // pred_check
      _
    $region35: #{tokenmix.1} parent=1 // pred_check_branch
      %32 = sbr.rel (0) target = $region37
    $region36: #{tokenmix.1} parent=1 // pred_region
      _
    $region37: #{tokenmix.1} parent=1 // pred_fallthru
      _
    %v34 = vld [vmem:[%s0] sm:$0xff]
    %v35 = vld [vmem:[%s0 + $0x8] sm:$0xff]
    %v36 = vld [vmem:[%s0 + $0x10] sm:$0xff]
    %v37 = vld [vmem:[%s0 + $0x18] sm:$0xff]
    %v38 = vld [vmem:[%s0 + $0x20] sm:$0xff]
    %v39 = vld [vmem:[%s0 + $0x28] sm:$0xff]
    %v40 = vld [vmem:[%s0 + $0x30] sm:$0xff]
    %v41 = vld [vmem:[%s0 + $0x38] sm:$0xff]
    %v42 = vld [vmem:[%s0 + $0x40] sm:$0xff]
    %v43 = vld [vmem:[%s0 + $0x48] sm:$0xff]
    %v44 = vld [vmem:[%s0 + $0x50] sm:$0xff]
    %v45 = vld [vmem:[%s0 + $0x58] sm:$0xff]
    %v46 = vld [vmem:[%s0 + $0x60] sm:$0xff]
    %v47 = vld [vmem:[%s0 + $0x68] sm:$0xff]
    %v48 = vrot.slane %v34, 4
    %v49 = vadd.f32 %v34, %v48
    %v50 = vrot.slane %v49, 2
    %v51 = vadd.f32 %v49, %v50
    %v52 = vrot.slane %v51, 1
    %v53 = vadd.f32 %v51, %v52
    %v54 = vrot.slane %v35, 4
    %v55 = vadd.f32 %v35, %v54
    %v56 = vrot.slane %v55, 2
    %v57 = vadd.f32 %v55, %v56
    %v58 = vrot.slane %v57, 1
    %v59 = vadd.f32 %v57, %v58
    %v60 = vrot.slane %v36, 4
    %v61 = vadd.f32 %v36, %v60
    %v62 = vrot.slane %v61, 2
    %v63 = vadd.f32 %v61, %v62
    %v64 = vrot.slane %v63, 1
    %v65 = vadd.f32 %v63, %v64
    %v66 = vrot.slane %v37, 4
    %v67 = vadd.f32 %v37, %v66
    %v68 = vrot.slane %v67, 2
    %v69 = vadd.f32 %v67, %v68
    %v70 = vrot.slane %v69, 1
    %v71 = vadd.f32 %v69, %v70
    %v72 = vrot.slane %v38, 4
    %v73 = vadd.f32 %v38, %v72
    %v74 = vrot.slane %v73, 2
    %v75 = vadd.f32 %v73, %v74
    %v76 = vrot.slane %v75, 1
    %v77 = vadd.f32 %v75, %v76
    %v78 = vrot.slane %v39, 4
    %v79 = vadd.f32 %v39, %v78
    %v80 = vrot.slane %v79, 2
    %v81 = vadd.f32 %v79, %v80
    %v82 = vrot.slane %v81, 1
    %v83 = vadd.f32 %v81, %v82
    %vm84 = vcmask 130048
    %v85 = vsel %vm84, %v40, 0.0
    %v86 = vrot.slane %v85, 4
    %v87 = vadd.f32 %v85, %v86
    %v88 = vrot.slane %v87, 2
    %v89 = vadd.f32 %v87, %v88
    %v90 = vrot.slane %v89, 1
    %v91 = vadd.f32 %v89, %v90
    %v92 = vrot.slane %v41, 4
    %v93 = vadd.f32 %v41, %v92
    %v94 = vrot.slane %v93, 2
    %v95 = vadd.f32 %v93, %v94
    %v96 = vrot.slane %v95, 1
    %v97 = vadd.f32 %v95, %v96
    %v98 = vrot.slane %v42, 4
    %v99 = vadd.f32 %v42, %v98
    %v100 = vrot.slane %v99, 2
    %v101 = vadd.f32 %v99, %v100
    %v102 = vrot.slane %v101, 1
    %v103 = vadd.f32 %v101, %v102
    %v104 = vrot.slane %v43, 4
    %v105 = vadd.f32 %v43, %v104
    %v106 = vrot.slane %v105, 2
    %v107 = vadd.f32 %v105, %v106
    %v108 = vrot.slane %v107, 1
    %v109 = vadd.f32 %v107, %v108
    %v110 = vrot.slane %v44, 4
    %v111 = vadd.f32 %v44, %v110
    %v112 = vrot.slane %v111, 2
    %v113 = vadd.f32 %v111, %v112
    %v114 = vrot.slane %v113, 1
    %v115 = vadd.f32 %v113, %v114
    %v116 = vrot.slane %v45, 4
    %v117 = vadd.f32 %v45, %v116
    %v118 = vrot.slane %v117, 2
    %v119 = vadd.f32 %v117, %v118
    %v120 = vrot.slane %v119, 1
    %v121 = vadd.f32 %v119, %v120
    %v122 = vrot.slane %v46, 4
    %v123 = vadd.f32 %v46, %v122
    %v124 = vrot.slane %v123, 2
    %v125 = vadd.f32 %v123, %v124
    %v126 = vrot.slane %v125, 1
    %v127 = vadd.f32 %v125, %v126
    %v128 = vsel %vm84, %v47, 0.0
    %v129 = vrot.slane %v128, 4
    %v130 = vadd.f32 %v128, %v129
    %v131 = vrot.slane %v130, 2
    %v132 = vadd.f32 %v130, %v131
    %v133 = vrot.slane %v132, 1
    %v134 = vadd.f32 %v132, %v133
    %v135 = vrcp.pop 8.0
    %v136 = vmul.f32 %v53, %v135
    %v137 = vmul.f32 %v59, %v135
    %v138 = vmul.f32 %v65, %v135
    %v139 = vmul.f32 %v71, %v135
    %v140 = vmul.f32 %v77, %v135
    %v141 = vmul.f32 %v83, %v135
    %v142 = vmul.f32 %v91, %v135
    %v143 = vmul.f32 %v97, %v135
    %v144 = vmul.f32 %v103, %v135
    %v145 = vmul.f32 %v109, %v135
    %v146 = vmul.f32 %v115, %v135
    %v147 = vmul.f32 %v121, %v135
    %v148 = vmul.f32 %v127, %v135
    %v149 = vmul.f32 %v134, %v135
    %v150 = vsub.f32 %v34, %v136
    %v151 = vsub.f32 %v35, %v137
    %v152 = vsub.f32 %v36, %v138
    %v153 = vsub.f32 %v37, %v139
    %v154 = vsub.f32 %v38, %v140
    %v155 = vsub.f32 %v39, %v141
    %v156 = vsub.f32 %v40, %v142
    %v157 = vsub.f32 %v41, %v143
    %v158 = vsub.f32 %v42, %v144
    %v159 = vsub.f32 %v43, %v145
    %v160 = vsub.f32 %v44, %v146
    %v161 = vsub.f32 %v45, %v147
    %v162 = vsub.f32 %v46, %v148
    %v163 = vsub.f32 %v47, %v149
    %v164 = vmul.f32 %v150, %v150
    %v165 = vmul.f32 %v151, %v151
    %v166 = vmul.f32 %v152, %v152
    %v167 = vmul.f32 %v153, %v153
    %v168 = vmul.f32 %v154, %v154
    %v169 = vmul.f32 %v155, %v155
    %v170 = vmul.f32 %v156, %v156
    %v171 = vmul.f32 %v157, %v157
    %v172 = vmul.f32 %v158, %v158
    %v173 = vmul.f32 %v159, %v159
    %v174 = vmul.f32 %v160, %v160
    %v175 = vmul.f32 %v161, %v161
    %v176 = vmul.f32 %v162, %v162
    %v177 = vmul.f32 %v163, %v163
    %v178 = vrot.slane %v164, 4
    %v179 = vadd.f32 %v164, %v178
    %v180 = vrot.slane %v179, 2
    %v181 = vadd.f32 %v179, %v180
    %v182 = vrot.slane %v181, 1
    %v183 = vadd.f32 %v181, %v182
    %v184 = vrot.slane %v165, 4
    %v185 = vadd.f32 %v165, %v184
    %v186 = vrot.slane %v185, 2
    %v187 = vadd.f32 %v185, %v186
    %v188 = vrot.slane %v187, 1
    %v189 = vadd.f32 %v187, %v188
    %v190 = vrot.slane %v166, 4
    %v191 = vadd.f32 %v166, %v190
    %v192 = vrot.slane %v191, 2
    %v193 = vadd.f32 %v191, %v192
    %v194 = vrot.slane %v193, 1
    %v195 = vadd.f32 %v193, %v194
    %v196 = vrot.slane %v167, 4
    %v197 = vadd.f32 %v167, %v196
    %v198 = vrot.slane %v197, 2
    %v199 = vadd.f32 %v197, %v198
    %v200 = vrot.slane %v199, 1
    %v201 = vadd.f32 %v199, %v200
    %v202 = vrot.slane %v168, 4
    %v203 = vadd.f32 %v168, %v202
    %v204 = vrot.slane %v203, 2
    %v205 = vadd.f32 %v203, %v204
    %v206 = vrot.slane %v205, 1
    %v207 = vadd.f32 %v205, %v206
    %v208 = vrot.slane %v169, 4
    %v209 = vadd.f32 %v169, %v208
    %v210 = vrot.slane %v209, 2
    %v211 = vadd.f32 %v209, %v210
    %v212 = vrot.slane %v211, 1
    %v213 = vadd.f32 %v211, %v212
    %v214 = vsel %vm84, %v170, 0.0
    %v215 = vrot.slane %v214, 4
    %v216 = vadd.f32 %v214, %v215
    %v217 = vrot.slane %v216, 2
    %v218 = vadd.f32 %v216, %v217
    %v219 = vrot.slane %v218, 1
    %v220 = vadd.f32 %v218, %v219
    %v221 = vrot.slane %v171, 4
    %v222 = vadd.f32 %v171, %v221
    %v223 = vrot.slane %v222, 2
    %v224 = vadd.f32 %v222, %v223
    %v225 = vrot.slane %v224, 1
    %v226 = vadd.f32 %v224, %v225
    %v227 = vrot.slane %v172, 4
    %v228 = vadd.f32 %v172, %v227
    %v229 = vrot.slane %v228, 2
    %v230 = vadd.f32 %v228, %v229
    %v231 = vrot.slane %v230, 1
    %v232 = vadd.f32 %v230, %v231
    %v233 = vrot.slane %v173, 4
    %v234 = vadd.f32 %v173, %v233
    %v235 = vrot.slane %v234, 2
    %v236 = vadd.f32 %v234, %v235
    %v237 = vrot.slane %v236, 1
    %v238 = vadd.f32 %v236, %v237
    %v239 = vrot.slane %v174, 4
    %v240 = vadd.f32 %v174, %v239
    %v241 = vrot.slane %v240, 2
    %v242 = vadd.f32 %v240, %v241
    %v243 = vrot.slane %v242, 1
    %v244 = vadd.f32 %v242, %v243
    %v245 = vrot.slane %v175, 4
    %v246 = vadd.f32 %v175, %v245
    %v247 = vrot.slane %v246, 2
    %v248 = vadd.f32 %v246, %v247
    %v249 = vrot.slane %v248, 1
    %v250 = vadd.f32 %v248, %v249
    %v251 = vrot.slane %v176, 4
    %v252 = vadd.f32 %v176, %v251
    %v253 = vrot.slane %v252, 2
    %v254 = vadd.f32 %v252, %v253
    %v255 = vrot.slane %v254, 1
    %v256 = vadd.f32 %v254, %v255
    %v257 = vsel %vm84, %v177, 0.0
    %v258 = vrot.slane %v257, 4
    %v259 = vadd.f32 %v257, %v258
    %v260 = vrot.slane %v259, 2
    %v261 = vadd.f32 %v259, %v260
    %v262 = vrot.slane %v261, 1
    %v263 = vadd.f32 %v261, %v262
    %v264 = vmul.f32 %v183, %v135
    %v265 = vmul.f32 %v189, %v135
    %v266 = vmul.f32 %v195, %v135
    %v267 = vmul.f32 %v201, %v135
    %v268 = vmul.f32 %v207, %v135
    %v269 = vmul.f32 %v213, %v135
    %v270 = vmul.f32 %v220, %v135
    %v271 = vmul.f32 %v226, %v135
    %v272 = vmul.f32 %v232, %v135
    %v273 = vmul.f32 %v238, %v135
    %v274 = vmul.f32 %v244, %v135
    %v275 = vmul.f32 %v250, %v135
    %v276 = vmul.f32 %v256, %v135
    %v277 = vmul.f32 %v263, %v135
    %v278 = vadd.f32 %v264, 1e-05
    %v279 = vadd.f32 %v265, 1e-05
    %v280 = vadd.f32 %v266, 1e-05
    %v281 = vadd.f32 %v267, 1e-05
    %v282 = vadd.f32 %v268, 1e-05
    %v283 = vadd.f32 %v269, 1e-05
    %v284 = vadd.f32 %v270, 1e-05
    %v285 = vadd.f32 %v271, 1e-05
    %v286 = vadd.f32 %v272, 1e-05
    %v287 = vadd.f32 %v273, 1e-05
    %v288 = vadd.f32 %v274, 1e-05
    %v289 = vadd.f32 %v275, 1e-05
    %v290 = vadd.f32 %v276, 1e-05
    %v291 = vadd.f32 %v277, 1e-05
    %v292 = vrsqrt.pop %v278
    %v293 = vrsqrt.pop %v279
    %v294 = vrsqrt.pop %v280
    %v295 = vrsqrt.pop %v281
    %v296 = vrsqrt.pop %v282
    %v297 = vrsqrt.pop %v283
    %v298 = vrsqrt.pop %v284
    %v299 = vrsqrt.pop %v285
    %v300 = vrsqrt.pop %v286
    %v301 = vrsqrt.pop %v287
    %v302 = vrsqrt.pop %v288
    %v303 = vrsqrt.pop %v289
    %v304 = vrsqrt.pop %v290
    %v305 = vrsqrt.pop %v291
    %v306 = vmul.f32 %v150, %v292
    %v307 = vmul.f32 %v151, %v293
    %v308 = vmul.f32 %v152, %v294
    %v309 = vmul.f32 %v153, %v295
    %v310 = vmul.f32 %v154, %v296
    %v311 = vmul.f32 %v155, %v297
    %v312 = vmul.f32 %v156, %v298
    %v313 = vmul.f32 %v157, %v299
    %v314 = vmul.f32 %v158, %v300
    %v315 = vmul.f32 %v159, %v301
    %v316 = vmul.f32 %v160, %v302
    %v317 = vmul.f32 %v161, %v303
    %v318 = vmul.f32 %v162, %v304
    %v319 = vmul.f32 %v163, %v305
    %v320 = vld [vmem:[%s1] sm:$0xff]
    %322 = vset.pattern.permute.xlu0 0
    %323 = vperm.xlu0 %322, %v320
    %v324 = vpop.permute.xlu0 %323
    %v326 = vmul.f32 %v306, %v324
    %v327 = vmul.f32 %v307, %v324
    %v328 = vmul.f32 %v308, %v324
    %v329 = vmul.f32 %v309, %v324
    %v330 = vmul.f32 %v310, %v324
    %v331 = vmul.f32 %v311, %v324
    %v332 = vmul.f32 %v312, %v324
    %v333 = vmul.f32 %v313, %v324
    %v334 = vmul.f32 %v314, %v324
    %v335 = vmul.f32 %v315, %v324
    %v336 = vmul.f32 %v316, %v324
    %v337 = vmul.f32 %v317, %v324
    %v338 = vmul.f32 %v318, %v324
    %v339 = vmul.f32 %v319, %v324
    %v340 = vld [vmem:[%s2] sm:$0xff]
    %342 = vset.pattern.permute.xlu0 0
    %343 = vperm.xlu0 %342, %v340
    %v344 = vpop.permute.xlu0 %343
    %v346 = vadd.f32 %v326, %v344
    %v347 = vadd.f32 %v327, %v344
    %v348 = vadd.f32 %v328, %v344
    %v349 = vadd.f32 %v329, %v344
    %v350 = vadd.f32 %v330, %v344
    %v351 = vadd.f32 %v331, %v344
    %v352 = vadd.f32 %v332, %v344
    %v353 = vadd.f32 %v333, %v344
    %v354 = vadd.f32 %v334, %v344
    %v355 = vadd.f32 %v335, %v344
    %v356 = vadd.f32 %v336, %v344
    %v357 = vadd.f32 %v337, %v344
    %v358 = vadd.f32 %v338, %v344
    %v359 = vadd.f32 %v339, %v344
    %v360 = vpack.c.bf16 %v353, %v346
    %v361 = vpack.c.bf16 %v354, %v347
    %v362 = vpack.c.bf16 %v355, %v348
    %v363 = vpack.c.bf16 %v356, %v349
    %v364 = vpack.c.bf16 %v357, %v350
    %v365 = vpack.c.bf16 %v358, %v351
    %v366 = vpack.c.bf16 %v359, %v352
    %v367 = vld [vmem:[%s3] sm:$0xff]
    %v368 = vld [vmem:[%s3 + $0x8] sm:$0xff]
    %v369 = vld [vmem:[%s3 + $0x10] sm:$0xff]
    %v370 = vld [vmem:[%s3 + $0x18] sm:$0xff]
    %v371 = vld [vmem:[%s3 + $0x20] sm:$0xff]
    %v372 = vld [vmem:[%s3 + $0x28] sm:$0xff]
    %v373 = vld [vmem:[%s3 + $0x30] sm:$0xff]
    %v374 = vld [vmem:[%s3 + $0x38] sm:$0xff]
    %v375 = vld [vmem:[%s3 + $0x40] sm:$0xff]
    %v376 = vld [vmem:[%s3 + $0x48] sm:$0xff]
    %v377 = vld [vmem:[%s3 + $0x50] sm:$0xff]
    %v378 = vld [vmem:[%s3 + $0x58] sm:$0xff]
    %v379 = vld [vmem:[%s3 + $0x60] sm:$0xff]
    %v380 = vld [vmem:[%s3 + $0x68] sm:$0xff]
    %v381 = vld [vmem:[%s3 + $0x70] sm:$0xff]
    %v382 = vld [vmem:[%s3 + $0x78] sm:$0xff]
    %v383 = vld [vmem:[%s3 + $0x80] sm:$0xff]
    %v384 = vld [vmem:[%s3 + $0x88] sm:$0xff]
    %v385 = vld [vmem:[%s3 + $0x90] sm:$0xff]
    %v386 = vld [vmem:[%s3 + $0x98] sm:$0xff]
    %v387 = vld [vmem:[%s3 + $0xa0] sm:$0xff]
    %v388 = vld [vmem:[%s3 + $0xa8] sm:$0xff]
    %v389 = vld [vmem:[%s3 + $0xb0] sm:$0xff]
    %v390 = vld [vmem:[%s3 + $0xb8] sm:$0xff]
    %v391 = vld [vmem:[%s3 + $0xc0] sm:$0xff]
    %v392 = vld [vmem:[%s3 + $0xc8] sm:$0xff]
    %v393 = vld [vmem:[%s3 + $0xd0] sm:$0xff]
    %v394 = vld [vmem:[%s3 + $0xd8] sm:$0xff]
    %v395 = vld [vmem:[%s3 + $0xe0] sm:$0xff]
    %v396 = vld [vmem:[%s3 + $0xe8] sm:$0xff]
    %v397 = vld [vmem:[%s3 + $0xf0] sm:$0xff]
    %v398 = vld [vmem:[%s3 + $0xf8] sm:$0xff]
    %v399 = vld [vmem:[%s3 + $0x100] sm:$0xff]
    %v400 = vld [vmem:[%s3 + $0x108] sm:$0xff]
    %v401 = vld [vmem:[%s3 + $0x110] sm:$0xff]
    %v402 = vld [vmem:[%s3 + $0x118] sm:$0xff]
    %v403 = vld [vmem:[%s3 + $0x120] sm:$0xff]
    %v404 = vld [vmem:[%s3 + $0x128] sm:$0xff]
    %v405 = vld [vmem:[%s3 + $0x130] sm:$0xff]
    %v406 = vld [vmem:[%s3 + $0x138] sm:$0xff]
    %v407 = vld [vmem:[%s3 + $0x140] sm:$0xff]
    %v408 = vld [vmem:[%s3 + $0x148] sm:$0xff]
    %v409 = vld [vmem:[%s3 + $0x150] sm:$0xff]
    %v410 = vld [vmem:[%s3 + $0x158] sm:$0xff]
    %v411 = vld [vmem:[%s3 + $0x160] sm:$0xff]
    %v412 = vld [vmem:[%s3 + $0x168] sm:$0xff]
    %v413 = vld [vmem:[%s3 + $0x170] sm:$0xff]
    %v414 = vld [vmem:[%s3 + $0x178] sm:$0xff]
    %v415 = vld [vmem:[%s3 + $0x180] sm:$0xff]
    %v416 = vld [vmem:[%s3 + $0x188] sm:$0xff]
    %v417 = vld [vmem:[%s3 + $0x190] sm:$0xff]
    %v418 = vld [vmem:[%s3 + $0x198] sm:$0xff]
    %v419 = vld [vmem:[%s3 + $0x1a0] sm:$0xff]
    %v420 = vld [vmem:[%s3 + $0x1a8] sm:$0xff]
    %v421 = vld [vmem:[%s3 + $0x1b0] sm:$0xff]
    %v422 = vld [vmem:[%s3 + $0x1b8] sm:$0xff]
    %v423 = vld [vmem:[%s3 + $0x1c0] sm:$0xff]
    %v424 = vld [vmem:[%s3 + $0x1c8] sm:$0xff]
    %v425 = vld [vmem:[%s3 + $0x1d0] sm:$0xff]
    %v426 = vld [vmem:[%s3 + $0x1d8] sm:$0xff]
    %v427 = vld [vmem:[%s3 + $0x1e0] sm:$0xff]
    %v428 = vld [vmem:[%s3 + $0x1e8] sm:$0xff]
    %v429 = vld [vmem:[%s3 + $0x1f0] sm:$0xff]
    %v430 = vld [vmem:[%s3 + $0x1f8] sm:$0xff]
    %v431 = vld [vmem:[%s3 + $0x200] sm:$0xff]
    %v432 = vld [vmem:[%s3 + $0x208] sm:$0xff]
    %v433 = vld [vmem:[%s3 + $0x210] sm:$0xff]
    %v434 = vld [vmem:[%s3 + $0x218] sm:$0xff]
    %v435 = vld [vmem:[%s3 + $0x220] sm:$0xff]
    %v436 = vld [vmem:[%s3 + $0x228] sm:$0xff]
    %v437 = vld [vmem:[%s3 + $0x230] sm:$0xff]
    %v438 = vld [vmem:[%s3 + $0x238] sm:$0xff]
    %v439 = vld [vmem:[%s3 + $0x240] sm:$0xff]
    %v440 = vld [vmem:[%s3 + $0x248] sm:$0xff]
    %v441 = vld [vmem:[%s3 + $0x250] sm:$0xff]
    %v442 = vld [vmem:[%s3 + $0x258] sm:$0xff]
    %v443 = vld [vmem:[%s3 + $0x260] sm:$0xff]
    %v444 = vld [vmem:[%s3 + $0x268] sm:$0xff]
    %v445 = vld [vmem:[%s3 + $0x270] sm:$0xff]
    %v446 = vld [vmem:[%s3 + $0x278] sm:$0xff]
    %v447 = vld [vmem:[%s3 + $0x280] sm:$0xff]
    %v448 = vld [vmem:[%s3 + $0x288] sm:$0xff]
    %v449 = vld [vmem:[%s3 + $0x290] sm:$0xff]
    %v450 = vld [vmem:[%s3 + $0x298] sm:$0xff]
    %v451 = vld [vmem:[%s3 + $0x2a0] sm:$0xff]
    %v452 = vld [vmem:[%s3 + $0x2a8] sm:$0xff]
    %v453 = vld [vmem:[%s3 + $0x2b0] sm:$0xff]
    %v454 = vld [vmem:[%s3 + $0x2b8] sm:$0xff]
    %v455 = vld [vmem:[%s3 + $0x2c0] sm:$0xff]
    %v456 = vld [vmem:[%s3 + $0x2c8] sm:$0xff]
    %v457 = vld [vmem:[%s3 + $0x2d0] sm:$0xff]
    %v458 = vld [vmem:[%s3 + $0x2d8] sm:$0xff]
    %v459 = vld [vmem:[%s3 + $0x2e0] sm:$0xff]
    %v460 = vld [vmem:[%s3 + $0x2e8] sm:$0xff]
    %v461 = vld [vmem:[%s3 + $0x2f0] sm:$0xff]
    %v462 = vld [vmem:[%s3 + $0x2f8] sm:$0xff]
    %v463 = vld [vmem:[%s3 + $0x300] sm:$0xff]
    %v464 = vld [vmem:[%s3 + $0x308] sm:$0xff]
    %v465 = vld [vmem:[%s3 + $0x310] sm:$0xff]
    %v466 = vld [vmem:[%s3 + $0x318] sm:$0xff]
    %v467 = vld [vmem:[%s3 + $0x320] sm:$0xff]
    %v468 = vld [vmem:[%s3 + $0x328] sm:$0xff]
    %v469 = vld [vmem:[%s3 + $0x330] sm:$0xff]
    %v470 = vld [vmem:[%s3 + $0x338] sm:$0xff]
    %v471 = vld [vmem:[%s3 + $0x340] sm:$0xff]
    %v472 = vld [vmem:[%s3 + $0x348] sm:$0xff]
    %v473 = vld [vmem:[%s3 + $0x350] sm:$0xff]
    %v474 = vld [vmem:[%s3 + $0x358] sm:$0xff]
    %v475 = vld [vmem:[%s3 + $0x360] sm:$0xff]
    %v476 = vld [vmem:[%s3 + $0x368] sm:$0xff]
    %v477 = vld [vmem:[%s3 + $0x370] sm:$0xff]
    %v478 = vld [vmem:[%s3 + $0x378] sm:$0xff]
    %v479 = vld [vmem:[%s3 + $0x380] sm:$0xff]
    %v480 = vld [vmem:[%s3 + $0x388] sm:$0xff]
    %v481 = vld [vmem:[%s3 + $0x390] sm:$0xff]
    %v482 = vld [vmem:[%s3 + $0x398] sm:$0xff]
    %v483 = vld [vmem:[%s3 + $0x3a0] sm:$0xff]
    %v484 = vld [vmem:[%s3 + $0x3a8] sm:$0xff]
    %v485 = vld [vmem:[%s3 + $0x3b0] sm:$0xff]
    %v486 = vld [vmem:[%s3 + $0x3b8] sm:$0xff]
    %v487 = vld [vmem:[%s3 + $0x3c0] sm:$0xff]
    %v488 = vld [vmem:[%s3 + $0x3c8] sm:$0xff]
    %v489 = vld [vmem:[%s3 + $0x3d0] sm:$0xff]
    %v490 = vld [vmem:[%s3 + $0x3d8] sm:$0xff]
    %v491 = vld [vmem:[%s3 + $0x3e0] sm:$0xff]
    %v492 = vld [vmem:[%s3 + $0x3e8] sm:$0xff]
    %v493 = vld [vmem:[%s3 + $0x3f0] sm:$0xff]
    %v494 = vld [vmem:[%s3 + $0x3f8] sm:$0xff]
    %v495 = vld [vmem:[%s3 + $0x400] sm:$0xff]
    %v496 = vld [vmem:[%s3 + $0x408] sm:$0xff]
    %v497 = vld [vmem:[%s3 + $0x410] sm:$0xff]
    %v498 = vld [vmem:[%s3 + $0x418] sm:$0xff]
    %v499 = vld [vmem:[%s3 + $0x420] sm:$0xff]
    %v500 = vld [vmem:[%s3 + $0x428] sm:$0xff]
    %v501 = vld [vmem:[%s3 + $0x430] sm:$0xff]
    %v502 = vld [vmem:[%s3 + $0x438] sm:$0xff]
    %v503 = vld [vmem:[%s3 + $0x440] sm:$0xff]
    %v504 = vld [vmem:[%s3 + $0x448] sm:$0xff]
    %v505 = vld [vmem:[%s3 + $0x450] sm:$0xff]
    %v506 = vld [vmem:[%s3 + $0x458] sm:$0xff]
    %v507 = vld [vmem:[%s3 + $0x460] sm:$0xff]
    %v508 = vld [vmem:[%s3 + $0x468] sm:$0xff]
    %v509 = vld [vmem:[%s3 + $0x470] sm:$0xff]
    %v510 = vld [vmem:[%s3 + $0x478] sm:$0xff]
    %v511 = vld [vmem:[%s3 + $0x480] sm:$0xff]
    %v512 = vld [vmem:[%s3 + $0x488] sm:$0xff]
    %v513 = vld [vmem:[%s3 + $0x490] sm:$0xff]
    %v514 = vld [vmem:[%s3 + $0x498] sm:$0xff]
    %v515 = vld [vmem:[%s3 + $0x4a0] sm:$0xff]
    %v516 = vld [vmem:[%s3 + $0x4a8] sm:$0xff]
    %v517 = vld [vmem:[%s3 + $0x4b0] sm:$0xff]
    %v518 = vld [vmem:[%s3 + $0x4b8] sm:$0xff]
    %v519 = vld [vmem:[%s3 + $0x4c0] sm:$0xff]
    %v520 = vld [vmem:[%s3 + $0x4c8] sm:$0xff]
    %v521 = vld [vmem:[%s3 + $0x4d0] sm:$0xff]
    %v522 = vld [vmem:[%s3 + $0x4d8] sm:$0xff]
    %v523 = vld [vmem:[%s3 + $0x4e0] sm:$0xff]
    %v524 = vld [vmem:[%s3 + $0x4e8] sm:$0xff]
    %v525 = vld [vmem:[%s3 + $0x4f0] sm:$0xff]
    %v526 = vld [vmem:[%s3 + $0x4f8] sm:$0xff]
    %v527 = vld [vmem:[%s3 + $0x500] sm:$0xff]
    %v528 = vld [vmem:[%s3 + $0x508] sm:$0xff]
    %v529 = vld [vmem:[%s3 + $0x510] sm:$0xff]
    %v530 = vld [vmem:[%s3 + $0x518] sm:$0xff]
    %v531 = vld [vmem:[%s3 + $0x520] sm:$0xff]
    %v532 = vld [vmem:[%s3 + $0x528] sm:$0xff]
    %v533 = vld [vmem:[%s3 + $0x530] sm:$0xff]
    %v534 = vld [vmem:[%s3 + $0x538] sm:$0xff]
    %v535 = vld [vmem:[%s3 + $0x540] sm:$0xff]
    %v536 = vld [vmem:[%s3 + $0x548] sm:$0xff]
    %v537 = vld [vmem:[%s3 + $0x550] sm:$0xff]
    %v538 = vld [vmem:[%s3 + $0x558] sm:$0xff]
    %v539 = vld [vmem:[%s3 + $0x560] sm:$0xff]
    %v540 = vld [vmem:[%s3 + $0x568] sm:$0xff]
    %v541 = vld [vmem:[%s3 + $0x570] sm:$0xff]
    %v542 = vld [vmem:[%s3 + $0x578] sm:$0xff]
    %v543 = vld [vmem:[%s3 + $0x580] sm:$0xff]
    %v544 = vld [vmem:[%s3 + $0x588] sm:$0xff]
    %v545 = vld [vmem:[%s3 + $0x590] sm:$0xff]
    %v546 = vld [vmem:[%s3 + $0x598] sm:$0xff]
    %v547 = vld [vmem:[%s3 + $0x5a0] sm:$0xff]
    %v548 = vld [vmem:[%s3 + $0x5a8] sm:$0xff]
    %v549 = vld [vmem:[%s3 + $0x5b0] sm:$0xff]
    %v550 = vld [vmem:[%s3 + $0x5b8] sm:$0xff]
    %v551 = vld [vmem:[%s3 + $0x5c0] sm:$0xff]
    %v552 = vld [vmem:[%s3 + $0x5c8] sm:$0xff]
    %v553 = vld [vmem:[%s3 + $0x5d0] sm:$0xff]
    %v554 = vld [vmem:[%s3 + $0x5d8] sm:$0xff]
    %v555 = vld [vmem:[%s3 + $0x5e0] sm:$0xff]
    %v556 = vld [vmem:[%s3 + $0x5e8] sm:$0xff]
    %v557 = vld [vmem:[%s3 + $0x5f0] sm:$0xff]
    %v558 = vld [vmem:[%s3 + $0x5f8] sm:$0xff]
    %v559 = vld [vmem:[%s3 + $0x600] sm:$0xff]
    %v560 = vld [vmem:[%s3 + $0x608] sm:$0xff]
    %v561 = vld [vmem:[%s3 + $0x610] sm:$0xff]
    %v562 = vld [vmem:[%s3 + $0x618] sm:$0xff]
    %v563 = vld [vmem:[%s4] sm:$0xf]
    %v565 = vlaneseq
    %v566 = vshrl.u32 %v565, 7
    %v567 = vsub.s32 0, %v566
    %v568 = vrot.slane %v563, %v567
    %v569 = vlaneseq
    %v570 = vshrl.u32 %v569, 7
    %v571 = vsub.s32 1, %v570
    %v572 = vrot.slane %v563, %v571
    %v573 = vlaneseq
    %v574 = vshrl.u32 %v573, 7
    %v575 = vsub.s32 2, %v574
    %v576 = vrot.slane %v563, %v575
    %v577 = vlaneseq
    %v578 = vshrl.u32 %v577, 7
    %v579 = vsub.s32 3, %v578
    %v580 = vrot.slane %v563, %v579
    %v781 = vunpack.c.l.b16 %v367
    %v782 = vunpack.c.h.b16 %v367
    %v783 = vunpack.c.l.b16 %v368
    %v784 = vunpack.c.h.b16 %v368
    %v785 = vunpack.c.l.b16 %v369
    %v786 = vunpack.c.h.b16 %v369
    %v787 = vunpack.c.l.b16 %v370
    %v788 = vunpack.c.h.b16 %v370
    %v789 = vunpack.c.l.b16 %v371
    %v790 = vunpack.c.h.b16 %v371
    %v791 = vunpack.c.l.b16 %v372
    %v792 = vunpack.c.h.b16 %v372
    %v793 = vunpack.c.l.b16 %v373
    %v794 = vunpack.c.h.b16 %v373
    %v795 = vunpack.c.l.b16 %v374
    %v796 = vunpack.c.h.b16 %v374
    %v797 = vunpack.c.l.b16 %v375
    %v798 = vunpack.c.h.b16 %v375
    %v799 = vunpack.c.l.b16 %v376
    %v800 = vunpack.c.h.b16 %v376
    %v801 = vunpack.c.l.b16 %v377
    %v802 = vunpack.c.h.b16 %v377
    %v803 = vunpack.c.l.b16 %v378
    %v804 = vunpack.c.h.b16 %v378
    %v805 = vunpack.c.l.b16 %v379
    %v806 = vunpack.c.h.b16 %v379
    %v807 = vunpack.c.l.b16 %v380
    %v808 = vunpack.c.h.b16 %v380
    %v809 = vunpack.c.l.b16 %v381
    %v810 = vunpack.c.h.b16 %v381
    %v811 = vunpack.c.l.b16 %v382
    %v812 = vunpack.c.h.b16 %v382
    %v813 = vunpack.c.l.b16 %v383
    %v814 = vunpack.c.h.b16 %v383
    %v815 = vunpack.c.l.b16 %v384
    %v816 = vunpack.c.h.b16 %v384
    %v817 = vunpack.c.l.b16 %v385
    %v818 = vunpack.c.h.b16 %v385
    %v819 = vunpack.c.l.b16 %v386
    %v820 = vunpack.c.h.b16 %v386
    %v821 = vunpack.c.l.b16 %v387
    %v822 = vunpack.c.h.b16 %v387
    %v823 = vunpack.c.l.b16 %v388
    %v824 = vunpack.c.h.b16 %v388
    %v825 = vunpack.c.l.b16 %v389
    %v826 = vunpack.c.h.b16 %v389
    %v827 = vunpack.c.l.b16 %v390
    %v828 = vunpack.c.h.b16 %v390
    %v829 = vunpack.c.l.b16 %v391
    %v830 = vunpack.c.h.b16 %v391
    %v831 = vunpack.c.l.b16 %v392
    %v832 = vunpack.c.h.b16 %v392
    %v833 = vunpack.c.l.b16 %v393
    %v834 = vunpack.c.h.b16 %v393
    %v835 = vunpack.c.l.b16 %v394
    %v836 = vunpack.c.h.b16 %v394
    %v837 = vunpack.c.l.b16 %v395
    %v838 = vunpack.c.h.b16 %v395
    %v839 = vunpack.c.l.b16 %v396
    %v840 = vunpack.c.h.b16 %v396
    %v841 = vunpack.c.l.b16 %v397
    %v842 = vunpack.c.h.b16 %v397
    %v843 = vunpack.c.l.b16 %v398
    %v844 = vunpack.c.h.b16 %v398
    %v845 = vunpack.c.l.b16 %v399
    %v846 = vunpack.c.h.b16 %v399
    %v847 = vunpack.c.l.b16 %v400
    %v848 = vunpack.c.h.b16 %v400
    %v849 = vunpack.c.l.b16 %v401
    %v850 = vunpack.c.h.b16 %v401
    %v851 = vunpack.c.l.b16 %v402
    %v852 = vunpack.c.h.b16 %v402
    %v853 = vunpack.c.l.b16 %v403
    %v854 = vunpack.c.h.b16 %v403
    %v855 = vunpack.c.l.b16 %v404
    %v856 = vunpack.c.h.b16 %v404
    %v857 = vunpack.c.l.b16 %v405
    %v858 = vunpack.c.h.b16 %v405
    %v859 = vunpack.c.l.b16 %v406
    %v860 = vunpack.c.h.b16 %v406
    %v861 = vunpack.c.l.b16 %v407
    %v862 = vunpack.c.h.b16 %v407
    %v863 = vunpack.c.l.b16 %v408
    %v864 = vunpack.c.h.b16 %v408
    %v865 = vunpack.c.l.b16 %v409
    %v866 = vunpack.c.h.b16 %v409
    %v867 = vunpack.c.l.b16 %v410
    %v868 = vunpack.c.h.b16 %v410
    %v869 = vunpack.c.l.b16 %v411
    %v870 = vunpack.c.h.b16 %v411
    %v871 = vunpack.c.l.b16 %v412
    %v872 = vunpack.c.h.b16 %v412
    %v873 = vunpack.c.l.b16 %v413
    %v874 = vunpack.c.h.b16 %v413
    %v875 = vunpack.c.l.b16 %v414
    %v876 = vunpack.c.h.b16 %v414
    %v877 = vunpack.c.l.b16 %v415
    %v878 = vunpack.c.h.b16 %v415
    %v879 = vunpack.c.l.b16 %v416
    %v880 = vunpack.c.h.b16 %v416
    %v881 = vunpack.c.l.b16 %v417
    %v882 = vunpack.c.h.b16 %v417
    %v883 = vunpack.c.l.b16 %v418
    %v884 = vunpack.c.h.b16 %v418
    %v885 = vunpack.c.l.b16 %v419
    %v886 = vunpack.c.h.b16 %v419
    %v887 = vunpack.c.l.b16 %v420
    %v888 = vunpack.c.h.b16 %v420
    %v889 = vunpack.c.l.b16 %v421
    %v890 = vunpack.c.h.b16 %v421
    %v891 = vunpack.c.l.b16 %v422
    %v892 = vunpack.c.h.b16 %v422
    %v893 = vunpack.c.l.b16 %v423
    %v894 = vunpack.c.h.b16 %v423
    %v895 = vunpack.c.l.b16 %v424
    %v896 = vunpack.c.h.b16 %v424
    %v897 = vunpack.c.l.b16 %v425
    %v898 = vunpack.c.h.b16 %v425
    %v899 = vunpack.c.l.b16 %v426
    %v900 = vunpack.c.h.b16 %v426
    %v901 = vunpack.c.l.b16 %v427
    %v902 = vunpack.c.h.b16 %v427
    %v903 = vunpack.c.l.b16 %v428
    %v904 = vunpack.c.h.b16 %v428
    %v905 = vunpack.c.l.b16 %v429
    %v906 = vunpack.c.h.b16 %v429
    %v907 = vunpack.c.l.b16 %v430
    %v908 = vunpack.c.h.b16 %v430
    %v909 = vunpack.c.l.b16 %v431
    %v910 = vunpack.c.h.b16 %v431
    %v911 = vunpack.c.l.b16 %v432
    %v912 = vunpack.c.h.b16 %v432
    %v913 = vunpack.c.l.b16 %v433
    %v914 = vunpack.c.h.b16 %v433
    %v915 = vunpack.c.l.b16 %v434
    %v916 = vunpack.c.h.b16 %v434
    %v917 = vunpack.c.l.b16 %v435
    %v918 = vunpack.c.h.b16 %v435
    %v919 = vunpack.c.l.b16 %v436
    %v920 = vunpack.c.h.b16 %v436
    %v921 = vunpack.c.l.b16 %v437
    %v922 = vunpack.c.h.b16 %v437
    %v923 = vunpack.c.l.b16 %v438
    %v924 = vunpack.c.h.b16 %v438
    %v925 = vunpack.c.l.b16 %v439
    %v926 = vunpack.c.h.b16 %v439
    %v927 = vunpack.c.l.b16 %v440
    %v928 = vunpack.c.h.b16 %v440
    %v929 = vunpack.c.l.b16 %v441
    %v930 = vunpack.c.h.b16 %v441
    %v931 = vunpack.c.l.b16 %v442
    %v932 = vunpack.c.h.b16 %v442
    %v933 = vunpack.c.l.b16 %v443
    %v934 = vunpack.c.h.b16 %v443
    %v935 = vunpack.c.l.b16 %v444
    %v936 = vunpack.c.h.b16 %v444
    %v937 = vunpack.c.l.b16 %v445
    %v938 = vunpack.c.h.b16 %v445
    %v939 = vunpack.c.l.b16 %v446
    %v940 = vunpack.c.h.b16 %v446
    %v941 = vunpack.c.l.b16 %v447
    %v942 = vunpack.c.h.b16 %v447
    %v943 = vunpack.c.l.b16 %v448
    %v944 = vunpack.c.h.b16 %v448
    %v945 = vunpack.c.l.b16 %v449
    %v946 = vunpack.c.h.b16 %v449
    %v947 = vunpack.c.l.b16 %v450
    %v948 = vunpack.c.h.b16 %v450
    %v949 = vunpack.c.l.b16 %v451
    %v950 = vunpack.c.h.b16 %v451
    %v951 = vunpack.c.l.b16 %v452
    %v952 = vunpack.c.h.b16 %v452
    %v953 = vunpack.c.l.b16 %v453
    %v954 = vunpack.c.h.b16 %v453
    %v955 = vunpack.c.l.b16 %v454
    %v956 = vunpack.c.h.b16 %v454
    %v957 = vunpack.c.l.b16 %v455
    %v958 = vunpack.c.h.b16 %v455
    %v959 = vunpack.c.l.b16 %v456
    %v960 = vunpack.c.h.b16 %v456
    %v961 = vunpack.c.l.b16 %v457
    %v962 = vunpack.c.h.b16 %v457
    %v963 = vunpack.c.l.b16 %v458
    %v964 = vunpack.c.h.b16 %v458
    %v965 = vunpack.c.l.b16 %v459
    %v966 = vunpack.c.h.b16 %v459
    %v967 = vunpack.c.l.b16 %v460
    %v968 = vunpack.c.h.b16 %v460
    %v969 = vunpack.c.l.b16 %v461
    %v970 = vunpack.c.h.b16 %v461
    %v971 = vunpack.c.l.b16 %v462
    %v972 = vunpack.c.h.b16 %v462
    %v973 = vunpack.c.l.b16 %v463
    %v974 = vunpack.c.h.b16 %v463
    %v975 = vunpack.c.l.b16 %v464
    %v976 = vunpack.c.h.b16 %v464
    %v977 = vunpack.c.l.b16 %v465
    %v978 = vunpack.c.h.b16 %v465
    %v979 = vunpack.c.l.b16 %v466
    %v980 = vunpack.c.h.b16 %v466
    %v981 = vunpack.c.l.b16 %v467
    %v982 = vunpack.c.h.b16 %v467
    %v983 = vunpack.c.l.b16 %v468
    %v984 = vunpack.c.h.b16 %v468
    %v985 = vunpack.c.l.b16 %v469
    %v986 = vunpack.c.h.b16 %v469
    %v987 = vunpack.c.l.b16 %v470
    %v988 = vunpack.c.h.b16 %v470
    %v989 = vunpack.c.l.b16 %v471
    %v990 = vunpack.c.h.b16 %v471
    %v991 = vunpack.c.l.b16 %v472
    %v992 = vunpack.c.h.b16 %v472
    %v993 = vunpack.c.l.b16 %v473
    %v994 = vunpack.c.h.b16 %v473
    %v995 = vunpack.c.l.b16 %v474
    %v996 = vunpack.c.h.b16 %v474
    %v997 = vunpack.c.l.b16 %v475
    %v998 = vunpack.c.h.b16 %v475
    %v999 = vunpack.c.l.b16 %v476
    %v1000 = vunpack.c.h.b16 %v476
    %v1001 = vunpack.c.l.b16 %v477
    %v1002 = vunpack.c.h.b16 %v477
    %v1003 = vunpack.c.l.b16 %v478
    %v1004 = vunpack.c.h.b16 %v478
    %v1005 = vunpack.c.l.b16 %v479
    %v1006 = vunpack.c.h.b16 %v479
    %v1007 = vunpack.c.l.b16 %v480
    %v1008 = vunpack.c.h.b16 %v480
    %v1009 = vunpack.c.l.b16 %v481
    %v1010 = vunpack.c.h.b16 %v481
    %v1011 = vunpack.c.l.b16 %v482
    %v1012 = vunpack.c.h.b16 %v482
    %v1013 = vunpack.c.l.b16 %v483
    %v1014 = vunpack.c.h.b16 %v483
    %v1015 = vunpack.c.l.b16 %v484
    %v1016 = vunpack.c.h.b16 %v484
    %v1017 = vunpack.c.l.b16 %v485
    %v1018 = vunpack.c.h.b16 %v485
    %v1019 = vunpack.c.l.b16 %v486
    %v1020 = vunpack.c.h.b16 %v486
    %v1021 = vunpack.c.l.b16 %v487
    %v1022 = vunpack.c.h.b16 %v487
    %v1023 = vunpack.c.l.b16 %v488
    %v1024 = vunpack.c.h.b16 %v488
    %v1025 = vunpack.c.l.b16 %v489
    %v1026 = vunpack.c.h.b16 %v489
    %v1027 = vunpack.c.l.b16 %v490
    %v1028 = vunpack.c.h.b16 %v490
    %v1029 = vunpack.c.l.b16 %v491
    %v1030 = vunpack.c.h.b16 %v491
    %v1031 = vunpack.c.l.b16 %v492
    %v1032 = vunpack.c.h.b16 %v492
    %v1033 = vunpack.c.l.b16 %v493
    %v1034 = vunpack.c.h.b16 %v493
    %v1035 = vunpack.c.l.b16 %v494
    %v1036 = vunpack.c.h.b16 %v494
    %v1037 = vunpack.c.l.b16 %v495
    %v1038 = vunpack.c.h.b16 %v495
    %v1039 = vunpack.c.l.b16 %v496
    %v1040 = vunpack.c.h.b16 %v496
    %v1041 = vunpack.c.l.b16 %v497
    %v1042 = vunpack.c.h.b16 %v497
    %v1043 = vunpack.c.l.b16 %v498
    %v1044 = vunpack.c.h.b16 %v498
    %v1045 = vunpack.c.l.b16 %v499
    %v1046 = vunpack.c.h.b16 %v499
    %v1047 = vunpack.c.l.b16 %v500
    %v1048 = vunpack.c.h.b16 %v500
    %v1049 = vunpack.c.l.b16 %v501
    %v1050 = vunpack.c.h.b16 %v501
    %v1051 = vunpack.c.l.b16 %v502
    %v1052 = vunpack.c.h.b16 %v502
    %v1053 = vunpack.c.l.b16 %v503
    %v1054 = vunpack.c.h.b16 %v503
    %v1055 = vunpack.c.l.b16 %v504
    %v1056 = vunpack.c.h.b16 %v504
    %v1057 = vunpack.c.l.b16 %v505
    %v1058 = vunpack.c.h.b16 %v505
    %v1059 = vunpack.c.l.b16 %v506
    %v1060 = vunpack.c.h.b16 %v506
    %v1061 = vunpack.c.l.b16 %v507
    %v1062 = vunpack.c.h.b16 %v507
    %v1063 = vunpack.c.l.b16 %v508
    %v1064 = vunpack.c.h.b16 %v508
    %v1065 = vunpack.c.l.b16 %v509
    %v1066 = vunpack.c.h.b16 %v509
    %v1067 = vunpack.c.l.b16 %v510
    %v1068 = vunpack.c.h.b16 %v510
    %v1069 = vunpack.c.l.b16 %v511
    %v1070 = vunpack.c.h.b16 %v511
    %v1071 = vunpack.c.l.b16 %v512
    %v1072 = vunpack.c.h.b16 %v512
    %v1073 = vunpack.c.l.b16 %v513
    %v1074 = vunpack.c.h.b16 %v513
    %v1075 = vunpack.c.l.b16 %v514
    %v1076 = vunpack.c.h.b16 %v514
    %v1077 = vunpack.c.l.b16 %v515
    %v1078 = vunpack.c.h.b16 %v515
    %v1079 = vunpack.c.l.b16 %v516
    %v1080 = vunpack.c.h.b16 %v516
    %v1081 = vunpack.c.l.b16 %v517
    %v1082 = vunpack.c.h.b16 %v517
    %v1083 = vunpack.c.l.b16 %v518
    %v1084 = vunpack.c.h.b16 %v518
    %v1085 = vunpack.c.l.b16 %v519
    %v1086 = vunpack.c.h.b16 %v519
    %v1087 = vunpack.c.l.b16 %v520
    %v1088 = vunpack.c.h.b16 %v520
    %v1089 = vunpack.c.l.b16 %v521
    %v1090 = vunpack.c.h.b16 %v521
    %v1091 = vunpack.c.l.b16 %v522
    %v1092 = vunpack.c.h.b16 %v522
    %v1093 = vunpack.c.l.b16 %v523
    %v1094 = vunpack.c.h.b16 %v523
    %v1095 = vunpack.c.l.b16 %v524
    %v1096 = vunpack.c.h.b16 %v524
    %v1097 = vunpack.c.l.b16 %v525
    %v1098 = vunpack.c.h.b16 %v525
    %v1099 = vunpack.c.l.b16 %v526
    %v1100 = vunpack.c.h.b16 %v526
    %v1101 = vunpack.c.l.b16 %v527
    %v1102 = vunpack.c.h.b16 %v527
    %v1103 = vunpack.c.l.b16 %v528
    %v1104 = vunpack.c.h.b16 %v528
    %v1105 = vunpack.c.l.b16 %v529
    %v1106 = vunpack.c.h.b16 %v529
    %v1107 = vunpack.c.l.b16 %v530
    %v1108 = vunpack.c.h.b16 %v530
    %v1109 = vunpack.c.l.b16 %v531
    %v1110 = vunpack.c.h.b16 %v531
    %v1111 = vunpack.c.l.b16 %v532
    %v1112 = vunpack.c.h.b16 %v532
    %v1113 = vunpack.c.l.b16 %v533
    %v1114 = vunpack.c.h.b16 %v533
    %v1115 = vunpack.c.l.b16 %v534
    %v1116 = vunpack.c.h.b16 %v534
    %v1117 = vunpack.c.l.b16 %v535
    %v1118 = vunpack.c.h.b16 %v535
    %v1119 = vunpack.c.l.b16 %v536
    %v1120 = vunpack.c.h.b16 %v536
    %v1121 = vunpack.c.l.b16 %v537
    %v1122 = vunpack.c.h.b16 %v537
    %v1123 = vunpack.c.l.b16 %v538
    %v1124 = vunpack.c.h.b16 %v538
    %v1125 = vunpack.c.l.b16 %v539
    %v1126 = vunpack.c.h.b16 %v539
    %v1127 = vunpack.c.l.b16 %v540
    %v1128 = vunpack.c.h.b16 %v540
    %v1129 = vunpack.c.l.b16 %v541
    %v1130 = vunpack.c.h.b16 %v541
    %v1131 = vunpack.c.l.b16 %v542
    %v1132 = vunpack.c.h.b16 %v542
    %v1133 = vunpack.c.l.b16 %v543
    %v1134 = vunpack.c.h.b16 %v543
    %v1135 = vunpack.c.l.b16 %v544
    %v1136 = vunpack.c.h.b16 %v544
    %v1137 = vunpack.c.l.b16 %v545
    %v1138 = vunpack.c.h.b16 %v545
    %v1139 = vunpack.c.l.b16 %v546
    %v1140 = vunpack.c.h.b16 %v546
    %v1141 = vunpack.c.l.b16 %v547
    %v1142 = vunpack.c.h.b16 %v547
    %v1143 = vunpack.c.l.b16 %v548
    %v1144 = vunpack.c.h.b16 %v548
    %v1145 = vunpack.c.l.b16 %v549
    %v1146 = vunpack.c.h.b16 %v549
    %v1147 = vunpack.c.l.b16 %v550
    %v1148 = vunpack.c.h.b16 %v550
    %v1149 = vunpack.c.l.b16 %v551
    %v1150 = vunpack.c.h.b16 %v551
    %v1151 = vunpack.c.l.b16 %v552
    %v1152 = vunpack.c.h.b16 %v552
    %v1153 = vunpack.c.l.b16 %v553
    %v1154 = vunpack.c.h.b16 %v553
    %v1155 = vunpack.c.l.b16 %v554
    %v1156 = vunpack.c.h.b16 %v554
    %v1157 = vunpack.c.l.b16 %v555
    %v1158 = vunpack.c.h.b16 %v555
    %v1159 = vunpack.c.l.b16 %v556
    %v1160 = vunpack.c.h.b16 %v556
    %v1161 = vunpack.c.l.b16 %v557
    %v1162 = vunpack.c.h.b16 %v557
    %v1163 = vunpack.c.l.b16 %v558
    %v1164 = vunpack.c.h.b16 %v558
    %v1165 = vunpack.c.l.b16 %v559
    %v1166 = vunpack.c.h.b16 %v559
    %v1167 = vunpack.c.l.b16 %v560
    %v1168 = vunpack.c.h.b16 %v560
    %v1169 = vunpack.c.l.b16 %v561
    %v1170 = vunpack.c.h.b16 %v561
    %v1171 = vunpack.c.l.b16 %v562
    %v1172 = vunpack.c.h.b16 %v562
    %v1173 = vpack.c.b16 %v785, %v781
    %v1174 = vpack.c.b16 %v786, %v782
    %v1175 = vpack.c.b16 %v787, %v783
    %v1176 = vpack.c.b16 %v788, %v784
    %v1177 = vpack.c.b16 %v793, %v789
    %v1178 = vpack.c.b16 %v794, %v790
    %v1179 = vpack.c.b16 %v795, %v791
    %v1180 = vpack.c.b16 %v796, %v792
    %v1181 = vpack.c.b16 %v801, %v797
    %v1182 = vpack.c.b16 %v802, %v798
    %v1183 = vpack.c.b16 %v803, %v799
    %v1184 = vpack.c.b16 %v804, %v800
    %v1185 = vpack.c.b16 %v809, %v805
    %v1186 = vpack.c.b16 %v810, %v806
    %v1187 = vpack.c.b16 %v811, %v807
    %v1188 = vpack.c.b16 %v812, %v808
    %v1189 = vpack.c.b16 %v817, %v813
    %v1190 = vpack.c.b16 %v818, %v814
    %v1191 = vpack.c.b16 %v819, %v815
    %v1192 = vpack.c.b16 %v820, %v816
    %v1193 = vpack.c.b16 %v825, %v821
    %v1194 = vpack.c.b16 %v826, %v822
    %v1195 = vpack.c.b16 %v827, %v823
    %v1196 = vpack.c.b16 %v828, %v824
    %v1197 = vpack.c.b16 %v833, %v829
    %v1198 = vpack.c.b16 %v834, %v830
    %v1199 = vpack.c.b16 %v835, %v831
    %v1200 = vpack.c.b16 %v836, %v832
    %v1201 = vpack.c.b16 %v841, %v837
    %v1202 = vpack.c.b16 %v842, %v838
    %v1203 = vpack.c.b16 %v843, %v839
    %v1204 = vpack.c.b16 %v844, %v840
    %v1205 = vpack.c.b16 %v849, %v845
    %v1206 = vpack.c.b16 %v850, %v846
    %v1207 = vpack.c.b16 %v851, %v847
    %v1208 = vpack.c.b16 %v852, %v848
    %v1209 = vpack.c.b16 %v857, %v853
    %v1210 = vpack.c.b16 %v858, %v854
    %v1211 = vpack.c.b16 %v859, %v855
    %v1212 = vpack.c.b16 %v860, %v856
    %v1213 = vpack.c.b16 %v865, %v861
    %v1214 = vpack.c.b16 %v866, %v862
    %v1215 = vpack.c.b16 %v867, %v863
    %v1216 = vpack.c.b16 %v868, %v864
    %v1217 = vpack.c.b16 %v873, %v869
    %v1218 = vpack.c.b16 %v874, %v870
    %v1219 = vpack.c.b16 %v875, %v871
    %v1220 = vpack.c.b16 %v876, %v872
    %v1221 = vpack.c.b16 %v881, %v877
    %v1222 = vpack.c.b16 %v882, %v878
    %v1223 = vpack.c.b16 %v883, %v879
    %v1224 = vpack.c.b16 %v884, %v880
    %v1225 = vpack.c.b16 %v889, %v885
    %v1226 = vpack.c.b16 %v890, %v886
    %v1227 = vpack.c.b16 %v891, %v887
    %v1228 = vpack.c.b16 %v892, %v888
    %v1229 = vpack.c.b16 %v897, %v893
    %v1230 = vpack.c.b16 %v898, %v894
    %v1231 = vpack.c.b16 %v899, %v895
    %v1232 = vpack.c.b16 %v900, %v896
    %v1233 = vpack.c.b16 %v905, %v901
    %v1234 = vpack.c.b16 %v906, %v902
    %v1235 = vpack.c.b16 %v907, %v903
    %v1236 = vpack.c.b16 %v908, %v904
    %v1237 = vpack.c.b16 %v913, %v909
    %v1238 = vpack.c.b16 %v914, %v910
    %v1239 = vpack.c.b16 %v915, %v911
    %v1240 = vpack.c.b16 %v916, %v912
    %v1241 = vpack.c.b16 %v921, %v917
    %v1242 = vpack.c.b16 %v922, %v918
    %v1243 = vpack.c.b16 %v923, %v919
    %v1244 = vpack.c.b16 %v924, %v920
    %v1245 = vpack.c.b16 %v929, %v925
    %v1246 = vpack.c.b16 %v930, %v926
    %v1247 = vpack.c.b16 %v931, %v927
    %v1248 = vpack.c.b16 %v932, %v928
    %v1249 = vpack.c.b16 %v937, %v933
    %v1250 = vpack.c.b16 %v938, %v934
    %v1251 = vpack.c.b16 %v939, %v935
    %v1252 = vpack.c.b16 %v940, %v936
    %v1253 = vpack.c.b16 %v945, %v941
    %v1254 = vpack.c.b16 %v946, %v942
    %v1255 = vpack.c.b16 %v947, %v943
    %v1256 = vpack.c.b16 %v948, %v944
    %v1257 = vpack.c.b16 %v953, %v949
    %v1258 = vpack.c.b16 %v954, %v950
    %v1259 = vpack.c.b16 %v955, %v951
    %v1260 = vpack.c.b16 %v956, %v952
    %v1261 = vpack.c.b16 %v961, %v957
    %v1262 = vpack.c.b16 %v962, %v958
    %v1263 = vpack.c.b16 %v963, %v959
    %v1264 = vpack.c.b16 %v964, %v960
    %v1265 = vpack.c.b16 %v969, %v965
    %v1266 = vpack.c.b16 %v970, %v966
    %v1267 = vpack.c.b16 %v971, %v967
    %v1268 = vpack.c.b16 %v972, %v968
    %v1269 = vpack.c.b16 %v977, %v973
    %v1270 = vpack.c.b16 %v978, %v974
    %v1271 = vpack.c.b16 %v979, %v975
    %v1272 = vpack.c.b16 %v980, %v976
    %v1273 = vpack.c.b16 %v985, %v981
    %v1274 = vpack.c.b16 %v986, %v982
    %v1275 = vpack.c.b16 %v987, %v983
    %v1276 = vpack.c.b16 %v988, %v984
    %v1277 = vpack.c.b16 %v993, %v989
    %v1278 = vpack.c.b16 %v994, %v990
    %v1279 = vpack.c.b16 %v995, %v991
    %v1280 = vpack.c.b16 %v996, %v992
    %v1281 = vpack.c.b16 %v1001, %v997
    %v1282 = vpack.c.b16 %v1002, %v998
    %v1283 = vpack.c.b16 %v1003, %v999
    %v1284 = vpack.c.b16 %v1004, %v1000
    %v1285 = vpack.c.b16 %v1009, %v1005
    %v1286 = vpack.c.b16 %v1010, %v1006
    %v1287 = vpack.c.b16 %v1011, %v1007
    %v1288 = vpack.c.b16 %v1012, %v1008
    %v1289 = vpack.c.b16 %v1017, %v1013
    %v1290 = vpack.c.b16 %v1018, %v1014
    %v1291 = vpack.c.b16 %v1019, %v1015
    %v1292 = vpack.c.b16 %v1020, %v1016
    %v1293 = vpack.c.b16 %v1025, %v1021
    %v1294 = vpack.c.b16 %v1026, %v1022
    %v1295 = vpack.c.b16 %v1027, %v1023
    %v1296 = vpack.c.b16 %v1028, %v1024
    %v1297 = vpack.c.b16 %v1033, %v1029
    %v1298 = vpack.c.b16 %v1034, %v1030
    %v1299 = vpack.c.b16 %v1035, %v1031
    %v1300 = vpack.c.b16 %v1036, %v1032
    %v1301 = vpack.c.b16 %v1041, %v1037
    %v1302 = vpack.c.b16 %v1042, %v1038
    %v1303 = vpack.c.b16 %v1043, %v1039
    %v1304 = vpack.c.b16 %v1044, %v1040
    %v1305 = vpack.c.b16 %v1049, %v1045
    %v1306 = vpack.c.b16 %v1050, %v1046
    %v1307 = vpack.c.b16 %v1051, %v1047
    %v1308 = vpack.c.b16 %v1052, %v1048
    %v1309 = vpack.c.b16 %v1057, %v1053
    %v1310 = vpack.c.b16 %v1058, %v1054
    %v1311 = vpack.c.b16 %v1059, %v1055
    %v1312 = vpack.c.b16 %v1060, %v1056
    %v1313 = vpack.c.b16 %v1065, %v1061
    %v1314 = vpack.c.b16 %v1066, %v1062
    %v1315 = vpack.c.b16 %v1067, %v1063
    %v1316 = vpack.c.b16 %v1068, %v1064
    %v1317 = vpack.c.b16 %v1073, %v1069
    %v1318 = vpack.c.b16 %v1074, %v1070
    %v1319 = vpack.c.b16 %v1075, %v1071
    %v1320 = vpack.c.b16 %v1076, %v1072
    %v1321 = vpack.c.b16 %v1081, %v1077
    %v1322 = vpack.c.b16 %v1082, %v1078
    %v1323 = vpack.c.b16 %v1083, %v1079
    %v1324 = vpack.c.b16 %v1084, %v1080
    %v1325 = vpack.c.b16 %v1089, %v1085
    %v1326 = vpack.c.b16 %v1090, %v1086
    %v1327 = vpack.c.b16 %v1091, %v1087
    %v1328 = vpack.c.b16 %v1092, %v1088
    %v1329 = vpack.c.b16 %v1097, %v1093
    %v1330 = vpack.c.b16 %v1098, %v1094
    %v1331 = vpack.c.b16 %v1099, %v1095
    %v1332 = vpack.c.b16 %v1100, %v1096
    %v1333 = vpack.c.b16 %v1105, %v1101
    %v1334 = vpack.c.b16 %v1106, %v1102
    %v1335 = vpack.c.b16 %v1107, %v1103
    %v1336 = vpack.c.b16 %v1108, %v1104
    %v1337 = vpack.c.b16 %v1113, %v1109
    %v1338 = vpack.c.b16 %v1114, %v1110
    %v1339 = vpack.c.b16 %v1115, %v1111
    %v1340 = vpack.c.b16 %v1116, %v1112
    %v1341 = vpack.c.b16 %v1121, %v1117
    %v1342 = vpack.c.b16 %v1122, %v1118
    %v1343 = vpack.c.b16 %v1123, %v1119
    %v1344 = vpack.c.b16 %v1124, %v1120
    %v1345 = vpack.c.b16 %v1129, %v1125
    %v1346 = vpack.c.b16 %v1130, %v1126
    %v1347 = vpack.c.b16 %v1131, %v1127
    %v1348 = vpack.c.b16 %v1132, %v1128
    %v1349 = vpack.c.b16 %v1137, %v1133
    %v1350 = vpack.c.b16 %v1138, %v1134
    %v1351 = vpack.c.b16 %v1139, %v1135
    %v1352 = vpack.c.b16 %v1140, %v1136
    %v1353 = vpack.c.b16 %v1145, %v1141
    %v1354 = vpack.c.b16 %v1146, %v1142
    %v1355 = vpack.c.b16 %v1147, %v1143
    %v1356 = vpack.c.b16 %v1148, %v1144
    %v1357 = vpack.c.b16 %v1153, %v1149
    %v1358 = vpack.c.b16 %v1154, %v1150
    %v1359 = vpack.c.b16 %v1155, %v1151
    %v1360 = vpack.c.b16 %v1156, %v1152
    %v1361 = vpack.c.b16 %v1161, %v1157
    %v1362 = vpack.c.b16 %v1162, %v1158
    %v1363 = vpack.c.b16 %v1163, %v1159
    %v1364 = vpack.c.b16 %v1164, %v1160
    %v1365 = vpack.c.b16 %v1169, %v1165
    %v1366 = vpack.c.b16 %v1170, %v1166
    %v1367 = vpack.c.b16 %v1171, %v1167
    %v1368 = vpack.c.b16 %v1172, %v1168
    %v1566 = vsel %vm84, %v366, 0
    %1568 = vmatprep.subr.bf16.mxu0 %v1174
    %1569 = vmatpush1.bf16.msra.mxu0 %v1173
    %1570 = vmatprep.subr.bf16.mxu0 %v1178
    %1571 = vmatpush1.bf16.msra.mxu0 %v1177
    %1572 = vmatprep.subr.bf16.mxu0 %v1182
    %1573 = vmatpush1.bf16.msra.mxu0 %v1181
    %1574 = vmatprep.subr.bf16.mxu0 %v1186
    %1575 = vmatpush1.bf16.msra.mxu0 %v1185
    %1576 = vmatprep.subr.bf16.mxu0 %v1190
    %1577 = vmatpush1.bf16.msra.mxu0 %v1189
    %1578 = vmatprep.subr.bf16.mxu0 %v1194
    %1579 = vmatpush1.bf16.msra.mxu0 %v1193
    %1580 = vmatprep.subr.bf16.mxu0 %v1198
    %1581 = vmatpush1.bf16.msra.mxu0 %v1197
    %1582 = vmatprep.subr.bf16.mxu0 %v1202
    %1583 = vmatpush1.bf16.msra.mxu0 %v1201
    %1584 = vmatprep.subr.bf16.mxu0 %v1206
    %1585 = vmatpush1.bf16.msra.mxu0 %v1205
    %1586 = vmatprep.subr.bf16.mxu0 %v1210
    %1587 = vmatpush1.bf16.msra.mxu0 %v1209
    %1588 = vmatprep.subr.bf16.mxu0 %v1214
    %1589 = vmatpush1.bf16.msra.mxu0 %v1213
    %1590 = vmatprep.subr.bf16.mxu0 %v1218
    %1591 = vmatpush1.bf16.msra.mxu0 %v1217
    %1592 = vmatprep.subr.bf16.mxu0 %v1222
    %1593 = vmatpush1.bf16.msra.mxu0 %v1221
    %1594 = vmatprep.subr.bf16.mxu0 %v1226
    %1595 = vmatpush1.bf16.msra.mxu0 %v1225
    %1596 = vmatprep.subr.bf16.mxu0 %v1230
    %1597 = vmatpush1.bf16.msra.mxu0 %v1229
    %1598 = vmatprep.subr.bf16.mxu0 %v1234
    %1599 = vmatpush1.bf16.msra.mxu0 %v1233
    %1600 = vmatprep.mubr.bf16.mxu0 %v361
    %1601 = vmatmul.mubr.bf16.gmra.mrb[0].mxu0 %v360
    %v1602 = vpop.f32.mrb[0].mxu0
    %v1603 = vadd.f32 %v568, %v1602
    %v1604 = vpop.f32.mrb[0].mxu0
    %v1605 = vadd.f32 %v572, %v1604
    %v1606 = vpop.f32.mrb[0].mxu0
    %v1607 = vadd.f32 %v568, %v1606
    %v1608 = vpop.f32.mrb[0].mxu0
    %v1609 = vadd.f32 %v572, %v1608
    %1610 = vdwg.mxu0
    %1611 = vmatprep.subr.bf16.mxu0 %v1238
    %1612 = vmatpush1.bf16.msra.mxu0 %v1237
    %1613 = vmatprep.subr.bf16.mxu0 %v1242
    %1614 = vmatpush1.bf16.msra.mxu0 %v1241
    %1615 = vmatprep.subr.bf16.mxu0 %v1246
    %1616 = vmatpush1.bf16.msra.mxu0 %v1245
    %1617 = vmatprep.subr.bf16.mxu0 %v1250
    %1618 = vmatpush1.bf16.msra.mxu0 %v1249
    %1619 = vmatprep.subr.bf16.mxu0 %v1254
    %1620 = vmatpush1.bf16.msra.mxu0 %v1253
    %1621 = vmatprep.subr.bf16.mxu0 %v1258
    %1622 = vmatpush1.bf16.msra.mxu0 %v1257
    %1623 = vmatprep.subr.bf16.mxu0 %v1262
    %1624 = vmatpush1.bf16.msra.mxu0 %v1261
    %1625 = vmatprep.subr.bf16.mxu0 %v1266
    %1626 = vmatpush1.bf16.msra.mxu0 %v1265
    %1627 = vmatprep.subr.bf16.mxu0 %v1270
    %1628 = vmatpush1.bf16.msra.mxu0 %v1269
    %1629 = vmatprep.subr.bf16.mxu0 %v1274
    %1630 = vmatpush1.bf16.msra.mxu0 %v1273
    %1631 = vmatprep.subr.bf16.mxu0 %v1278
    %1632 = vmatpush1.bf16.msra.mxu0 %v1277
    %1633 = vmatprep.subr.bf16.mxu0 %v1282
    %1634 = vmatpush1.bf16.msra.mxu0 %v1281
    %1635 = vmatprep.subr.bf16.mxu0 %v1286
    %1636 = vmatpush1.bf16.msra.mxu0 %v1285
    %1637 = vmatprep.subr.bf16.mxu0 %v1290
    %1638 = vmatpush1.bf16.msra.mxu0 %v1289
    %1639 = vmatprep.subr.bf16.mxu0 %v1294
    %1640 = vmatpush1.bf16.msra.mxu0 %v1293
    %1641 = vmatprep.subr.bf16.mxu0 %v1298
    %1642 = vmatpush1.bf16.msra.mxu0 %v1297
    %1643 = vmatprep.mubr.bf16.mxu0 %v363
    %1644 = vmatmul.mubr.bf16.gmra.mrb[0].mxu0 %v362
    %v1645 = vpop.f32.mrb[0].mxu0
    %v1646 = vadd.f32 %v1603, %v1645
    %v1647 = vpop.f32.mrb[0].mxu0
    %v1648 = vadd.f32 %v1605, %v1647
    %v1649 = vpop.f32.mrb[0].mxu0
    %v1650 = vadd.f32 %v1607, %v1649
    %v1651 = vpop.f32.mrb[0].mxu0
    %v1652 = vadd.f32 %v1609, %v1651
    %1653 = vdwg.mxu0
    %1654 = vmatprep.subr.bf16.mxu0 %v1302
    %1655 = vmatpush1.bf16.msra.mxu0 %v1301
    %1656 = vmatprep.subr.bf16.mxu0 %v1306
    %1657 = vmatpush1.bf16.msra.mxu0 %v1305
    %1658 = vmatprep.subr.bf16.mxu0 %v1310
    %1659 = vmatpush1.bf16.msra.mxu0 %v1309
    %1660 = vmatprep.subr.bf16.mxu0 %v1314
    %1661 = vmatpush1.bf16.msra.mxu0 %v1313
    %1662 = vmatprep.subr.bf16.mxu0 %v1318
    %1663 = vmatpush1.bf16.msra.mxu0 %v1317
    %1664 = vmatprep.subr.bf16.mxu0 %v1322
    %1665 = vmatpush1.bf16.msra.mxu0 %v1321
    %1666 = vmatprep.subr.bf16.mxu0 %v1326
    %1667 = vmatpush1.bf16.msra.mxu0 %v1325
    %1668 = vmatprep.subr.bf16.mxu0 %v1330
    %1669 = vmatpush1.bf16.msra.mxu0 %v1329
    %1670 = vmatprep.subr.bf16.mxu0 %v1334
    %1671 = vmatpush1.bf16.msra.mxu0 %v1333
    %1672 = vmatprep.subr.bf16.mxu0 %v1338
    %1673 = vmatpush1.bf16.msra.mxu0 %v1337
    %1674 = vmatprep.subr.bf16.mxu0 %v1342
    %1675 = vmatpush1.bf16.msra.mxu0 %v1341
    %1676 = vmatprep.subr.bf16.mxu0 %v1346
    %1677 = vmatpush1.bf16.msra.mxu0 %v1345
    %1678 = vmatprep.subr.bf16.mxu0 %v1350
    %1679 = vmatpush1.bf16.msra.mxu0 %v1349
    %1680 = vmatprep.subr.bf16.mxu0 %v1354
    %1681 = vmatpush1.bf16.msra.mxu0 %v1353
    %1682 = vmatprep.subr.bf16.mxu0 %v1358
    %1683 = vmatpush1.bf16.msra.mxu0 %v1357
    %1684 = vmatprep.subr.bf16.mxu0 %v1362
    %1685 = vmatpush1.bf16.msra.mxu0 %v1361
    %1686 = vmatprep.mubr.bf16.mxu0 %v365
    %1687 = vmatmul.mubr.bf16.gmra.mrb[0].mxu0 %v364
    %v1688 = vpop.f32.mrb[0].mxu0
    %v1689 = vadd.f32 %v1646, %v1688
    %v1690 = vpop.f32.mrb[0].mxu0
    %v1691 = vadd.f32 %v1648, %v1690
    %v1692 = vpop.f32.mrb[0].mxu0
    %v1693 = vadd.f32 %v1650, %v1692
    %v1694 = vpop.f32.mrb[0].mxu0
    %v1695 = vadd.f32 %v1652, %v1694
    %1696 = vdwg.mxu0
    %1697 = vmatprep.subr.bf16.mxu0 %v1366
    %1698 = vmatpush1.bf16.msra.mxu0 %v1365
    %1699 = vmatprep.subr.bf16.mxu0 0
    %1700 = vmatpush1.bf16.msra.mxu0 0
    %1701 = vmatprep.subr.bf16.mxu0 0
    %1702 = vmatpush1.bf16.msra.mxu0 0
    %1703 = vmatprep.subr.bf16.mxu0 0
    %1704 = vmatpush1.bf16.msra.mxu0 0
    %1705 = vmatprep.subr.bf16.mxu0 0
    %1706 = vmatpush1.bf16.msra.mxu0 0
    %1707 = vmatprep.subr.bf16.mxu0 0
    %1708 = vmatpush1.bf16.msra.mxu0 0
    %1709 = vmatprep.subr.bf16.mxu0 0
    %1710 = vmatpush1.bf16.msra.mxu0 0
    %1711 = vmatprep.subr.bf16.mxu0 0
    %1712 = vmatpush1.bf16.msra.mxu0 0
    %1713 = vmatprep.subr.bf16.mxu0 0
    %1714 = vmatpush1.bf16.msra.mxu0 0
    %1715 = vmatprep.subr.bf16.mxu0 0
    %1716 = vmatpush1.bf16.msra.mxu0 0
    %1717 = vmatprep.subr.bf16.mxu0 0
    %1718 = vmatpush1.bf16.msra.mxu0 0
    %1719 = vmatprep.subr.bf16.mxu0 0
    %1720 = vmatpush1.bf16.msra.mxu0 0
    %1721 = vmatprep.subr.bf16.mxu0 0
    %1722 = vmatpush1.bf16.msra.mxu0 0
    %1723 = vmatprep.subr.bf16.mxu0 0
    %1724 = vmatpush1.bf16.msra.mxu0 0
    %1725 = vmatprep.subr.bf16.mxu0 0
    %1726 = vmatpush1.bf16.msra.mxu0 0
    %1727 = vmatprep.subr.bf16.mxu0 0
    %1728 = vmatpush1.bf16.msra.mxu0 0
    %1729 = vmatprep.mubr.bf16.mxu0 0
    %1730 = vmatmul.mubr.bf16.gmra.mrb[0].mxu0 %v1566
    %v1731 = vpop.f32.mrb[0].mxu0
    %v1732 = vadd.f32 %v1689, %v1731
    %v1733 = vpop.f32.mrb[0].mxu0
    %v1734 = vadd.f32 %v1691, %v1733
    %v1735 = vpop.f32.mrb[0].mxu0
    %v1736 = vadd.f32 %v1693, %v1735
    %v1737 = vpop.f32.mrb[0].mxu0
    %v1738 = vadd.f32 %v1695, %v1737
    %1739 = vdwg.mxu0
    %1740 = vmatprep.subr.bf16.mxu0 %v1176
    %1741 = vmatpush1.bf16.msra.mxu0 %v1175
    %1742 = vmatprep.subr.bf16.mxu0 %v1180
    %1743 = vmatpush1.bf16.msra.mxu0 %v1179
    %1744 = vmatprep.subr.bf16.mxu0 %v1184
    %1745 = vmatpush1.bf16.msra.mxu0 %v1183
    %1746 = vmatprep.subr.bf16.mxu0 %v1188
    %1747 = vmatpush1.bf16.msra.mxu0 %v1187
    %1748 = vmatprep.subr.bf16.mxu0 %v1192
    %1749 = vmatpush1.bf16.msra.mxu0 %v1191
    %1750 = vmatprep.subr.bf16.mxu0 %v1196
    %1751 = vmatpush1.bf16.msra.mxu0 %v1195
    %1752 = vmatprep.subr.bf16.mxu0 %v1200
    %1753 = vmatpush1.bf16.msra.mxu0 %v1199
    %1754 = vmatprep.subr.bf16.mxu0 %v1204
    %1755 = vmatpush1.bf16.msra.mxu0 %v1203
    %1756 = vmatprep.subr.bf16.mxu0 %v1208
    %1757 = vmatpush1.bf16.msra.mxu0 %v1207
    %1758 = vmatprep.subr.bf16.mxu0 %v1212
    %1759 = vmatpush1.bf16.msra.mxu0 %v1211
    %1760 = vmatprep.subr.bf16.mxu0 %v1216
    %1761 = vmatpush1.bf16.msra.mxu0 %v1215
    %1762 = vmatprep.subr.bf16.mxu0 %v1220
    %1763 = vmatpush1.bf16.msra.mxu0 %v1219
    %1764 = vmatprep.subr.bf16.mxu0 %v1224
    %1765 = vmatpush1.bf16.msra.mxu0 %v1223
    %1766 = vmatprep.subr.bf16.mxu0 %v1228
    %1767 = vmatpush1.bf16.msra.mxu0 %v1227
    %1768 = vmatprep.subr.bf16.mxu0 %v1232
    %1769 = vmatpush1.bf16.msra.mxu0 %v1231
    %1770 = vmatprep.subr.bf16.mxu0 %v1236
    %1771 = vmatpush1.bf16.msra.mxu0 %v1235
    %1772 = vmatprep.mubr.bf16.mxu0 %v361
    %1773 = vmatmul.mubr.bf16.gmra.mrb[0].mxu0 %v360
    %v1774 = vpop.f32.mrb[0].mxu0
    %v1775 = vadd.f32 %v576, %v1774
    %v1776 = vpop.f32.mrb[0].mxu0
    %v1777 = vadd.f32 %v580, %v1776
    %v1778 = vpop.f32.mrb[0].mxu0
    %v1779 = vadd.f32 %v576, %v1778
    %v1780 = vpop.f32.mrb[0].mxu0
    %v1781 = vadd.f32 %v580, %v1780
    %1782 = vdwg.mxu0
    %1783 = vmatprep.subr.bf16.mxu0 %v1240
    %1784 = vmatpush1.bf16.msra.mxu0 %v1239
    %1785 = vmatprep.subr.bf16.mxu0 %v1244
    %1786 = vmatpush1.bf16.msra.mxu0 %v1243
    %1787 = vmatprep.subr.bf16.mxu0 %v1248
    %1788 = vmatpush1.bf16.msra.mxu0 %v1247
    %1789 = vmatprep.subr.bf16.mxu0 %v1252
    %1790 = vmatpush1.bf16.msra.mxu0 %v1251
    %1791 = vmatprep.subr.bf16.mxu0 %v1256
    %1792 = vmatpush1.bf16.msra.mxu0 %v1255
    %1793 = vmatprep.subr.bf16.mxu0 %v1260
    %1794 = vmatpush1.bf16.msra.mxu0 %v1259
    %1795 = vmatprep.subr.bf16.mxu0 %v1264
    %1796 = vmatpush1.bf16.msra.mxu0 %v1263
    %1797 = vmatprep.subr.bf16.mxu0 %v1268
    %1798 = vmatpush1.bf16.msra.mxu0 %v1267
    %1799 = vmatprep.subr.bf16.mxu0 %v1272
    %1800 = vmatpush1.bf16.msra.mxu0 %v1271
    %1801 = vmatprep.subr.bf16.mxu0 %v1276
    %1802 = vmatpush1.bf16.msra.mxu0 %v1275
    %1803 = vmatprep.subr.bf16.mxu0 %v1280
    %1804 = vmatpush1.bf16.msra.mxu0 %v1279
    %1805 = vmatprep.subr.bf16.mxu0 %v1284
    %1806 = vmatpush1.bf16.msra.mxu0 %v1283
    %1807 = vmatprep.subr.bf16.mxu0 %v1288
    %1808 = vmatpush1.bf16.msra.mxu0 %v1287
    %1809 = vmatprep.subr.bf16.mxu0 %v1292
    %1810 = vmatpush1.bf16.msra.mxu0 %v1291
    %1811 = vmatprep.subr.bf16.mxu0 %v1296
    %1812 = vmatpush1.bf16.msra.mxu0 %v1295
    %1813 = vmatprep.subr.bf16.mxu0 %v1300
    %1814 = vmatpush1.bf16.msra.mxu0 %v1299
    %1815 = vmatprep.mubr.bf16.mxu0 %v363
    %1816 = vmatmul.mubr.bf16.gmra.mrb[0].mxu0 %v362
    %v1817 = vpop.f32.mrb[0].mxu0
    %v1818 = vadd.f32 %v1775, %v1817
    %v1819 = vpop.f32.mrb[0].mxu0
    %v1820 = vadd.f32 %v1777, %v1819
    %v1821 = vpop.f32.mrb[0].mxu0
    %v1822 = vadd.f32 %v1779, %v1821
    %v1823 = vpop.f32.mrb[0].mxu0
    %v1824 = vadd.f32 %v1781, %v1823
    %1825 = vdwg.mxu0
    %1826 = vmatprep.subr.bf16.mxu0 %v1304
    %1827 = vmatpush1.bf16.msra.mxu0 %v1303
    %1828 = vmatprep.subr.bf16.mxu0 %v1308
    %1829 = vmatpush1.bf16.msra.mxu0 %v1307
    %1830 = vmatprep.subr.bf16.mxu0 %v1312
    %1831 = vmatpush1.bf16.msra.mxu0 %v1311
    %1832 = vmatprep.subr.bf16.mxu0 %v1316
    %1833 = vmatpush1.bf16.msra.mxu0 %v1315
    %1834 = vmatprep.subr.bf16.mxu0 %v1320
    %1835 = vmatpush1.bf16.msra.mxu0 %v1319
    %1836 = vmatprep.subr.bf16.mxu0 %v1324
    %1837 = vmatpush1.bf16.msra.mxu0 %v1323
    %1838 = vmatprep.subr.bf16.mxu0 %v1328
    %1839 = vmatpush1.bf16.msra.mxu0 %v1327
    %1840 = vmatprep.subr.bf16.mxu0 %v1332
    %1841 = vmatpush1.bf16.msra.mxu0 %v1331
    %1842 = vmatprep.subr.bf16.mxu0 %v1336
    %1843 = vmatpush1.bf16.msra.mxu0 %v1335
    %1844 = vmatprep.subr.bf16.mxu0 %v1340
    %1845 = vmatpush1.bf16.msra.mxu0 %v1339
    %1846 = vmatprep.subr.bf16.mxu0 %v1344
    %1847 = vmatpush1.bf16.msra.mxu0 %v1343
    %1848 = vmatprep.subr.bf16.mxu0 %v1348
    %1849 = vmatpush1.bf16.msra.mxu0 %v1347
    %1850 = vmatprep.subr.bf16.mxu0 %v1352
    %1851 = vmatpush1.bf16.msra.mxu0 %v1351
    %1852 = vmatprep.subr.bf16.mxu0 %v1356
    %1853 = vmatpush1.bf16.msra.mxu0 %v1355
    %1854 = vmatprep.subr.bf16.mxu0 %v1360
    %1855 = vmatpush1.bf16.msra.mxu0 %v1359
    %1856 = vmatprep.subr.bf16.mxu0 %v1364
    %1857 = vmatpush1.bf16.msra.mxu0 %v1363
    %1858 = vmatprep.mubr.bf16.mxu0 %v365
    %1859 = vmatmul.mubr.bf16.gmra.mrb[0].mxu0 %v364
    %v1860 = vpop.f32.mrb[0].mxu0
    %v1861 = vadd.f32 %v1818, %v1860
    %v1862 = vpop.f32.mrb[0].mxu0
    %v1863 = vadd.f32 %v1820, %v1862
    %v1864 = vpop.f32.mrb[0].mxu0
    %v1865 = vadd.f32 %v1822, %v1864
    %v1866 = vpop.f32.mrb[0].mxu0
    %v1867 = vadd.f32 %v1824, %v1866
    %1868 = vdwg.mxu0
    %1869 = vmatprep.subr.bf16.mxu0 %v1368
    %1870 = vmatpush1.bf16.msra.mxu0 %v1367
    %1871 = vmatprep.subr.bf16.mxu0 0
    %1872 = vmatpush1.bf16.msra.mxu0 0
    %1873 = vmatprep.subr.bf16.mxu0 0
    %1874 = vmatpush1.bf16.msra.mxu0 0
    %1875 = vmatprep.subr.bf16.mxu0 0
    %1876 = vmatpush1.bf16.msra.mxu0 0
    %1877 = vmatprep.subr.bf16.mxu0 0
    %1878 = vmatpush1.bf16.msra.mxu0 0
    %1879 = vmatprep.subr.bf16.mxu0 0
    %1880 = vmatpush1.bf16.msra.mxu0 0
    %1881 = vmatprep.subr.bf16.mxu0 0
    %1882 = vmatpush1.bf16.msra.mxu0 0
    %1883 = vmatprep.subr.bf16.mxu0 0
    %1884 = vmatpush1.bf16.msra.mxu0 0
    %1885 = vmatprep.subr.bf16.mxu0 0
    %1886 = vmatpush1.bf16.msra.mxu0 0
    %1887 = vmatprep.subr.bf16.mxu0 0
    %1888 = vmatpush1.bf16.msra.mxu0 0
    %1889 = vmatprep.subr.bf16.mxu0 0
    %1890 = vmatpush1.bf16.msra.mxu0 0
    %1891 = vmatprep.subr.bf16.mxu0 0
    %1892 = vmatpush1.bf16.msra.mxu0 0
    %1893 = vmatprep.subr.bf16.mxu0 0
    %1894 = vmatpush1.bf16.msra.mxu0 0
    %1895 = vmatprep.subr.bf16.mxu0 0
    %1896 = vmatpush1.bf16.msra.mxu0 0
    %1897 = vmatprep.subr.bf16.mxu0 0
    %1898 = vmatpush1.bf16.msra.mxu0 0
    %1899 = vmatprep.subr.bf16.mxu0 0
    %1900 = vmatpush1.bf16.msra.mxu0 0
    %1901 = vmatprep.mubr.bf16.mxu0 0
    %1902 = vmatmul.mubr.bf16.gmra.mrb[0].mxu0 %v1566
    %v1903 = vpop.f32.mrb[0].mxu0
    %v1904 = vadd.f32 %v1861, %v1903
    %v1905 = vpop.f32.mrb[0].mxu0
    %v1906 = vadd.f32 %v1863, %v1905
    %v1907 = vpop.f32.mrb[0].mxu0
    %v1908 = vadd.f32 %v1865, %v1907
    %v1909 = vpop.f32.mrb[0].mxu0
    %v1910 = vadd.f32 %v1867, %v1909
    %1911 = vdwg.mxu0
    %v1912 = vmul.f32 %v1732, 0.5
    %v1913 = vmul.f32 %v1734, 0.5
    %v1914 = vmul.f32 %v1904, 0.5
    %v1915 = vmul.f32 %v1906, 0.5
    %v1916 = vmul.f32 %v1736, 0.5
    %v1917 = vmul.f32 %v1738, 0.5
    %v1918 = vmul.f32 %v1908, 0.5
    %v1919 = vmul.f32 %v1910, 0.5
    %v1920 = vmul.f32 %v1732, %v1732
    %v1921 = vmul.f32 %v1734, %v1734
    %v1922 = vmul.f32 %v1904, %v1904
    %v1923 = vmul.f32 %v1906, %v1906
    %v1924 = vmul.f32 %v1736, %v1736
    %v1925 = vmul.f32 %v1738, %v1738
    %v1926 = vmul.f32 %v1908, %v1908
    %v1927 = vmul.f32 %v1910, %v1910
    %v1928 = vmul.f32 %v1920, %v1732
    %v1929 = vmul.f32 %v1921, %v1734
    %v1930 = vmul.f32 %v1922, %v1904
    %v1931 = vmul.f32 %v1923, %v1906
    %v1932 = vmul.f32 %v1924, %v1736
    %v1933 = vmul.f32 %v1925, %v1738
    %v1934 = vmul.f32 %v1926, %v1908
    %v1935 = vmul.f32 %v1927, %v1910
    %v1936 = vmul.f32 %v1928, 0.044715
    %v1937 = vmul.f32 %v1929, 0.044715
    %v1938 = vmul.f32 %v1930, 0.044715
    %v1939 = vmul.f32 %v1931, 0.044715
    %v1940 = vmul.f32 %v1932, 0.044715
    %v1941 = vmul.f32 %v1933, 0.044715
    %v1942 = vmul.f32 %v1934, 0.044715
    %v1943 = vmul.f32 %v1935, 0.044715
    %v1944 = vadd.f32 %v1732, %v1936
    %v1945 = vadd.f32 %v1734, %v1937
    %v1946 = vadd.f32 %v1904, %v1938
    %v1947 = vadd.f32 %v1906, %v1939
    %v1948 = vadd.f32 %v1736, %v1940
    %v1949 = vadd.f32 %v1738, %v1941
    %v1950 = vadd.f32 %v1908, %v1942
    %v1951 = vadd.f32 %v1910, %v1943
    %v1952 = vmul.f32 %v1944, 0.7978846
    %v1953 = vmul.f32 %v1945, 0.7978846
    %v1954 = vmul.f32 %v1946, 0.7978846
    %v1955 = vmul.f32 %v1947, 0.7978846
    %v1956 = vmul.f32 %v1948, 0.7978846
    %v1957 = vmul.f32 %v1949, 0.7978846
    %v1958 = vmul.f32 %v1950, 0.7978846
    %v1959 = vmul.f32 %v1951, 0.7978846
    %v1960 = vtanh.pop %v1952
    %v1961 = vtanh.pop %v1953
    %v1962 = vtanh.pop %v1954
    %v1963 = vtanh.pop %v1955
    %v1964 = vtanh.pop %v1956
    %v1965 = vtanh.pop %v1957
    %v1966 = vtanh.pop %v1958
    %v1967 = vtanh.pop %v1959
    %v1968 = vadd.f32 %v1960, 1.0
    %v1969 = vadd.f32 %v1961, 1.0
    %v1970 = vadd.f32 %v1962, 1.0
    %v1971 = vadd.f32 %v1963, 1.0
    %v1972 = vadd.f32 %v1964, 1.0
    %v1973 = vadd.f32 %v1965, 1.0
    %v1974 = vadd.f32 %v1966, 1.0
    %v1975 = vadd.f32 %v1967, 1.0
    %v1976 = vmul.f32 %v1912, %v1968
    %v1977 = vmul.f32 %v1913, %v1969
    %v1978 = vmul.f32 %v1914, %v1970
    %v1979 = vmul.f32 %v1915, %v1971
    %v1980 = vmul.f32 %v1916, %v1972
    %v1981 = vmul.f32 %v1917, %v1973
    %v1982 = vmul.f32 %v1918, %v1974
    %v1983 = vmul.f32 %v1919, %v1975
    %v1984 = vpack.c.bf16 %v1980, %v1976
    %v1985 = vpack.c.bf16 %v1981, %v1977
    %v1986 = vpack.c.bf16 %v1982, %v1978
    %v1987 = vpack.c.bf16 %v1983, %v1979
    %v1988 = vld [vmem:[%s5] sm:$0xff]
    %v1989 = vld [vmem:[%s5 + $0x8] sm:$0xff]
    %v1990 = vld [vmem:[%s5 + $0x10] sm:$0xff]
    %v1991 = vld [vmem:[%s5 + $0x18] sm:$0xff]
    %v1992 = vld [vmem:[%s5 + $0x20] sm:$0xff]
    %v1993 = vld [vmem:[%s5 + $0x28] sm:$0xff]
    %v1994 = vld [vmem:[%s5 + $0x30] sm:$0xff]
    %v1995 = vld [vmem:[%s5 + $0x38] sm:$0xff]
    %v1996 = vld [vmem:[%s5 + $0x40] sm:$0xff]
    %v1997 = vld [vmem:[%s5 + $0x48] sm:$0xff]
    %v1998 = vld [vmem:[%s5 + $0x50] sm:$0xff]
    %v1999 = vld [vmem:[%s5 + $0x58] sm:$0xff]
    %v2000 = vld [vmem:[%s5 + $0x60] sm:$0xff]
    %v2001 = vld [vmem:[%s5 + $0x68] sm:$0xff]
    %v2002 = vld [vmem:[%s5 + $0x70] sm:$0xff]
    %v2003 = vld [vmem:[%s5 + $0x78] sm:$0xff]
    %v2004 = vld [vmem:[%s5 + $0x80] sm:$0xff]
    %v2005 = vld [vmem:[%s5 + $0x88] sm:$0xff]
    %v2006 = vld [vmem:[%s5 + $0x90] sm:$0xff]
    %v2007 = vld [vmem:[%s5 + $0x98] sm:$0xff]
    %v2008 = vld [vmem:[%s5 + $0xa0] sm:$0xff]
    %v2009 = vld [vmem:[%s5 + $0xa8] sm:$0xff]
    %v2010 = vld [vmem:[%s5 + $0xb0] sm:$0xff]
    %v2011 = vld [vmem:[%s5 + $0xb8] sm:$0xff]
    %v2012 = vld [vmem:[%s5 + $0xc0] sm:$0xff]
    %v2013 = vld [vmem:[%s5 + $0xc8] sm:$0xff]
    %v2014 = vld [vmem:[%s5 + $0xd0] sm:$0xff]
    %v2015 = vld [vmem:[%s5 + $0xd8] sm:$0xff]
    %v2016 = vld [vmem:[%s5 + $0xe0] sm:$0xff]
    %v2017 = vld [vmem:[%s5 + $0xe8] sm:$0xff]
    %v2018 = vld [vmem:[%s5 + $0xf0] sm:$0xff]
    %v2019 = vld [vmem:[%s5 + $0xf8] sm:$0xff]
    %v2020 = vld [vmem:[%s5 + $0x100] sm:$0xff]
    %v2021 = vld [vmem:[%s5 + $0x108] sm:$0xff]
    %v2022 = vld [vmem:[%s5 + $0x110] sm:$0xff]
    %v2023 = vld [vmem:[%s5 + $0x118] sm:$0xff]
    %v2024 = vld [vmem:[%s5 + $0x120] sm:$0xff]
    %v2025 = vld [vmem:[%s5 + $0x128] sm:$0xff]
    %v2026 = vld [vmem:[%s5 + $0x130] sm:$0xff]
    %v2027 = vld [vmem:[%s5 + $0x138] sm:$0xff]
    %v2028 = vld [vmem:[%s5 + $0x140] sm:$0xff]
    %v2029 = vld [vmem:[%s5 + $0x148] sm:$0xff]
    %v2030 = vld [vmem:[%s5 + $0x150] sm:$0xff]
    %v2031 = vld [vmem:[%s5 + $0x158] sm:$0xff]
    %v2032 = vld [vmem:[%s5 + $0x160] sm:$0xff]
    %v2033 = vld [vmem:[%s5 + $0x168] sm:$0xff]
    %v2034 = vld [vmem:[%s5 + $0x170] sm:$0xff]
    %v2035 = vld [vmem:[%s5 + $0x178] sm:$0xff]
    %v2036 = vld [vmem:[%s5 + $0x180] sm:$0xff]
    %v2037 = vld [vmem:[%s5 + $0x188] sm:$0xff]
    %v2038 = vld [vmem:[%s5 + $0x190] sm:$0xff]
    %v2039 = vld [vmem:[%s5 + $0x198] sm:$0xff]
    %v2040 = vld [vmem:[%s5 + $0x1a0] sm:$0xff]
    %v2041 = vld [vmem:[%s5 + $0x1a8] sm:$0xff]
    %v2042 = vld [vmem:[%s5 + $0x1b0] sm:$0xff]
    %v2043 = vld [vmem:[%s5 + $0x1b8] sm:$0xff]
    %v2044 = vld [vmem:[%s5 + $0x1c0] sm:$0xff]
    %v2045 = vld [vmem:[%s5 + $0x1c8] sm:$0xff]
    %v2046 = vld [vmem:[%s5 + $0x1d0] sm:$0xff]
    %v2047 = vld [vmem:[%s5 + $0x1d8] sm:$0xff]
    %v2048 = vld [vmem:[%s5 + $0x1e0] sm:$0xff]
    %v2049 = vld [vmem:[%s5 + $0x1e8] sm:$0xff]
    %v2050 = vld [vmem:[%s5 + $0x1f0] sm:$0xff]
    %v2051 = vld [vmem:[%s5 + $0x1f8] sm:$0xff]
    %v2052 = vld [vmem:[%s5 + $0x200] sm:$0xff]
    %v2053 = vld [vmem:[%s5 + $0x208] sm:$0xff]
    %v2054 = vld [vmem:[%s5 + $0x210] sm:$0xff]
    %v2055 = vld [vmem:[%s5 + $0x218] sm:$0xff]
    %v2056 = vld [vmem:[%s5 + $0x220] sm:$0xff]
    %v2057 = vld [vmem:[%s5 + $0x228] sm:$0xff]
    %v2058 = vld [vmem:[%s5 + $0x230] sm:$0xff]
    %v2059 = vld [vmem:[%s5 + $0x238] sm:$0xff]
    %v2060 = vld [vmem:[%s5 + $0x240] sm:$0xff]
    %v2061 = vld [vmem:[%s5 + $0x248] sm:$0xff]
    %v2062 = vld [vmem:[%s5 + $0x250] sm:$0xff]
    %v2063 = vld [vmem:[%s5 + $0x258] sm:$0xff]
    %v2064 = vld [vmem:[%s5 + $0x260] sm:$0xff]
    %v2065 = vld [vmem:[%s5 + $0x268] sm:$0xff]
    %v2066 = vld [vmem:[%s5 + $0x270] sm:$0xff]
    %v2067 = vld [vmem:[%s5 + $0x278] sm:$0xff]
    %v2068 = vld [vmem:[%s5 + $0x280] sm:$0xff]
    %v2069 = vld [vmem:[%s5 + $0x288] sm:$0xff]
    %v2070 = vld [vmem:[%s5 + $0x290] sm:$0xff]
    %v2071 = vld [vmem:[%s5 + $0x298] sm:$0xff]
    %v2072 = vld [vmem:[%s5 + $0x2a0] sm:$0xff]
    %v2073 = vld [vmem:[%s5 + $0x2a8] sm:$0xff]
    %v2074 = vld [vmem:[%s5 + $0x2b0] sm:$0xff]
    %v2075 = vld [vmem:[%s5 + $0x2b8] sm:$0xff]
    %v2076 = vld [vmem:[%s5 + $0x2c0] sm:$0xff]
    %v2077 = vld [vmem:[%s5 + $0x2c8] sm:$0xff]
    %v2078 = vld [vmem:[%s5 + $0x2d0] sm:$0xff]
    %v2079 = vld [vmem:[%s5 + $0x2d8] sm:$0xff]
    %v2080 = vld [vmem:[%s5 + $0x2e0] sm:$0xff]
    %v2081 = vld [vmem:[%s5 + $0x2e8] sm:$0xff]
    %v2082 = vld [vmem:[%s5 + $0x2f0] sm:$0xff]
    %v2083 = vld [vmem:[%s5 + $0x2f8] sm:$0xff]
    %v2084 = vld [vmem:[%s5 + $0x300] sm:$0xff]
    %v2085 = vld [vmem:[%s5 + $0x308] sm:$0xff]
    %v2086 = vld [vmem:[%s5 + $0x310] sm:$0xff]
    %v2087 = vld [vmem:[%s5 + $0x318] sm:$0xff]
    %v2088 = vld [vmem:[%s5 + $0x320] sm:$0xff]
    %v2089 = vld [vmem:[%s5 + $0x328] sm:$0xff]
    %v2090 = vld [vmem:[%s5 + $0x330] sm:$0xff]
    %v2091 = vld [vmem:[%s5 + $0x338] sm:$0xff]
    %v2092 = vld [vmem:[%s5 + $0x340] sm:$0xff]
    %v2093 = vld [vmem:[%s5 + $0x348] sm:$0xff]
    %v2094 = vld [vmem:[%s5 + $0x350] sm:$0xff]
    %v2095 = vld [vmem:[%s5 + $0x358] sm:$0xff]
    %v2096 = vld [vmem:[%s5 + $0x360] sm:$0xff]
    %v2097 = vld [vmem:[%s5 + $0x368] sm:$0xff]
    %v2098 = vld [vmem:[%s5 + $0x370] sm:$0xff]
    %v2099 = vld [vmem:[%s5 + $0x378] sm:$0xff]
    %v2100 = vld [vmem:[%s5 + $0x380] sm:$0xff]
    %v2101 = vld [vmem:[%s5 + $0x388] sm:$0xff]
    %v2102 = vld [vmem:[%s5 + $0x390] sm:$0xff]
    %v2103 = vld [vmem:[%s5 + $0x398] sm:$0xff]
    %v2104 = vld [vmem:[%s5 + $0x3a0] sm:$0xff]
    %v2105 = vld [vmem:[%s5 + $0x3a8] sm:$0xff]
    %v2106 = vld [vmem:[%s5 + $0x3b0] sm:$0xff]
    %v2107 = vld [vmem:[%s5 + $0x3b8] sm:$0xff]
    %v2108 = vld [vmem:[%s5 + $0x3c0] sm:$0xff]
    %v2109 = vld [vmem:[%s5 + $0x3c8] sm:$0xff]
    %v2110 = vld [vmem:[%s5 + $0x3d0] sm:$0xff]
    %v2111 = vld [vmem:[%s5 + $0x3d8] sm:$0xff]
    %v2112 = vld [vmem:[%s5 + $0x3e0] sm:$0xff]
    %v2113 = vld [vmem:[%s5 + $0x3e8] sm:$0xff]
    %v2114 = vld [vmem:[%s5 + $0x3f0] sm:$0xff]
    %v2115 = vld [vmem:[%s5 + $0x3f8] sm:$0xff]
    %v2116 = vld [vmem:[%s6] sm:$0xf]
    %v2118 = vlaneseq
    %v2119 = vshrl.u32 %v2118, 7
    %v2120 = vsub.s32 0, %v2119
    %v2121 = vrot.slane %v2116, %v2120
    %v2122 = vlaneseq
    %v2123 = vshrl.u32 %v2122, 7
    %v2124 = vsub.s32 1, %v2123
    %v2125 = vrot.slane %v2116, %v2124
    %v2126 = vlaneseq
    %v2127 = vshrl.u32 %v2126, 7
    %v2128 = vsub.s32 2, %v2127
    %v2129 = vrot.slane %v2116, %v2128
    %v2130 = vlaneseq
    %v2131 = vshrl.u32 %v2130, 7
    %v2132 = vsub.s32 3, %v2131
    %v2133 = vrot.slane %v2116, %v2132
    %v2266 = vunpack.c.l.b16 %v1988
    %v2267 = vunpack.c.h.b16 %v1988
    %v2268 = vunpack.c.l.b16 %v1989
    %v2269 = vunpack.c.h.b16 %v1989
    %v2270 = vunpack.c.l.b16 %v1990
    %v2271 = vunpack.c.h.b16 %v1990
    %v2272 = vunpack.c.l.b16 %v1991
    %v2273 = vunpack.c.h.b16 %v1991
    %v2274 = vunpack.c.l.b16 %v1992
    %v2275 = vunpack.c.h.b16 %v1992
    %v2276 = vunpack.c.l.b16 %v1993
    %v2277 = vunpack.c.h.b16 %v1993
    %v2278 = vunpack.c.l.b16 %v1994
    %v2279 = vunpack.c.h.b16 %v1994
    %v2280 = vunpack.c.l.b16 %v1995
    %v2281 = vunpack.c.h.b16 %v1995
    %v2282 = vunpack.c.l.b16 %v1996
    %v2283 = vunpack.c.h.b16 %v1996
    %v2284 = vunpack.c.l.b16 %v1997
    %v2285 = vunpack.c.h.b16 %v1997
    %v2286 = vunpack.c.l.b16 %v1998
    %v2287 = vunpack.c.h.b16 %v1998
    %v2288 = vunpack.c.l.b16 %v1999
    %v2289 = vunpack.c.h.b16 %v1999
    %v2290 = vunpack.c.l.b16 %v2000
    %v2291 = vunpack.c.h.b16 %v2000
    %v2292 = vunpack.c.l.b16 %v2001
    %v2293 = vunpack.c.h.b16 %v2001
    %v2294 = vunpack.c.l.b16 %v2002
    %v2295 = vunpack.c.h.b16 %v2002
    %v2296 = vunpack.c.l.b16 %v2003
    %v2297 = vunpack.c.h.b16 %v2003
    %v2298 = vunpack.c.l.b16 %v2004
    %v2299 = vunpack.c.h.b16 %v2004
    %v2300 = vunpack.c.l.b16 %v2005
    %v2301 = vunpack.c.h.b16 %v2005
    %v2302 = vunpack.c.l.b16 %v2006
    %v2303 = vunpack.c.h.b16 %v2006
    %v2304 = vunpack.c.l.b16 %v2007
    %v2305 = vunpack.c.h.b16 %v2007
    %v2306 = vunpack.c.l.b16 %v2008
    %v2307 = vunpack.c.h.b16 %v2008
    %v2308 = vunpack.c.l.b16 %v2009
    %v2309 = vunpack.c.h.b16 %v2009
    %v2310 = vunpack.c.l.b16 %v2010
    %v2311 = vunpack.c.h.b16 %v2010
    %v2312 = vunpack.c.l.b16 %v2011
    %v2313 = vunpack.c.h.b16 %v2011
    %v2314 = vunpack.c.l.b16 %v2012
    %v2315 = vunpack.c.h.b16 %v2012
    %v2316 = vunpack.c.l.b16 %v2013
    %v2317 = vunpack.c.h.b16 %v2013
    %v2318 = vunpack.c.l.b16 %v2014
    %v2319 = vunpack.c.h.b16 %v2014
    %v2320 = vunpack.c.l.b16 %v2015
    %v2321 = vunpack.c.h.b16 %v2015
    %v2322 = vunpack.c.l.b16 %v2016
    %v2323 = vunpack.c.h.b16 %v2016
    %v2324 = vunpack.c.l.b16 %v2017
    %v2325 = vunpack.c.h.b16 %v2017
    %v2326 = vunpack.c.l.b16 %v2018
    %v2327 = vunpack.c.h.b16 %v2018
    %v2328 = vunpack.c.l.b16 %v2019
    %v2329 = vunpack.c.h.b16 %v2019
    %v2330 = vunpack.c.l.b16 %v2020
    %v2331 = vunpack.c.h.b16 %v2020
    %v2332 = vunpack.c.l.b16 %v2021
    %v2333 = vunpack.c.h.b16 %v2021
    %v2334 = vunpack.c.l.b16 %v2022
    %v2335 = vunpack.c.h.b16 %v2022
    %v2336 = vunpack.c.l.b16 %v2023
    %v2337 = vunpack.c.h.b16 %v2023
    %v2338 = vunpack.c.l.b16 %v2024
    %v2339 = vunpack.c.h.b16 %v2024
    %v2340 = vunpack.c.l.b16 %v2025
    %v2341 = vunpack.c.h.b16 %v2025
    %v2342 = vunpack.c.l.b16 %v2026
    %v2343 = vunpack.c.h.b16 %v2026
    %v2344 = vunpack.c.l.b16 %v2027
    %v2345 = vunpack.c.h.b16 %v2027
    %v2346 = vunpack.c.l.b16 %v2028
    %v2347 = vunpack.c.h.b16 %v2028
    %v2348 = vunpack.c.l.b16 %v2029
    %v2349 = vunpack.c.h.b16 %v2029
    %v2350 = vunpack.c.l.b16 %v2030
    %v2351 = vunpack.c.h.b16 %v2030
    %v2352 = vunpack.c.l.b16 %v2031
    %v2353 = vunpack.c.h.b16 %v2031
    %v2354 = vunpack.c.l.b16 %v2032
    %v2355 = vunpack.c.h.b16 %v2032
    %v2356 = vunpack.c.l.b16 %v2033
    %v2357 = vunpack.c.h.b16 %v2033
    %v2358 = vunpack.c.l.b16 %v2034
    %v2359 = vunpack.c.h.b16 %v2034
    %v2360 = vunpack.c.l.b16 %v2035
    %v2361 = vunpack.c.h.b16 %v2035
    %v2362 = vunpack.c.l.b16 %v2036
    %v2363 = vunpack.c.h.b16 %v2036
    %v2364 = vunpack.c.l.b16 %v2037
    %v2365 = vunpack.c.h.b16 %v2037
    %v2366 = vunpack.c.l.b16 %v2038
    %v2367 = vunpack.c.h.b16 %v2038
    %v2368 = vunpack.c.l.b16 %v2039
    %v2369 = vunpack.c.h.b16 %v2039
    %v2370 = vunpack.c.l.b16 %v2040
    %v2371 = vunpack.c.h.b16 %v2040
    %v2372 = vunpack.c.l.b16 %v2041
    %v2373 = vunpack.c.h.b16 %v2041
    %v2374 = vunpack.c.l.b16 %v2042
    %v2375 = vunpack.c.h.b16 %v2042
    %v2376 = vunpack.c.l.b16 %v2043
    %v2377 = vunpack.c.h.b16 %v2043
    %v2378 = vunpack.c.l.b16 %v2044
    %v2379 = vunpack.c.h.b16 %v2044
    %v2380 = vunpack.c.l.b16 %v2045
    %v2381 = vunpack.c.h.b16 %v2045
    %v2382 = vunpack.c.l.b16 %v2046
    %v2383 = vunpack.c.h.b16 %v2046
    %v2384 = vunpack.c.l.b16 %v2047
    %v2385 = vunpack.c.h.b16 %v2047
    %v2386 = vunpack.c.l.b16 %v2048
    %v2387 = vunpack.c.h.b16 %v2048
    %v2388 = vunpack.c.l.b16 %v2049
    %v2389 = vunpack.c.h.b16 %v2049
    %v2390 = vunpack.c.l.b16 %v2050
    %v2391 = vunpack.c.h.b16 %v2050
    %v2392 = vunpack.c.l.b16 %v2051
    %v2393 = vunpack.c.h.b16 %v2051
    %v2394 = vunpack.c.l.b16 %v2052
    %v2395 = vunpack.c.h.b16 %v2052
    %v2396 = vunpack.c.l.b16 %v2053
    %v2397 = vunpack.c.h.b16 %v2053
    %v2398 = vunpack.c.l.b16 %v2054
    %v2399 = vunpack.c.h.b16 %v2054
    %v2400 = vunpack.c.l.b16 %v2055
    %v2401 = vunpack.c.h.b16 %v2055
    %v2402 = vunpack.c.l.b16 %v2056
    %v2403 = vunpack.c.h.b16 %v2056
    %v2404 = vunpack.c.l.b16 %v2057
    %v2405 = vunpack.c.h.b16 %v2057
    %v2406 = vunpack.c.l.b16 %v2058
    %v2407 = vunpack.c.h.b16 %v2058
    %v2408 = vunpack.c.l.b16 %v2059
    %v2409 = vunpack.c.h.b16 %v2059
    %v2410 = vunpack.c.l.b16 %v2060
    %v2411 = vunpack.c.h.b16 %v2060
    %v2412 = vunpack.c.l.b16 %v2061
    %v2413 = vunpack.c.h.b16 %v2061
    %v2414 = vunpack.c.l.b16 %v2062
    %v2415 = vunpack.c.h.b16 %v2062
    %v2416 = vunpack.c.l.b16 %v2063
    %v2417 = vunpack.c.h.b16 %v2063
    %v2418 = vunpack.c.l.b16 %v2064
    %v2419 = vunpack.c.h.b16 %v2064
    %v2420 = vunpack.c.l.b16 %v2065
    %v2421 = vunpack.c.h.b16 %v2065
    %v2422 = vunpack.c.l.b16 %v2066
    %v2423 = vunpack.c.h.b16 %v2066
    %v2424 = vunpack.c.l.b16 %v2067
    %v2425 = vunpack.c.h.b16 %v2067
    %v2426 = vunpack.c.l.b16 %v2068
    %v2427 = vunpack.c.h.b16 %v2068
    %v2428 = vunpack.c.l.b16 %v2069
    %v2429 = vunpack.c.h.b16 %v2069
    %v2430 = vunpack.c.l.b16 %v2070
    %v2431 = vunpack.c.h.b16 %v2070
    %v2432 = vunpack.c.l.b16 %v2071
    %v2433 = vunpack.c.h.b16 %v2071
    %v2434 = vunpack.c.l.b16 %v2072
    %v2435 = vunpack.c.h.b16 %v2072
    %v2436 = vunpack.c.l.b16 %v2073
    %v2437 = vunpack.c.h.b16 %v2073
    %v2438 = vunpack.c.l.b16 %v2074
    %v2439 = vunpack.c.h.b16 %v2074
    %v2440 = vunpack.c.l.b16 %v2075
    %v2441 = vunpack.c.h.b16 %v2075
    %v2442 = vunpack.c.l.b16 %v2076
    %v2443 = vunpack.c.h.b16 %v2076
    %v2444 = vunpack.c.l.b16 %v2077
    %v2445 = vunpack.c.h.b16 %v2077
    %v2446 = vunpack.c.l.b16 %v2078
    %v2447 = vunpack.c.h.b16 %v2078
    %v2448 = vunpack.c.l.b16 %v2079
    %v2449 = vunpack.c.h.b16 %v2079
    %v2450 = vunpack.c.l.b16 %v2080
    %v2451 = vunpack.c.h.b16 %v2080
    %v2452 = vunpack.c.l.b16 %v2081
    %v2453 = vunpack.c.h.b16 %v2081
    %v2454 = vunpack.c.l.b16 %v2082
    %v2455 = vunpack.c.h.b16 %v2082
    %v2456 = vunpack.c.l.b16 %v2083
    %v2457 = vunpack.c.h.b16 %v2083
    %v2458 = vunpack.c.l.b16 %v2084
    %v2459 = vunpack.c.h.b16 %v2084
    %v2460 = vunpack.c.l.b16 %v2085
    %v2461 = vunpack.c.h.b16 %v2085
    %v2462 = vunpack.c.l.b16 %v2086
    %v2463 = vunpack.c.h.b16 %v2086
    %v2464 = vunpack.c.l.b16 %v2087
    %v2465 = vunpack.c.h.b16 %v2087
    %v2466 = vunpack.c.l.b16 %v2088
    %v2467 = vunpack.c.h.b16 %v2088
    %v2468 = vunpack.c.l.b16 %v2089
    %v2469 = vunpack.c.h.b16 %v2089
    %v2470 = vunpack.c.l.b16 %v2090
    %v2471 = vunpack.c.h.b16 %v2090
    %v2472 = vunpack.c.l.b16 %v2091
    %v2473 = vunpack.c.h.b16 %v2091
    %v2474 = vunpack.c.l.b16 %v2092
    %v2475 = vunpack.c.h.b16 %v2092
    %v2476 = vunpack.c.l.b16 %v2093
    %v2477 = vunpack.c.h.b16 %v2093
    %v2478 = vunpack.c.l.b16 %v2094
    %v2479 = vunpack.c.h.b16 %v2094
    %v2480 = vunpack.c.l.b16 %v2095
    %v2481 = vunpack.c.h.b16 %v2095
    %v2482 = vunpack.c.l.b16 %v2096
    %v2483 = vunpack.c.h.b16 %v2096
    %v2484 = vunpack.c.l.b16 %v2097
    %v2485 = vunpack.c.h.b16 %v2097
    %v2486 = vunpack.c.l.b16 %v2098
    %v2487 = vunpack.c.h.b16 %v2098
    %v2488 = vunpack.c.l.b16 %v2099
    %v2489 = vunpack.c.h.b16 %v2099
    %v2490 = vunpack.c.l.b16 %v2100
    %v2491 = vunpack.c.h.b16 %v2100
    %v2492 = vunpack.c.l.b16 %v2101
    %v2493 = vunpack.c.h.b16 %v2101
    %v2494 = vunpack.c.l.b16 %v2102
    %v2495 = vunpack.c.h.b16 %v2102
    %v2496 = vunpack.c.l.b16 %v2103
    %v2497 = vunpack.c.h.b16 %v2103
    %v2498 = vunpack.c.l.b16 %v2104
    %v2499 = vunpack.c.h.b16 %v2104
    %v2500 = vunpack.c.l.b16 %v2105
    %v2501 = vunpack.c.h.b16 %v2105
    %v2502 = vunpack.c.l.b16 %v2106
    %v2503 = vunpack.c.h.b16 %v2106
    %v2504 = vunpack.c.l.b16 %v2107
    %v2505 = vunpack.c.h.b16 %v2107
    %v2506 = vunpack.c.l.b16 %v2108
    %v2507 = vunpack.c.h.b16 %v2108
    %v2508 = vunpack.c.l.b16 %v2109
    %v2509 = vunpack.c.h.b16 %v2109
    %v2510 = vunpack.c.l.b16 %v2110
    %v2511 = vunpack.c.h.b16 %v2110
    %v2512 = vunpack.c.l.b16 %v2111
    %v2513 = vunpack.c.h.b16 %v2111
    %v2514 = vunpack.c.l.b16 %v2112
    %v2515 = vunpack.c.h.b16 %v2112
    %v2516 = vunpack.c.l.b16 %v2113
    %v2517 = vunpack.c.h.b16 %v2113
    %v2518 = vunpack.c.l.b16 %v2114
    %v2519 = vunpack.c.h.b16 %v2114
    %v2520 = vunpack.c.l.b16 %v2115
    %v2521 = vunpack.c.h.b16 %v2115
    %v2522 = vpack.c.b16 %v2270, %v2266
    %v2523 = vpack.c.b16 %v2271, %v2267
    %v2524 = vpack.c.b16 %v2272, %v2268
    %v2525 = vpack.c.b16 %v2273, %v2269
    %v2526 = vpack.c.b16 %v2278, %v2274
    %v2527 = vpack.c.b16 %v2279, %v2275
    %v2528 = vpack.c.b16 %v2280, %v2276
    %v2529 = vpack.c.b16 %v2281, %v2277
    %v2530 = vpack.c.b16 %v2286, %v2282
    %v2531 = vpack.c.b16 %v2287, %v2283
    %v2532 = vpack.c.b16 %v2288, %v2284
    %v2533 = vpack.c.b16 %v2289, %v2285
    %v2534 = vpack.c.b16 %v2294, %v2290
    %v2535 = vpack.c.b16 %v2295, %v2291
    %v2536 = vpack.c.b16 %v2296, %v2292
    %v2537 = vpack.c.b16 %v2297, %v2293
    %v2538 = vpack.c.b16 %v2302, %v2298
    %v2539 = vpack.c.b16 %v2303, %v2299
    %v2540 = vpack.c.b16 %v2304, %v2300
    %v2541 = vpack.c.b16 %v2305, %v2301
    %v2542 = vpack.c.b16 %v2310, %v2306
    %v2543 = vpack.c.b16 %v2311, %v2307
    %v2544 = vpack.c.b16 %v2312, %v2308
    %v2545 = vpack.c.b16 %v2313, %v2309
    %v2546 = vpack.c.b16 %v2318, %v2314
    %v2547 = vpack.c.b16 %v2319, %v2315
    %v2548 = vpack.c.b16 %v2320, %v2316
    %v2549 = vpack.c.b16 %v2321, %v2317
    %v2550 = vpack.c.b16 %v2326, %v2322
    %v2551 = vpack.c.b16 %v2327, %v2323
    %v2552 = vpack.c.b16 %v2328, %v2324
    %v2553 = vpack.c.b16 %v2329, %v2325
    %v2554 = vpack.c.b16 %v2334, %v2330
    %v2555 = vpack.c.b16 %v2335, %v2331
    %v2556 = vpack.c.b16 %v2336, %v2332
    %v2557 = vpack.c.b16 %v2337, %v2333
    %v2558 = vpack.c.b16 %v2342, %v2338
    %v2559 = vpack.c.b16 %v2343, %v2339
    %v2560 = vpack.c.b16 %v2344, %v2340
    %v2561 = vpack.c.b16 %v2345, %v2341
    %v2562 = vpack.c.b16 %v2350, %v2346
    %v2563 = vpack.c.b16 %v2351, %v2347
    %v2564 = vpack.c.b16 %v2352, %v2348
    %v2565 = vpack.c.b16 %v2353, %v2349
    %v2566 = vpack.c.b16 %v2358, %v2354
    %v2567 = vpack.c.b16 %v2359, %v2355
    %v2568 = vpack.c.b16 %v2360, %v2356
    %v2569 = vpack.c.b16 %v2361, %v2357
    %v2570 = vpack.c.b16 %v2366, %v2362
    %v2571 = vpack.c.b16 %v2367, %v2363
    %v2572 = vpack.c.b16 %v2368, %v2364
    %v2573 = vpack.c.b16 %v2369, %v2365
    %v2574 = vpack.c.b16 %v2374, %v2370
    %v2575 = vpack.c.b16 %v2375, %v2371
    %v2576 = vpack.c.b16 %v2376, %v2372
    %v2577 = vpack.c.b16 %v2377, %v2373
    %v2578 = vpack.c.b16 %v2382, %v2378
    %v2579 = vpack.c.b16 %v2383, %v2379
    %v2580 = vpack.c.b16 %v2384, %v2380
    %v2581 = vpack.c.b16 %v2385, %v2381
    %v2582 = vpack.c.b16 %v2390, %v2386
    %v2583 = vpack.c.b16 %v2391, %v2387
    %v2584 = vpack.c.b16 %v2392, %v2388
    %v2585 = vpack.c.b16 %v2393, %v2389
    %v2586 = vpack.c.b16 %v2398, %v2394
    %v2587 = vpack.c.b16 %v2399, %v2395
    %v2588 = vpack.c.b16 %v2400, %v2396
    %v2589 = vpack.c.b16 %v2401, %v2397
    %v2590 = vpack.c.b16 %v2406, %v2402
    %v2591 = vpack.c.b16 %v2407, %v2403
    %v2592 = vpack.c.b16 %v2408, %v2404
    %v2593 = vpack.c.b16 %v2409, %v2405
    %v2594 = vpack.c.b16 %v2414, %v2410
    %v2595 = vpack.c.b16 %v2415, %v2411
    %v2596 = vpack.c.b16 %v2416, %v2412
    %v2597 = vpack.c.b16 %v2417, %v2413
    %v2598 = vpack.c.b16 %v2422, %v2418
    %v2599 = vpack.c.b16 %v2423, %v2419
    %v2600 = vpack.c.b16 %v2424, %v2420
    %v2601 = vpack.c.b16 %v2425, %v2421
    %v2602 = vpack.c.b16 %v2430, %v2426
    %v2603 = vpack.c.b16 %v2431, %v2427
    %v2604 = vpack.c.b16 %v2432, %v2428
    %v2605 = vpack.c.b16 %v2433, %v2429
    %v2606 = vpack.c.b16 %v2438, %v2434
    %v2607 = vpack.c.b16 %v2439, %v2435
    %v2608 = vpack.c.b16 %v2440, %v2436
    %v2609 = vpack.c.b16 %v2441, %v2437
    %v2610 = vpack.c.b16 %v2446, %v2442
    %v2611 = vpack.c.b16 %v2447, %v2443
    %v2612 = vpack.c.b16 %v2448, %v2444
    %v2613 = vpack.c.b16 %v2449, %v2445
    %v2614 = vpack.c.b16 %v2454, %v2450
    %v2615 = vpack.c.b16 %v2455, %v2451
    %v2616 = vpack.c.b16 %v2456, %v2452
    %v2617 = vpack.c.b16 %v2457, %v2453
    %v2618 = vpack.c.b16 %v2462, %v2458
    %v2619 = vpack.c.b16 %v2463, %v2459
    %v2620 = vpack.c.b16 %v2464, %v2460
    %v2621 = vpack.c.b16 %v2465, %v2461
    %v2622 = vpack.c.b16 %v2470, %v2466
    %v2623 = vpack.c.b16 %v2471, %v2467
    %v2624 = vpack.c.b16 %v2472, %v2468
    %v2625 = vpack.c.b16 %v2473, %v2469
    %v2626 = vpack.c.b16 %v2478, %v2474
    %v2627 = vpack.c.b16 %v2479, %v2475
    %v2628 = vpack.c.b16 %v2480, %v2476
    %v2629 = vpack.c.b16 %v2481, %v2477
    %v2630 = vpack.c.b16 %v2486, %v2482
    %v2631 = vpack.c.b16 %v2487, %v2483
    %v2632 = vpack.c.b16 %v2488, %v2484
    %v2633 = vpack.c.b16 %v2489, %v2485
    %v2634 = vpack.c.b16 %v2494, %v2490
    %v2635 = vpack.c.b16 %v2495, %v2491
    %v2636 = vpack.c.b16 %v2496, %v2492
    %v2637 = vpack.c.b16 %v2497, %v2493
    %v2638 = vpack.c.b16 %v2502, %v2498
    %v2639 = vpack.c.b16 %v2503, %v2499
    %v2640 = vpack.c.b16 %v2504, %v2500
    %v2641 = vpack.c.b16 %v2505, %v2501
    %v2642 = vpack.c.b16 %v2510, %v2506
    %v2643 = vpack.c.b16 %v2511, %v2507
    %v2644 = vpack.c.b16 %v2512, %v2508
    %v2645 = vpack.c.b16 %v2513, %v2509
    %v2646 = vpack.c.b16 %v2518, %v2514
    %v2647 = vpack.c.b16 %v2519, %v2515
    %v2648 = vpack.c.b16 %v2520, %v2516
    %v2649 = vpack.c.b16 %v2521, %v2517
    %2778 = vmatprep.subr.bf16.mxu0 %v2523
    %2779 = vmatpush1.bf16.msra.mxu0 %v2522
    %2780 = vmatprep.subr.bf16.mxu0 %v2527
    %2781 = vmatpush1.bf16.msra.mxu0 %v2526
    %2782 = vmatprep.subr.bf16.mxu0 %v2531
    %2783 = vmatpush1.bf16.msra.mxu0 %v2530
    %2784 = vmatprep.subr.bf16.mxu0 %v2535
    %2785 = vmatpush1.bf16.msra.mxu0 %v2534
    %2786 = vmatprep.subr.bf16.mxu0 %v2539
    %2787 = vmatpush1.bf16.msra.mxu0 %v2538
    %2788 = vmatprep.subr.bf16.mxu0 %v2543
    %2789 = vmatpush1.bf16.msra.mxu0 %v2542
    %2790 = vmatprep.subr.bf16.mxu0 %v2547
    %2791 = vmatpush1.bf16.msra.mxu0 %v2546
    %2792 = vmatprep.subr.bf16.mxu0 %v2551
    %2793 = vmatpush1.bf16.msra.mxu0 %v2550
    %2794 = vmatprep.subr.bf16.mxu0 %v2555
    %2795 = vmatpush1.bf16.msra.mxu0 %v2554
    %2796 = vmatprep.subr.bf16.mxu0 %v2559
    %2797 = vmatpush1.bf16.msra.mxu0 %v2558
    %2798 = vmatprep.subr.bf16.mxu0 %v2563
    %2799 = vmatpush1.bf16.msra.mxu0 %v2562
    %2800 = vmatprep.subr.bf16.mxu0 %v2567
    %2801 = vmatpush1.bf16.msra.mxu0 %v2566
    %2802 = vmatprep.subr.bf16.mxu0 %v2571
    %2803 = vmatpush1.bf16.msra.mxu0 %v2570
    %2804 = vmatprep.subr.bf16.mxu0 %v2575
    %2805 = vmatpush1.bf16.msra.mxu0 %v2574
    %2806 = vmatprep.subr.bf16.mxu0 %v2579
    %2807 = vmatpush1.bf16.msra.mxu0 %v2578
    %2808 = vmatprep.subr.bf16.mxu0 %v2583
    %2809 = vmatpush1.bf16.msra.mxu0 %v2582
    %2810 = vmatprep.mubr.bf16.mxu0 %v1985
    %2811 = vmatmul.mubr.bf16.gmra.mrb[0].mxu0 %v1984
    %v2812 = vpop.f32.mrb[0].mxu0
    %v2813 = vadd.f32 %v2121, %v2812
    %v2814 = vpop.f32.mrb[0].mxu0
    %v2815 = vadd.f32 %v2125, %v2814
    %v2816 = vpop.f32.mrb[0].mxu0
    %v2817 = vadd.f32 %v2121, %v2816
    %v2818 = vpop.f32.mrb[0].mxu0
    %v2819 = vadd.f32 %v2125, %v2818
    %2820 = vdwg.mxu0
    %2821 = vmatprep.subr.bf16.mxu0 %v2587
    %2822 = vmatpush1.bf16.msra.mxu0 %v2586
    %2823 = vmatprep.subr.bf16.mxu0 %v2591
    %2824 = vmatpush1.bf16.msra.mxu0 %v2590
    %2825 = vmatprep.subr.bf16.mxu0 %v2595
    %2826 = vmatpush1.bf16.msra.mxu0 %v2594
    %2827 = vmatprep.subr.bf16.mxu0 %v2599
    %2828 = vmatpush1.bf16.msra.mxu0 %v2598
    %2829 = vmatprep.subr.bf16.mxu0 %v2603
    %2830 = vmatpush1.bf16.msra.mxu0 %v2602
    %2831 = vmatprep.subr.bf16.mxu0 %v2607
    %2832 = vmatpush1.bf16.msra.mxu0 %v2606
    %2833 = vmatprep.subr.bf16.mxu0 %v2611
    %2834 = vmatpush1.bf16.msra.mxu0 %v2610
    %2835 = vmatprep.subr.bf16.mxu0 %v2615
    %2836 = vmatpush1.bf16.msra.mxu0 %v2614
    %2837 = vmatprep.subr.bf16.mxu0 %v2619
    %2838 = vmatpush1.bf16.msra.mxu0 %v2618
    %2839 = vmatprep.subr.bf16.mxu0 %v2623
    %2840 = vmatpush1.bf16.msra.mxu0 %v2622
    %2841 = vmatprep.subr.bf16.mxu0 %v2627
    %2842 = vmatpush1.bf16.msra.mxu0 %v2626
    %2843 = vmatprep.subr.bf16.mxu0 %v2631
    %2844 = vmatpush1.bf16.msra.mxu0 %v2630
    %2845 = vmatprep.subr.bf16.mxu0 %v2635
    %2846 = vmatpush1.bf16.msra.mxu0 %v2634
    %2847 = vmatprep.subr.bf16.mxu0 %v2639
    %2848 = vmatpush1.bf16.msra.mxu0 %v2638
    %2849 = vmatprep.subr.bf16.mxu0 %v2643
    %2850 = vmatpush1.bf16.msra.mxu0 %v2642
    %2851 = vmatprep.subr.bf16.mxu0 %v2647
    %2852 = vmatpush1.bf16.msra.mxu0 %v2646
    %2853 = vmatprep.mubr.bf16.mxu0 %v1987
    %2854 = vmatmul.mubr.bf16.gmra.mrb[0].mxu0 %v1986
    %v2855 = vpop.f32.mrb[0].mxu0
    %v2856 = vadd.f32 %v2813, %v2855
    %v2857 = vpop.f32.mrb[0].mxu0
    %v2858 = vadd.f32 %v2815, %v2857
    %v2859 = vpop.f32.mrb[0].mxu0
    %v2860 = vadd.f32 %v2817, %v2859
    %v2861 = vpop.f32.mrb[0].mxu0
    %v2862 = vadd.f32 %v2819, %v2861
    %2863 = vdwg.mxu0
    %2864 = vmatprep.subr.bf16.mxu0 %v2525
    %2865 = vmatpush1.bf16.msra.mxu0 %v2524
    %2866 = vmatprep.subr.bf16.mxu0 %v2529
    %2867 = vmatpush1.bf16.msra.mxu0 %v2528
    %2868 = vmatprep.subr.bf16.mxu0 %v2533
    %2869 = vmatpush1.bf16.msra.mxu0 %v2532
    %2870 = vmatprep.subr.bf16.mxu0 %v2537
    %2871 = vmatpush1.bf16.msra.mxu0 %v2536
    %2872 = vmatprep.subr.bf16.mxu0 %v2541
    %2873 = vmatpush1.bf16.msra.mxu0 %v2540
    %2874 = vmatprep.subr.bf16.mxu0 %v2545
    %2875 = vmatpush1.bf16.msra.mxu0 %v2544
    %2876 = vmatprep.subr.bf16.mxu0 %v2549
    %2877 = vmatpush1.bf16.msra.mxu0 %v2548
    %2878 = vmatprep.subr.bf16.mxu0 %v2553
    %2879 = vmatpush1.bf16.msra.mxu0 %v2552
    %2880 = vmatprep.subr.bf16.mxu0 %v2557
    %2881 = vmatpush1.bf16.msra.mxu0 %v2556
    %2882 = vmatprep.subr.bf16.mxu0 %v2561
    %2883 = vmatpush1.bf16.msra.mxu0 %v2560
    %2884 = vmatprep.subr.bf16.mxu0 %v2565
    %2885 = vmatpush1.bf16.msra.mxu0 %v2564
    %2886 = vmatprep.subr.bf16.mxu0 %v2569
    %2887 = vmatpush1.bf16.msra.mxu0 %v2568
    %2888 = vmatprep.subr.bf16.mxu0 %v2573
    %2889 = vmatpush1.bf16.msra.mxu0 %v2572
    %2890 = vmatprep.subr.bf16.mxu0 %v2577
    %2891 = vmatpush1.bf16.msra.mxu0 %v2576
    %2892 = vmatprep.subr.bf16.mxu0 %v2581
    %2893 = vmatpush1.bf16.msra.mxu0 %v2580
    %2894 = vmatprep.subr.bf16.mxu0 %v2585
    %2895 = vmatpush1.bf16.msra.mxu0 %v2584
    %2896 = vmatprep.mubr.bf16.mxu0 %v1985
    %2897 = vmatmul.mubr.bf16.gmra.mrb[0].mxu0 %v1984
    %v2898 = vpop.f32.mrb[0].mxu0
    %v2899 = vadd.f32 %v2129, %v2898
    %v2900 = vpop.f32.mrb[0].mxu0
    %v2901 = vadd.f32 %v2133, %v2900
    %v2902 = vpop.f32.mrb[0].mxu0
    %v2903 = vadd.f32 %v2129, %v2902
    %v2904 = vpop.f32.mrb[0].mxu0
    %v2905 = vadd.f32 %v2133, %v2904
    %2906 = vdwg.mxu0
    %2907 = vmatprep.subr.bf16.mxu0 %v2589
    %2908 = vmatpush1.bf16.msra.mxu0 %v2588
    %2909 = vmatprep.subr.bf16.mxu0 %v2593
    %2910 = vmatpush1.bf16.msra.mxu0 %v2592
    %2911 = vmatprep.subr.bf16.mxu0 %v2597
    %2912 = vmatpush1.bf16.msra.mxu0 %v2596
    %2913 = vmatprep.subr.bf16.mxu0 %v2601
    %2914 = vmatpush1.bf16.msra.mxu0 %v2600
    %2915 = vmatprep.subr.bf16.mxu0 %v2605
    %2916 = vmatpush1.bf16.msra.mxu0 %v2604
    %2917 = vmatprep.subr.bf16.mxu0 %v2609
    %2918 = vmatpush1.bf16.msra.mxu0 %v2608
    %2919 = vmatprep.subr.bf16.mxu0 %v2613
    %2920 = vmatpush1.bf16.msra.mxu0 %v2612
    %2921 = vmatprep.subr.bf16.mxu0 %v2617
    %2922 = vmatpush1.bf16.msra.mxu0 %v2616
    %2923 = vmatprep.subr.bf16.mxu0 %v2621
    %2924 = vmatpush1.bf16.msra.mxu0 %v2620
    %2925 = vmatprep.subr.bf16.mxu0 %v2625
    %2926 = vmatpush1.bf16.msra.mxu0 %v2624
    %2927 = vmatprep.subr.bf16.mxu0 %v2629
    %2928 = vmatpush1.bf16.msra.mxu0 %v2628
    %2929 = vmatprep.subr.bf16.mxu0 %v2633
    %2930 = vmatpush1.bf16.msra.mxu0 %v2632
    %2931 = vmatprep.subr.bf16.mxu0 %v2637
    %2932 = vmatpush1.bf16.msra.mxu0 %v2636
    %2933 = vmatprep.subr.bf16.mxu0 %v2641
    %2934 = vmatpush1.bf16.msra.mxu0 %v2640
    %2935 = vmatprep.subr.bf16.mxu0 %v2645
    %2936 = vmatpush1.bf16.msra.mxu0 %v2644
    %2937 = vmatprep.subr.bf16.mxu0 %v2649
    %2938 = vmatpush1.bf16.msra.mxu0 %v2648
    %2939 = vmatprep.mubr.bf16.mxu0 %v1987
    %2940 = vmatmul.mubr.bf16.gmra.mrb[0].mxu0 %v1986
    %v2941 = vpop.f32.mrb[0].mxu0
    %v2942 = vadd.f32 %v2899, %v2941
    %v2943 = vpop.f32.mrb[0].mxu0
    %v2944 = vadd.f32 %v2901, %v2943
    %v2945 = vpop.f32.mrb[0].mxu0
    %v2946 = vadd.f32 %v2903, %v2945
    %v2947 = vpop.f32.mrb[0].mxu0
    %v2948 = vadd.f32 %v2905, %v2947
    %2949 = vdwg.mxu0
    %v2950 = vmul.f32 %v2856, 0.5
    %v2951 = vmul.f32 %v2858, 0.5
    %v2952 = vmul.f32 %v2942, 0.5
    %v2953 = vmul.f32 %v2944, 0.5
    %v2954 = vmul.f32 %v2860, 0.5
    %v2955 = vmul.f32 %v2862, 0.5
    %v2956 = vmul.f32 %v2946, 0.5
    %v2957 = vmul.f32 %v2948, 0.5
    %v2958 = vmul.f32 %v2856, %v2856
    %v2959 = vmul.f32 %v2858, %v2858
    %v2960 = vmul.f32 %v2942, %v2942
    %v2961 = vmul.f32 %v2944, %v2944
    %v2962 = vmul.f32 %v2860, %v2860
    %v2963 = vmul.f32 %v2862, %v2862
    %v2964 = vmul.f32 %v2946, %v2946
    %v2965 = vmul.f32 %v2948, %v2948
    %v2966 = vmul.f32 %v2958, %v2856
    %v2967 = vmul.f32 %v2959, %v2858
    %v2968 = vmul.f32 %v2960, %v2942
    %v2969 = vmul.f32 %v2961, %v2944
    %v2970 = vmul.f32 %v2962, %v2860
    %v2971 = vmul.f32 %v2963, %v2862
    %v2972 = vmul.f32 %v2964, %v2946
    %v2973 = vmul.f32 %v2965, %v2948
    %v2974 = vmul.f32 %v2966, 0.044715
    %v2975 = vmul.f32 %v2967, 0.044715
    %v2976 = vmul.f32 %v2968, 0.044715
    %v2977 = vmul.f32 %v2969, 0.044715
    %v2978 = vmul.f32 %v2970, 0.044715
    %v2979 = vmul.f32 %v2971, 0.044715
    %v2980 = vmul.f32 %v2972, 0.044715
    %v2981 = vmul.f32 %v2973, 0.044715
    %v2982 = vadd.f32 %v2856, %v2974
    %v2983 = vadd.f32 %v2858, %v2975
    %v2984 = vadd.f32 %v2942, %v2976
    %v2985 = vadd.f32 %v2944, %v2977
    %v2986 = vadd.f32 %v2860, %v2978
    %v2987 = vadd.f32 %v2862, %v2979
    %v2988 = vadd.f32 %v2946, %v2980
    %v2989 = vadd.f32 %v2948, %v2981
    %v2990 = vmul.f32 %v2982, 0.7978846
    %v2991 = vmul.f32 %v2983, 0.7978846
    %v2992 = vmul.f32 %v2984, 0.7978846
    %v2993 = vmul.f32 %v2985, 0.7978846
    %v2994 = vmul.f32 %v2986, 0.7978846
    %v2995 = vmul.f32 %v2987, 0.7978846
    %v2996 = vmul.f32 %v2988, 0.7978846
    %v2997 = vmul.f32 %v2989, 0.7978846
    %v2998 = vtanh.pop %v2990
    %v2999 = vtanh.pop %v2991
    %v3000 = vtanh.pop %v2992
    %v3001 = vtanh.pop %v2993
    %v3002 = vtanh.pop %v2994
    %v3003 = vtanh.pop %v2995
    %v3004 = vtanh.pop %v2996
    %v3005 = vtanh.pop %v2997
    %v3006 = vadd.f32 %v2998, 1.0
    %v3007 = vadd.f32 %v2999, 1.0
    %v3008 = vadd.f32 %v3000, 1.0
    %v3009 = vadd.f32 %v3001, 1.0
    %v3010 = vadd.f32 %v3002, 1.0
    %v3011 = vadd.f32 %v3003, 1.0
    %v3012 = vadd.f32 %v3004, 1.0
    %v3013 = vadd.f32 %v3005, 1.0
    %v3014 = vmul.f32 %v2950, %v3006
    %v3015 = vmul.f32 %v2951, %v3007
    %v3016 = vmul.f32 %v2952, %v3008
    %v3017 = vmul.f32 %v2953, %v3009
    %v3018 = vmul.f32 %v2954, %v3010
    %v3019 = vmul.f32 %v2955, %v3011
    %v3020 = vmul.f32 %v2956, %v3012
    %v3021 = vmul.f32 %v2957, %v3013
    %v3022 = vpack.c.bf16 %v3018, %v3014
    %v3023 = vpack.c.bf16 %v3019, %v3015
    %v3024 = vpack.c.bf16 %v3020, %v3016
    %v3025 = vpack.c.bf16 %v3021, %v3017
    %v3026 = vld [vmem:[%s7] sm:$0xff]
    %v3027 = vld [vmem:[%s7 + $0x8] sm:$0xff]
    %v3028 = vld [vmem:[%s7 + $0x10] sm:$0xff]
    %v3029 = vld [vmem:[%s7 + $0x18] sm:$0xf]
    %v3030 = vld [vmem:[%s7 + $0x1c] sm:$0xff]
    %v3031 = vld [vmem:[%s7 + $0x24] sm:$0xff]
    %v3032 = vld [vmem:[%s7 + $0x2c] sm:$0xff]
    %v3033 = vld [vmem:[%s7 + $0x34] sm:$0xf]
    %v3034 = vld [vmem:[%s7 + $0x38] sm:$0xff]
    %v3035 = vld [vmem:[%s7 + $0x40] sm:$0xff]
    %v3036 = vld [vmem:[%s7 + $0x48] sm:$0xff]
    %v3037 = vld [vmem:[%s7 + $0x50] sm:$0xf]
    %v3038 = vld [vmem:[%s7 + $0x54] sm:$0xff]
    %v3039 = vld [vmem:[%s7 + $0x5c] sm:$0xff]
    %v3040 = vld [vmem:[%s7 + $0x64] sm:$0xff]
    %v3041 = vld [vmem:[%s7 + $0x6c] sm:$0xf]
    %v3042 = vld [vmem:[%s7 + $0x70] sm:$0xff]
    %v3043 = vld [vmem:[%s7 + $0x78] sm:$0xff]
    %v3044 = vld [vmem:[%s7 + $0x80] sm:$0xff]
    %v3045 = vld [vmem:[%s7 + $0x88] sm:$0xf]
    %v3046 = vld [vmem:[%s7 + $0x8c] sm:$0xff]
    %v3047 = vld [vmem:[%s7 + $0x94] sm:$0xff]
    %v3048 = vld [vmem:[%s7 + $0x9c] sm:$0xff]
    %v3049 = vld [vmem:[%s7 + $0xa4] sm:$0xf]
    %v3050 = vld [vmem:[%s7 + $0xa8] sm:$0xff]
    %v3051 = vld [vmem:[%s7 + $0xb0] sm:$0xff]
    %v3052 = vld [vmem:[%s7 + $0xb8] sm:$0xff]
    %v3053 = vld [vmem:[%s7 + $0xc0] sm:$0xf]
    %v3054 = vld [vmem:[%s7 + $0xc4] sm:$0xff]
    %v3055 = vld [vmem:[%s7 + $0xcc] sm:$0xff]
    %v3056 = vld [vmem:[%s7 + $0xd4] sm:$0xff]
    %v3057 = vld [vmem:[%s7 + $0xdc] sm:$0xf]
    %v3058 = vld [vmem:[%s7 + $0xe0] sm:$0xff]
    %v3059 = vld [vmem:[%s7 + $0xe8] sm:$0xff]
    %v3060 = vld [vmem:[%s7 + $0xf0] sm:$0xff]
    %v3061 = vld [vmem:[%s7 + $0xf8] sm:$0xf]
    %v3062 = vld [vmem:[%s7 + $0xfc] sm:$0xff]
    %v3063 = vld [vmem:[%s7 + $0x104] sm:$0xff]
    %v3064 = vld [vmem:[%s7 + $0x10c] sm:$0xff]
    %v3065 = vld [vmem:[%s7 + $0x114] sm:$0xf]
    %v3066 = vld [vmem:[%s7 + $0x118] sm:$0xff]
    %v3067 = vld [vmem:[%s7 + $0x120] sm:$0xff]
    %v3068 = vld [vmem:[%s7 + $0x128] sm:$0xff]
    %v3069 = vld [vmem:[%s7 + $0x130] sm:$0xf]
    %v3070 = vld [vmem:[%s7 + $0x134] sm:$0xff]
    %v3071 = vld [vmem:[%s7 + $0x13c] sm:$0xff]
    %v3072 = vld [vmem:[%s7 + $0x144] sm:$0xff]
    %v3073 = vld [vmem:[%s7 + $0x14c] sm:$0xf]
    %v3074 = vld [vmem:[%s7 + $0x150] sm:$0xff]
    %v3075 = vld [vmem:[%s7 + $0x158] sm:$0xff]
    %v3076 = vld [vmem:[%s7 + $0x160] sm:$0xff]
    %v3077 = vld [vmem:[%s7 + $0x168] sm:$0xf]
    %v3078 = vld [vmem:[%s7 + $0x16c] sm:$0xff]
    %v3079 = vld [vmem:[%s7 + $0x174] sm:$0xff]
    %v3080 = vld [vmem:[%s7 + $0x17c] sm:$0xff]
    %v3081 = vld [vmem:[%s7 + $0x184] sm:$0xf]
    %v3082 = vld [vmem:[%s7 + $0x188] sm:$0xff]
    %v3083 = vld [vmem:[%s7 + $0x190] sm:$0xff]
    %v3084 = vld [vmem:[%s7 + $0x198] sm:$0xff]
    %v3085 = vld [vmem:[%s7 + $0x1a0] sm:$0xf]
    %v3086 = vld [vmem:[%s7 + $0x1a4] sm:$0xff]
    %v3087 = vld [vmem:[%s7 + $0x1ac] sm:$0xff]
    %v3088 = vld [vmem:[%s7 + $0x1b4] sm:$0xff]
    %v3089 = vld [vmem:[%s7 + $0x1bc] sm:$0xf]
    %v3090 = vld [vmem:[%s7 + $0x1c0] sm:$0xff]
    %v3091 = vld [vmem:[%s7 + $0x1c8] sm:$0xff]
    %v3092 = vld [vmem:[%s7 + $0x1d0] sm:$0xff]
    %v3093 = vld [vmem:[%s7 + $0x1d8] sm:$0xf]
    %v3094 = vld [vmem:[%s7 + $0x1dc] sm:$0xff]
    %v3095 = vld [vmem:[%s7 + $0x1e4] sm:$0xff]
    %v3096 = vld [vmem:[%s7 + $0x1ec] sm:$0xff]
    %v3097 = vld [vmem:[%s7 + $0x1f4] sm:$0xf]
    %v3098 = vld [vmem:[%s7 + $0x1f8] sm:$0xff]
    %v3099 = vld [vmem:[%s7 + $0x200] sm:$0xff]
    %v3100 = vld [vmem:[%s7 + $0x208] sm:$0xff]
    %v3101 = vld [vmem:[%s7 + $0x210] sm:$0xf]
    %v3102 = vld [vmem:[%s7 + $0x214] sm:$0xff]
    %v3103 = vld [vmem:[%s7 + $0x21c] sm:$0xff]
    %v3104 = vld [vmem:[%s7 + $0x224] sm:$0xff]
    %v3105 = vld [vmem:[%s7 + $0x22c] sm:$0xf]
    %v3106 = vld [vmem:[%s7 + $0x230] sm:$0xff]
    %v3107 = vld [vmem:[%s7 + $0x238] sm:$0xff]
    %v3108 = vld [vmem:[%s7 + $0x240] sm:$0xff]
    %v3109 = vld [vmem:[%s7 + $0x248] sm:$0xf]
    %v3110 = vld [vmem:[%s7 + $0x24c] sm:$0xff]
    %v3111 = vld [vmem:[%s7 + $0x254] sm:$0xff]
    %v3112 = vld [vmem:[%s7 + $0x25c] sm:$0xff]
    %v3113 = vld [vmem:[%s7 + $0x264] sm:$0xf]
    %v3114 = vld [vmem:[%s7 + $0x268] sm:$0xff]
    %v3115 = vld [vmem:[%s7 + $0x270] sm:$0xff]
    %v3116 = vld [vmem:[%s7 + $0x278] sm:$0xff]
    %v3117 = vld [vmem:[%s7 + $0x280] sm:$0xf]
    %v3118 = vld [vmem:[%s7 + $0x284] sm:$0xff]
    %v3119 = vld [vmem:[%s7 + $0x28c] sm:$0xff]
    %v3120 = vld [vmem:[%s7 + $0x294] sm:$0xff]
    %v3121 = vld [vmem:[%s7 + $0x29c] sm:$0xf]
    %v3122 = vld [vmem:[%s7 + $0x2a0] sm:$0xff]
    %v3123 = vld [vmem:[%s7 + $0x2a8] sm:$0xff]
    %v3124 = vld [vmem:[%s7 + $0x2b0] sm:$0xff]
    %v3125 = vld [vmem:[%s7 + $0x2b8] sm:$0xf]
    %v3126 = vld [vmem:[%s7 + $0x2bc] sm:$0xff]
    %v3127 = vld [vmem:[%s7 + $0x2c4] sm:$0xff]
    %v3128 = vld [vmem:[%s7 + $0x2cc] sm:$0xff]
    %v3129 = vld [vmem:[%s7 + $0x2d4] sm:$0xf]
    %v3130 = vld [vmem:[%s7 + $0x2d8] sm:$0xff]
    %v3131 = vld [vmem:[%s7 + $0x2e0] sm:$0xff]
    %v3132 = vld [vmem:[%s7 + $0x2e8] sm:$0xff]
    %v3133 = vld [vmem:[%s7 + $0x2f0] sm:$0xf]
    %v3134 = vld [vmem:[%s7 + $0x2f4] sm:$0xff]
    %v3135 = vld [vmem:[%s7 + $0x2fc] sm:$0xff]
    %v3136 = vld [vmem:[%s7 + $0x304] sm:$0xff]
    %v3137 = vld [vmem:[%s7 + $0x30c] sm:$0xf]
    %v3138 = vld [vmem:[%s7 + $0x310] sm:$0xff]
    %v3139 = vld [vmem:[%s7 + $0x318] sm:$0xff]
    %v3140 = vld [vmem:[%s7 + $0x320] sm:$0xff]
    %v3141 = vld [vmem:[%s7 + $0x328] sm:$0xf]
    %v3142 = vld [vmem:[%s7 + $0x32c] sm:$0xff]
    %v3143 = vld [vmem:[%s7 + $0x334] sm:$0xff]
    %v3144 = vld [vmem:[%s7 + $0x33c] sm:$0xff]
    %v3145 = vld [vmem:[%s7 + $0x344] sm:$0xf]
    %v3146 = vld [vmem:[%s7 + $0x348] sm:$0xff]
    %v3147 = vld [vmem:[%s7 + $0x350] sm:$0xff]
    %v3148 = vld [vmem:[%s7 + $0x358] sm:$0xff]
    %v3149 = vld [vmem:[%s7 + $0x360] sm:$0xf]
    %v3150 = vld [vmem:[%s7 + $0x364] sm:$0xff]
    %v3151 = vld [vmem:[%s7 + $0x36c] sm:$0xff]
    %v3152 = vld [vmem:[%s7 + $0x374] sm:$0xff]
    %v3153 = vld [vmem:[%s7 + $0x37c] sm:$0xf]
    %v3154 = vld [vmem:[%s7 + $0x380] sm:$0xff]
    %v3155 = vld [vmem:[%s7 + $0x388] sm:$0xff]
    %v3156 = vld [vmem:[%s7 + $0x390] sm:$0xff]
    %v3157 = vld [vmem:[%s7 + $0x398] sm:$0xf]
    %v3158 = vld [vmem:[%s7 + $0x39c] sm:$0xff]
    %v3159 = vld [vmem:[%s7 + $0x3a4] sm:$0xff]
    %v3160 = vld [vmem:[%s7 + $0x3ac] sm:$0xff]
    %v3161 = vld [vmem:[%s7 + $0x3b4] sm:$0xf]
    %v3162 = vld [vmem:[%s7 + $0x3b8] sm:$0xff]
    %v3163 = vld [vmem:[%s7 + $0x3c0] sm:$0xff]
    %v3164 = vld [vmem:[%s7 + $0x3c8] sm:$0xff]
    %v3165 = vld [vmem:[%s7 + $0x3d0] sm:$0xf]
    %v3166 = vld [vmem:[%s7 + $0x3d4] sm:$0xff]
    %v3167 = vld [vmem:[%s7 + $0x3dc] sm:$0xff]
    %v3168 = vld [vmem:[%s7 + $0x3e4] sm:$0xff]
    %v3169 = vld [vmem:[%s7 + $0x3ec] sm:$0xf]
    %v3170 = vld [vmem:[%s7 + $0x3f0] sm:$0xff]
    %v3171 = vld [vmem:[%s7 + $0x3f8] sm:$0xff]
    %v3172 = vld [vmem:[%s7 + $0x400] sm:$0xff]
    %v3173 = vld [vmem:[%s7 + $0x408] sm:$0xf]
    %v3174 = vld [vmem:[%s7 + $0x40c] sm:$0xff]
    %v3175 = vld [vmem:[%s7 + $0x414] sm:$0xff]
    %v3176 = vld [vmem:[%s7 + $0x41c] sm:$0xff]
    %v3177 = vld [vmem:[%s7 + $0x424] sm:$0xf]
    %v3178 = vld [vmem:[%s7 + $0x428] sm:$0xff]
    %v3179 = vld [vmem:[%s7 + $0x430] sm:$0xff]
    %v3180 = vld [vmem:[%s7 + $0x438] sm:$0xff]
    %v3181 = vld [vmem:[%s7 + $0x440] sm:$0xf]
    %v3182 = vld [vmem:[%s7 + $0x444] sm:$0xff]
    %v3183 = vld [vmem:[%s7 + $0x44c] sm:$0xff]
    %v3184 = vld [vmem:[%s7 + $0x454] sm:$0xff]
    %v3185 = vld [vmem:[%s7 + $0x45c] sm:$0xf]
    %v3186 = vld [vmem:[%s7 + $0x460] sm:$0xff]
    %v3187 = vld [vmem:[%s7 + $0x468] sm:$0xff]
    %v3188 = vld [vmem:[%s7 + $0x470] sm:$0xff]
    %v3189 = vld [vmem:[%s7 + $0x478] sm:$0xf]
    %v3190 = vld [vmem:[%s7 + $0x47c] sm:$0xff]
    %v3191 = vld [vmem:[%s7 + $0x484] sm:$0xff]
    %v3192 = vld [vmem:[%s7 + $0x48c] sm:$0xff]
    %v3193 = vld [vmem:[%s7 + $0x494] sm:$0xf]
    %v3194 = vld [vmem:[%s7 + $0x498] sm:$0xff]
    %v3195 = vld [vmem:[%s7 + $0x4a0] sm:$0xff]
    %v3196 = vld [vmem:[%s7 + $0x4a8] sm:$0xff]
    %v3197 = vld [vmem:[%s7 + $0x4b0] sm:$0xf]
    %v3198 = vld [vmem:[%s7 + $0x4b4] sm:$0xff]
    %v3199 = vld [vmem:[%s7 + $0x4bc] sm:$0xff]
    %v3200 = vld [vmem:[%s7 + $0x4c4] sm:$0xff]
    %v3201 = vld [vmem:[%s7 + $0x4cc] sm:$0xf]
    %v3202 = vld [vmem:[%s7 + $0x4d0] sm:$0xff]
    %v3203 = vld [vmem:[%s7 + $0x4d8] sm:$0xff]
    %v3204 = vld [vmem:[%s7 + $0x4e0] sm:$0xff]
    %v3205 = vld [vmem:[%s7 + $0x4e8] sm:$0xf]
    %v3206 = vld [vmem:[%s7 + $0x4ec] sm:$0xff]
    %v3207 = vld [vmem:[%s7 + $0x4f4] sm:$0xff]
    %v3208 = vld [vmem:[%s7 + $0x4fc] sm:$0xff]
    %v3209 = vld [vmem:[%s7 + $0x504] sm:$0xf]
    %v3210 = vld [vmem:[%s7 + $0x508] sm:$0xff]
    %v3211 = vld [vmem:[%s7 + $0x510] sm:$0xff]
    %v3212 = vld [vmem:[%s7 + $0x518] sm:$0xff]
    %v3213 = vld [vmem:[%s7 + $0x520] sm:$0xf]
    %v3214 = vld [vmem:[%s7 + $0x524] sm:$0xff]
    %v3215 = vld [vmem:[%s7 + $0x52c] sm:$0xff]
    %v3216 = vld [vmem:[%s7 + $0x534] sm:$0xff]
    %v3217 = vld [vmem:[%s7 + $0x53c] sm:$0xf]
    %v3218 = vld [vmem:[%s7 + $0x540] sm:$0xff]
    %v3219 = vld [vmem:[%s7 + $0x548] sm:$0xff]
    %v3220 = vld [vmem:[%s7 + $0x550] sm:$0xff]
    %v3221 = vld [vmem:[%s7 + $0x558] sm:$0xf]
    %v3222 = vld [vmem:[%s7 + $0x55c] sm:$0xff]
    %v3223 = vld [vmem:[%s7 + $0x564] sm:$0xff]
    %v3224 = vld [vmem:[%s7 + $0x56c] sm:$0xff]
    %v3225 = vld [vmem:[%s7 + $0x574] sm:$0xf]
    %v3226 = vld [vmem:[%s7 + $0x578] sm:$0xff]
    %v3227 = vld [vmem:[%s7 + $0x580] sm:$0xff]
    %v3228 = vld [vmem:[%s7 + $0x588] sm:$0xff]
    %v3229 = vld [vmem:[%s7 + $0x590] sm:$0xf]
    %v3230 = vld [vmem:[%s7 + $0x594] sm:$0xff]
    %v3231 = vld [vmem:[%s7 + $0x59c] sm:$0xff]
    %v3232 = vld [vmem:[%s7 + $0x5a4] sm:$0xff]
    %v3233 = vld [vmem:[%s7 + $0x5ac] sm:$0xf]
    %v3234 = vld [vmem:[%s7 + $0x5b0] sm:$0xff]
    %v3235 = vld [vmem:[%s7 + $0x5b8] sm:$0xff]
    %v3236 = vld [vmem:[%s7 + $0x5c0] sm:$0xff]
    %v3237 = vld [vmem:[%s7 + $0x5c8] sm:$0xf]
    %v3238 = vld [vmem:[%s7 + $0x5cc] sm:$0xff]
    %v3239 = vld [vmem:[%s7 + $0x5d4] sm:$0xff]
    %v3240 = vld [vmem:[%s7 + $0x5dc] sm:$0xff]
    %v3241 = vld [vmem:[%s7 + $0x5e4] sm:$0xf]
    %v3242 = vld [vmem:[%s7 + $0x5e8] sm:$0xff]
    %v3243 = vld [vmem:[%s7 + $0x5f0] sm:$0xff]
    %v3244 = vld [vmem:[%s7 + $0x5f8] sm:$0xff]
    %v3245 = vld [vmem:[%s7 + $0x600] sm:$0xf]
    %v3246 = vld [vmem:[%s7 + $0x604] sm:$0xff]
    %v3247 = vld [vmem:[%s7 + $0x60c] sm:$0xff]
    %v3248 = vld [vmem:[%s7 + $0x614] sm:$0xff]
    %v3249 = vld [vmem:[%s7 + $0x61c] sm:$0xf]
    %v3250 = vld [vmem:[%s7 + $0x620] sm:$0xff]
    %v3251 = vld [vmem:[%s7 + $0x628] sm:$0xff]
    %v3252 = vld [vmem:[%s7 + $0x630] sm:$0xff]
    %v3253 = vld [vmem:[%s7 + $0x638] sm:$0xf]
    %v3254 = vld [vmem:[%s7 + $0x63c] sm:$0xff]
    %v3255 = vld [vmem:[%s7 + $0x644] sm:$0xff]
    %v3256 = vld [vmem:[%s7 + $0x64c] sm:$0xff]
    %v3257 = vld [vmem:[%s7 + $0x654] sm:$0xf]
    %v3258 = vld [vmem:[%s7 + $0x658] sm:$0xff]
    %v3259 = vld [vmem:[%s7 + $0x660] sm:$0xff]
    %v3260 = vld [vmem:[%s7 + $0x668] sm:$0xff]
    %v3261 = vld [vmem:[%s7 + $0x670] sm:$0xf]
    %v3262 = vld [vmem:[%s7 + $0x674] sm:$0xff]
    %v3263 = vld [vmem:[%s7 + $0x67c] sm:$0xff]
    %v3264 = vld [vmem:[%s7 + $0x684] sm:$0xff]
    %v3265 = vld [vmem:[%s7 + $0x68c] sm:$0xf]
    %v3266 = vld [vmem:[%s7 + $0x690] sm:$0xff]
    %v3267 = vld [vmem:[%s7 + $0x698] sm:$0xff]
    %v3268 = vld [vmem:[%s7 + $0x6a0] sm:$0xff]
    %v3269 = vld [vmem:[%s7 + $0x6a8] sm:$0xf]
    %v3270 = vld [vmem:[%s7 + $0x6ac] sm:$0xff]
    %v3271 = vld [vmem:[%s7 + $0x6b4] sm:$0xff]
    %v3272 = vld [vmem:[%s7 + $0x6bc] sm:$0xff]
    %v3273 = vld [vmem:[%s7 + $0x6c4] sm:$0xf]
    %v3274 = vld [vmem:[%s7 + $0x6c8] sm:$0xff]
    %v3275 = vld [vmem:[%s7 + $0x6d0] sm:$0xff]
    %v3276 = vld [vmem:[%s7 + $0x6d8] sm:$0xff]
    %v3277 = vld [vmem:[%s7 + $0x6e0] sm:$0xf]
    %v3278 = vld [vmem:[%s7 + $0x6e4] sm:$0xff]
    %v3279 = vld [vmem:[%s7 + $0x6ec] sm:$0xff]
    %v3280 = vld [vmem:[%s7 + $0x6f4] sm:$0xff]
    %v3281 = vld [vmem:[%s7 + $0x6fc] sm:$0xf]
    %v3282 = vld [vmem:[%s8] sm:$0x7f]
    %v3284 = vlaneseq
    %v3285 = vshrl.u32 %v3284, 7
    %v3286 = vsub.s32 0, %v3285
    %v3287 = vrot.slane %v3282, %v3286
    %v3288 = vlaneseq
    %v3289 = vshrl.u32 %v3288, 7
    %v3290 = vsub.s32 1, %v3289
    %v3291 = vrot.slane %v3282, %v3290
    %v3292 = vlaneseq
    %v3293 = vshrl.u32 %v3292, 7
    %v3294 = vsub.s32 2, %v3293
    %v3295 = vrot.slane %v3282, %v3294
    %v3296 = vlaneseq
    %v3297 = vshrl.u32 %v3296, 7
    %v3298 = vsub.s32 3, %v3297
    %v3299 = vrot.slane %v3282, %v3298
    %v3300 = vlaneseq
    %v3301 = vshrl.u32 %v3300, 7
    %v3302 = vsub.s32 4, %v3301
    %v3303 = vrot.slane %v3282, %v3302
    %v3304 = vlaneseq
    %v3305 = vshrl.u32 %v3304, 7
    %v3306 = vsub.s32 5, %v3305
    %v3307 = vrot.slane %v3282, %v3306
    %v3308 = vlaneseq
    %v3309 = vshrl.u32 %v3308, 7
    %v3310 = vsub.s32 6, %v3309
    %v3311 = vrot.slane %v3282, %v3310
    %v3575 = vunpack.c.l.b16 %v3026
    %v3576 = vunpack.c.h.b16 %v3026
    %v3577 = vunpack.c.l.b16 %v3027
    %v3578 = vunpack.c.h.b16 %v3027
    %v3579 = vunpack.c.l.b16 %v3028
    %v3580 = vunpack.c.h.b16 %v3028
    %v3581 = vunpack.c.l.b16 %v3029
    %v3582 = vunpack.c.l.b16 %v3030
    %v3583 = vunpack.c.h.b16 %v3030
    %v3584 = vunpack.c.l.b16 %v3031
    %v3585 = vunpack.c.h.b16 %v3031
    %v3586 = vunpack.c.l.b16 %v3032
    %v3587 = vunpack.c.h.b16 %v3032
    %v3588 = vunpack.c.l.b16 %v3033
    %v3589 = vunpack.c.l.b16 %v3034
    %v3590 = vunpack.c.h.b16 %v3034
    %v3591 = vunpack.c.l.b16 %v3035
    %v3592 = vunpack.c.h.b16 %v3035
    %v3593 = vunpack.c.l.b16 %v3036
    %v3594 = vunpack.c.h.b16 %v3036
    %v3595 = vunpack.c.l.b16 %v3037
    %v3596 = vunpack.c.l.b16 %v3038
    %v3597 = vunpack.c.h.b16 %v3038
    %v3598 = vunpack.c.l.b16 %v3039
    %v3599 = vunpack.c.h.b16 %v3039
    %v3600 = vunpack.c.l.b16 %v3040
    %v3601 = vunpack.c.h.b16 %v3040
    %v3602 = vunpack.c.l.b16 %v3041
    %v3603 = vunpack.c.l.b16 %v3042
    %v3604 = vunpack.c.h.b16 %v3042
    %v3605 = vunpack.c.l.b16 %v3043
    %v3606 = vunpack.c.h.b16 %v3043
    %v3607 = vunpack.c.l.b16 %v3044
    %v3608 = vunpack.c.h.b16 %v3044
    %v3609 = vunpack.c.l.b16 %v3045
    %v3610 = vunpack.c.l.b16 %v3046
    %v3611 = vunpack.c.h.b16 %v3046
    %v3612 = vunpack.c.l.b16 %v3047
    %v3613 = vunpack.c.h.b16 %v3047
    %v3614 = vunpack.c.l.b16 %v3048
    %v3615 = vunpack.c.h.b16 %v3048
    %v3616 = vunpack.c.l.b16 %v3049
    %v3617 = vunpack.c.l.b16 %v3050
    %v3618 = vunpack.c.h.b16 %v3050
    %v3619 = vunpack.c.l.b16 %v3051
    %v3620 = vunpack.c.h.b16 %v3051
    %v3621 = vunpack.c.l.b16 %v3052
    %v3622 = vunpack.c.h.b16 %v3052
    %v3623 = vunpack.c.l.b16 %v3053
    %v3624 = vunpack.c.l.b16 %v3054
    %v3625 = vunpack.c.h.b16 %v3054
    %v3626 = vunpack.c.l.b16 %v3055
    %v3627 = vunpack.c.h.b16 %v3055
    %v3628 = vunpack.c.l.b16 %v3056
    %v3629 = vunpack.c.h.b16 %v3056
    %v3630 = vunpack.c.l.b16 %v3057
    %v3631 = vunpack.c.l.b16 %v3058
    %v3632 = vunpack.c.h.b16 %v3058
    %v3633 = vunpack.c.l.b16 %v3059
    %v3634 = vunpack.c.h.b16 %v3059
    %v3635 = vunpack.c.l.b16 %v3060
    %v3636 = vunpack.c.h.b16 %v3060
    %v3637 = vunpack.c.l.b16 %v3061
    %v3638 = vunpack.c.l.b16 %v3062
    %v3639 = vunpack.c.h.b16 %v3062
    %v3640 = vunpack.c.l.b16 %v3063
    %v3641 = vunpack.c.h.b16 %v3063
    %v3642 = vunpack.c.l.b16 %v3064
    %v3643 = vunpack.c.h.b16 %v3064
    %v3644 = vunpack.c.l.b16 %v3065
    %v3645 = vunpack.c.l.b16 %v3066
    %v3646 = vunpack.c.h.b16 %v3066
    %v3647 = vunpack.c.l.b16 %v3067
    %v3648 = vunpack.c.h.b16 %v3067
    %v3649 = vunpack.c.l.b16 %v3068
    %v3650 = vunpack.c.h.b16 %v3068
    %v3651 = vunpack.c.l.b16 %v3069
    %v3652 = vunpack.c.l.b16 %v3070
    %v3653 = vunpack.c.h.b16 %v3070
    %v3654 = vunpack.c.l.b16 %v3071
    %v3655 = vunpack.c.h.b16 %v3071
    %v3656 = vunpack.c.l.b16 %v3072
    %v3657 = vunpack.c.h.b16 %v3072
    %v3658 = vunpack.c.l.b16 %v3073
    %v3659 = vunpack.c.l.b16 %v3074
    %v3660 = vunpack.c.h.b16 %v3074
    %v3661 = vunpack.c.l.b16 %v3075
    %v3662 = vunpack.c.h.b16 %v3075
    %v3663 = vunpack.c.l.b16 %v3076
    %v3664 = vunpack.c.h.b16 %v3076
    %v3665 = vunpack.c.l.b16 %v3077
    %v3666 = vunpack.c.l.b16 %v3078
    %v3667 = vunpack.c.h.b16 %v3078
    %v3668 = vunpack.c.l.b16 %v3079
    %v3669 = vunpack.c.h.b16 %v3079
    %v3670 = vunpack.c.l.b16 %v3080
    %v3671 = vunpack.c.h.b16 %v3080
    %v3672 = vunpack.c.l.b16 %v3081
    %v3673 = vunpack.c.l.b16 %v3082
    %v3674 = vunpack.c.h.b16 %v3082
    %v3675 = vunpack.c.l.b16 %v3083
    %v3676 = vunpack.c.h.b16 %v3083
    %v3677 = vunpack.c.l.b16 %v3084
    %v3678 = vunpack.c.h.b16 %v3084
    %v3679 = vunpack.c.l.b16 %v3085
    %v3680 = vunpack.c.l.b16 %v3086
    %v3681 = vunpack.c.h.b16 %v3086
    %v3682 = vunpack.c.l.b16 %v3087
    %v3683 = vunpack.c.h.b16 %v3087
    %v3684 = vunpack.c.l.b16 %v3088
    %v3685 = vunpack.c.h.b16 %v3088
    %v3686 = vunpack.c.l.b16 %v3089
    %v3687 = vunpack.c.l.b16 %v3090
    %v3688 = vunpack.c.h.b16 %v3090
    %v3689 = vunpack.c.l.b16 %v3091
    %v3690 = vunpack.c.h.b16 %v3091
    %v3691 = vunpack.c.l.b16 %v3092
    %v3692 = vunpack.c.h.b16 %v3092
    %v3693 = vunpack.c.l.b16 %v3093
    %v3694 = vunpack.c.l.b16 %v3094
    %v3695 = vunpack.c.h.b16 %v3094
    %v3696 = vunpack.c.l.b16 %v3095
    %v3697 = vunpack.c.h.b16 %v3095
    %v3698 = vunpack.c.l.b16 %v3096
    %v3699 = vunpack.c.h.b16 %v3096
    %v3700 = vunpack.c.l.b16 %v3097
    %v3701 = vunpack.c.l.b16 %v3098
    %v3702 = vunpack.c.h.b16 %v3098
    %v3703 = vunpack.c.l.b16 %v3099
    %v3704 = vunpack.c.h.b16 %v3099
    %v3705 = vunpack.c.l.b16 %v3100
    %v3706 = vunpack.c.h.b16 %v3100
    %v3707 = vunpack.c.l.b16 %v3101
    %v3708 = vunpack.c.l.b16 %v3102
    %v3709 = vunpack.c.h.b16 %v3102
    %v3710 = vunpack.c.l.b16 %v3103
    %v3711 = vunpack.c.h.b16 %v3103
    %v3712 = vunpack.c.l.b16 %v3104
    %v3713 = vunpack.c.h.b16 %v3104
    %v3714 = vunpack.c.l.b16 %v3105
    %v3715 = vunpack.c.l.b16 %v3106
    %v3716 = vunpack.c.h.b16 %v3106
    %v3717 = vunpack.c.l.b16 %v3107
    %v3718 = vunpack.c.h.b16 %v3107
    %v3719 = vunpack.c.l.b16 %v3108
    %v3720 = vunpack.c.h.b16 %v3108
    %v3721 = vunpack.c.l.b16 %v3109
    %v3722 = vunpack.c.l.b16 %v3110
    %v3723 = vunpack.c.h.b16 %v3110
    %v3724 = vunpack.c.l.b16 %v3111
    %v3725 = vunpack.c.h.b16 %v3111
    %v3726 = vunpack.c.l.b16 %v3112
    %v3727 = vunpack.c.h.b16 %v3112
    %v3728 = vunpack.c.l.b16 %v3113
    %v3729 = vunpack.c.l.b16 %v3114
    %v3730 = vunpack.c.h.b16 %v3114
    %v3731 = vunpack.c.l.b16 %v3115
    %v3732 = vunpack.c.h.b16 %v3115
    %v3733 = vunpack.c.l.b16 %v3116
    %v3734 = vunpack.c.h.b16 %v3116
    %v3735 = vunpack.c.l.b16 %v3117
    %v3736 = vunpack.c.l.b16 %v3118
    %v3737 = vunpack.c.h.b16 %v3118
    %v3738 = vunpack.c.l.b16 %v3119
    %v3739 = vunpack.c.h.b16 %v3119
    %v3740 = vunpack.c.l.b16 %v3120
    %v3741 = vunpack.c.h.b16 %v3120
    %v3742 = vunpack.c.l.b16 %v3121
    %v3743 = vunpack.c.l.b16 %v3122
    %v3744 = vunpack.c.h.b16 %v3122
    %v3745 = vunpack.c.l.b16 %v3123
    %v3746 = vunpack.c.h.b16 %v3123
    %v3747 = vunpack.c.l.b16 %v3124
    %v3748 = vunpack.c.h.b16 %v3124
    %v3749 = vunpack.c.l.b16 %v3125
    %v3750 = vunpack.c.l.b16 %v3126
    %v3751 = vunpack.c.h.b16 %v3126
    %v3752 = vunpack.c.l.b16 %v3127
    %v3753 = vunpack.c.h.b16 %v3127
    %v3754 = vunpack.c.l.b16 %v3128
    %v3755 = vunpack.c.h.b16 %v3128
    %v3756 = vunpack.c.l.b16 %v3129
    %v3757 = vunpack.c.l.b16 %v3130
    %v3758 = vunpack.c.h.b16 %v3130
    %v3759 = vunpack.c.l.b16 %v3131
    %v3760 = vunpack.c.h.b16 %v3131
    %v3761 = vunpack.c.l.b16 %v3132
    %v3762 = vunpack.c.h.b16 %v3132
    %v3763 = vunpack.c.l.b16 %v3133
    %v3764 = vunpack.c.l.b16 %v3134
    %v3765 = vunpack.c.h.b16 %v3134
    %v3766 = vunpack.c.l.b16 %v3135
    %v3767 = vunpack.c.h.b16 %v3135
    %v3768 = vunpack.c.l.b16 %v3136
    %v3769 = vunpack.c.h.b16 %v3136
    %v3770 = vunpack.c.l.b16 %v3137
    %v3771 = vunpack.c.l.b16 %v3138
    %v3772 = vunpack.c.h.b16 %v3138
    %v3773 = vunpack.c.l.b16 %v3139
    %v3774 = vunpack.c.h.b16 %v3139
    %v3775 = vunpack.c.l.b16 %v3140
    %v3776 = vunpack.c.h.b16 %v3140
    %v3777 = vunpack.c.l.b16 %v3141
    %v3778 = vunpack.c.l.b16 %v3142
    %v3779 = vunpack.c.h.b16 %v3142
    %v3780 = vunpack.c.l.b16 %v3143
    %v3781 = vunpack.c.h.b16 %v3143
    %v3782 = vunpack.c.l.b16 %v3144
    %v3783 = vunpack.c.h.b16 %v3144
    %v3784 = vunpack.c.l.b16 %v3145
    %v3785 = vunpack.c.l.b16 %v3146
    %v3786 = vunpack.c.h.b16 %v3146
    %v3787 = vunpack.c.l.b16 %v3147
    %v3788 = vunpack.c.h.b16 %v3147
    %v3789 = vunpack.c.l.b16 %v3148
    %v3790 = vunpack.c.h.b16 %v3148
    %v3791 = vunpack.c.l.b16 %v3149
    %v3792 = vunpack.c.l.b16 %v3150
    %v3793 = vunpack.c.h.b16 %v3150
    %v3794 = vunpack.c.l.b16 %v3151
    %v3795 = vunpack.c.h.b16 %v3151
    %v3796 = vunpack.c.l.b16 %v3152
    %v3797 = vunpack.c.h.b16 %v3152
    %v3798 = vunpack.c.l.b16 %v3153
    %v3799 = vunpack.c.l.b16 %v3154
    %v3800 = vunpack.c.h.b16 %v3154
    %v3801 = vunpack.c.l.b16 %v3155
    %v3802 = vunpack.c.h.b16 %v3155
    %v3803 = vunpack.c.l.b16 %v3156
    %v3804 = vunpack.c.h.b16 %v3156
    %v3805 = vunpack.c.l.b16 %v3157
    %v3806 = vunpack.c.l.b16 %v3158
    %v3807 = vunpack.c.h.b16 %v3158
    %v3808 = vunpack.c.l.b16 %v3159
    %v3809 = vunpack.c.h.b16 %v3159
    %v3810 = vunpack.c.l.b16 %v3160
    %v3811 = vunpack.c.h.b16 %v3160
    %v3812 = vunpack.c.l.b16 %v3161
    %v3813 = vunpack.c.l.b16 %v3162
    %v3814 = vunpack.c.h.b16 %v3162
    %v3815 = vunpack.c.l.b16 %v3163
    %v3816 = vunpack.c.h.b16 %v3163
    %v3817 = vunpack.c.l.b16 %v3164
    %v3818 = vunpack.c.h.b16 %v3164
    %v3819 = vunpack.c.l.b16 %v3165
    %v3820 = vunpack.c.l.b16 %v3166
    %v3821 = vunpack.c.h.b16 %v3166
    %v3822 = vunpack.c.l.b16 %v3167
    %v3823 = vunpack.c.h.b16 %v3167
    %v3824 = vunpack.c.l.b16 %v3168
    %v3825 = vunpack.c.h.b16 %v3168
    %v3826 = vunpack.c.l.b16 %v3169
    %v3827 = vunpack.c.l.b16 %v3170
    %v3828 = vunpack.c.h.b16 %v3170
    %v3829 = vunpack.c.l.b16 %v3171
    %v3830 = vunpack.c.h.b16 %v3171
    %v3831 = vunpack.c.l.b16 %v3172
    %v3832 = vunpack.c.h.b16 %v3172
    %v3833 = vunpack.c.l.b16 %v3173
    %v3834 = vunpack.c.l.b16 %v3174
    %v3835 = vunpack.c.h.b16 %v3174
    %v3836 = vunpack.c.l.b16 %v3175
    %v3837 = vunpack.c.h.b16 %v3175
    %v3838 = vunpack.c.l.b16 %v3176
    %v3839 = vunpack.c.h.b16 %v3176
    %v3840 = vunpack.c.l.b16 %v3177
    %v3841 = vunpack.c.l.b16 %v3178
    %v3842 = vunpack.c.h.b16 %v3178
    %v3843 = vunpack.c.l.b16 %v3179
    %v3844 = vunpack.c.h.b16 %v3179
    %v3845 = vunpack.c.l.b16 %v3180
    %v3846 = vunpack.c.h.b16 %v3180
    %v3847 = vunpack.c.l.b16 %v3181
    %v3848 = vunpack.c.l.b16 %v3182
    %v3849 = vunpack.c.h.b16 %v3182
    %v3850 = vunpack.c.l.b16 %v3183
    %v3851 = vunpack.c.h.b16 %v3183
    %v3852 = vunpack.c.l.b16 %v3184
    %v3853 = vunpack.c.h.b16 %v3184
    %v3854 = vunpack.c.l.b16 %v3185
    %v3855 = vunpack.c.l.b16 %v3186
    %v3856 = vunpack.c.h.b16 %v3186
    %v3857 = vunpack.c.l.b16 %v3187
    %v3858 = vunpack.c.h.b16 %v3187
    %v3859 = vunpack.c.l.b16 %v3188
    %v3860 = vunpack.c.h.b16 %v3188
    %v3861 = vunpack.c.l.b16 %v3189
    %v3862 = vunpack.c.l.b16 %v3190
    %v3863 = vunpack.c.h.b16 %v3190
    %v3864 = vunpack.c.l.b16 %v3191
    %v3865 = vunpack.c.h.b16 %v3191
    %v3866 = vunpack.c.l.b16 %v3192
    %v3867 = vunpack.c.h.b16 %v3192
    %v3868 = vunpack.c.l.b16 %v3193
    %v3869 = vunpack.c.l.b16 %v3194
    %v3870 = vunpack.c.h.b16 %v3194
    %v3871 = vunpack.c.l.b16 %v3195
    %v3872 = vunpack.c.h.b16 %v3195
    %v3873 = vunpack.c.l.b16 %v3196
    %v3874 = vunpack.c.h.b16 %v3196
    %v3875 = vunpack.c.l.b16 %v3197
    %v3876 = vunpack.c.l.b16 %v3198
    %v3877 = vunpack.c.h.b16 %v3198
    %v3878 = vunpack.c.l.b16 %v3199
    %v3879 = vunpack.c.h.b16 %v3199
    %v3880 = vunpack.c.l.b16 %v3200
    %v3881 = vunpack.c.h.b16 %v3200
    %v3882 = vunpack.c.l.b16 %v3201
    %v3883 = vunpack.c.l.b16 %v3202
    %v3884 = vunpack.c.h.b16 %v3202
    %v3885 = vunpack.c.l.b16 %v3203
    %v3886 = vunpack.c.h.b16 %v3203
    %v3887 = vunpack.c.l.b16 %v3204
    %v3888 = vunpack.c.h.b16 %v3204
    %v3889 = vunpack.c.l.b16 %v3205
    %v3890 = vunpack.c.l.b16 %v3206
    %v3891 = vunpack.c.h.b16 %v3206
    %v3892 = vunpack.c.l.b16 %v3207
    %v3893 = vunpack.c.h.b16 %v3207
    %v3894 = vunpack.c.l.b16 %v3208
    %v3895 = vunpack.c.h.b16 %v3208
    %v3896 = vunpack.c.l.b16 %v3209
    %v3897 = vunpack.c.l.b16 %v3210
    %v3898 = vunpack.c.h.b16 %v3210
    %v3899 = vunpack.c.l.b16 %v3211
    %v3900 = vunpack.c.h.b16 %v3211
    %v3901 = vunpack.c.l.b16 %v3212
    %v3902 = vunpack.c.h.b16 %v3212
    %v3903 = vunpack.c.l.b16 %v3213
    %v3904 = vunpack.c.l.b16 %v3214
    %v3905 = vunpack.c.h.b16 %v3214
    %v3906 = vunpack.c.l.b16 %v3215
    %v3907 = vunpack.c.h.b16 %v3215
    %v3908 = vunpack.c.l.b16 %v3216
    %v3909 = vunpack.c.h.b16 %v3216
    %v3910 = vunpack.c.l.b16 %v3217
    %v3911 = vunpack.c.l.b16 %v3218
    %v3912 = vunpack.c.h.b16 %v3218
    %v3913 = vunpack.c.l.b16 %v3219
    %v3914 = vunpack.c.h.b16 %v3219
    %v3915 = vunpack.c.l.b16 %v3220
    %v3916 = vunpack.c.h.b16 %v3220
    %v3917 = vunpack.c.l.b16 %v3221
    %v3918 = vunpack.c.l.b16 %v3222
    %v3919 = vunpack.c.h.b16 %v3222
    %v3920 = vunpack.c.l.b16 %v3223
    %v3921 = vunpack.c.h.b16 %v3223
    %v3922 = vunpack.c.l.b16 %v3224
    %v3923 = vunpack.c.h.b16 %v3224
    %v3924 = vunpack.c.l.b16 %v3225
    %v3925 = vunpack.c.l.b16 %v3226
    %v3926 = vunpack.c.h.b16 %v3226
    %v3927 = vunpack.c.l.b16 %v3227
    %v3928 = vunpack.c.h.b16 %v3227
    %v3929 = vunpack.c.l.b16 %v3228
    %v3930 = vunpack.c.h.b16 %v3228
    %v3931 = vunpack.c.l.b16 %v3229
    %v3932 = vunpack.c.l.b16 %v3230
    %v3933 = vunpack.c.h.b16 %v3230
    %v3934 = vunpack.c.l.b16 %v3231
    %v3935 = vunpack.c.h.b16 %v3231
    %v3936 = vunpack.c.l.b16 %v3232
    %v3937 = vunpack.c.h.b16 %v3232
    %v3938 = vunpack.c.l.b16 %v3233
    %v3939 = vunpack.c.l.b16 %v3234
    %v3940 = vunpack.c.h.b16 %v3234
    %v3941 = vunpack.c.l.b16 %v3235
    %v3942 = vunpack.c.h.b16 %v3235
    %v3943 = vunpack.c.l.b16 %v3236
    %v3944 = vunpack.c.h.b16 %v3236
    %v3945 = vunpack.c.l.b16 %v3237
    %v3946 = vunpack.c.l.b16 %v3238
    %v3947 = vunpack.c.h.b16 %v3238
    %v3948 = vunpack.c.l.b16 %v3239
    %v3949 = vunpack.c.h.b16 %v3239
    %v3950 = vunpack.c.l.b16 %v3240
    %v3951 = vunpack.c.h.b16 %v3240
    %v3952 = vunpack.c.l.b16 %v3241
    %v3953 = vunpack.c.l.b16 %v3242
    %v3954 = vunpack.c.h.b16 %v3242
    %v3955 = vunpack.c.l.b16 %v3243
    %v3956 = vunpack.c.h.b16 %v3243
    %v3957 = vunpack.c.l.b16 %v3244
    %v3958 = vunpack.c.h.b16 %v3244
    %v3959 = vunpack.c.l.b16 %v3245
    %v3960 = vunpack.c.l.b16 %v3246
    %v3961 = vunpack.c.h.b16 %v3246
    %v3962 = vunpack.c.l.b16 %v3247
    %v3963 = vunpack.c.h.b16 %v3247
    %v3964 = vunpack.c.l.b16 %v3248
    %v3965 = vunpack.c.h.b16 %v3248
    %v3966 = vunpack.c.l.b16 %v3249
    %v3967 = vunpack.c.l.b16 %v3250
    %v3968 = vunpack.c.h.b16 %v3250
    %v3969 = vunpack.c.l.b16 %v3251
    %v3970 = vunpack.c.h.b16 %v3251
    %v3971 = vunpack.c.l.b16 %v3252
    %v3972 = vunpack.c.h.b16 %v3252
    %v3973 = vunpack.c.l.b16 %v3253
    %v3974 = vunpack.c.l.b16 %v3254
    %v3975 = vunpack.c.h.b16 %v3254
    %v3976 = vunpack.c.l.b16 %v3255
    %v3977 = vunpack.c.h.b16 %v3255
    %v3978 = vunpack.c.l.b16 %v3256
    %v3979 = vunpack.c.h.b16 %v3256
    %v3980 = vunpack.c.l.b16 %v3257
    %v3981 = vunpack.c.l.b16 %v3258
    %v3982 = vunpack.c.h.b16 %v3258
    %v3983 = vunpack.c.l.b16 %v3259
    %v3984 = vunpack.c.h.b16 %v3259
    %v3985 = vunpack.c.l.b16 %v3260
    %v3986 = vunpack.c.h.b16 %v3260
    %v3987 = vunpack.c.l.b16 %v3261
    %v3988 = vunpack.c.l.b16 %v3262
    %v3989 = vunpack.c.h.b16 %v3262
    %v3990 = vunpack.c.l.b16 %v3263
    %v3991 = vunpack.c.h.b16 %v3263
    %v3992 = vunpack.c.l.b16 %v3264
    %v3993 = vunpack.c.h.b16 %v3264
    %v3994 = vunpack.c.l.b16 %v3265
    %v3995 = vunpack.c.l.b16 %v3266
    %v3996 = vunpack.c.h.b16 %v3266
    %v3997 = vunpack.c.l.b16 %v3267
    %v3998 = vunpack.c.h.b16 %v3267
    %v3999 = vunpack.c.l.b16 %v3268
    %v4000 = vunpack.c.h.b16 %v3268
    %v4001 = vunpack.c.l.b16 %v3269
    %v4002 = vunpack.c.l.b16 %v3270
    %v4003 = vunpack.c.h.b16 %v3270
    %v4004 = vunpack.c.l.b16 %v3271
    %v4005 = vunpack.c.h.b16 %v3271
    %v4006 = vunpack.c.l.b16 %v3272
    %v4007 = vunpack.c.h.b16 %v3272
    %v4008 = vunpack.c.l.b16 %v3273
    %v4009 = vunpack.c.l.b16 %v3274
    %v4010 = vunpack.c.h.b16 %v3274
    %v4011 = vunpack.c.l.b16 %v3275
    %v4012 = vunpack.c.h.b16 %v3275
    %v4013 = vunpack.c.l.b16 %v3276
    %v4014 = vunpack.c.h.b16 %v3276
    %v4015 = vunpack.c.l.b16 %v3277
    %v4016 = vunpack.c.l.b16 %v3278
    %v4017 = vunpack.c.h.b16 %v3278
    %v4018 = vunpack.c.l.b16 %v3279
    %v4019 = vunpack.c.h.b16 %v3279
    %v4020 = vunpack.c.l.b16 %v3280
    %v4021 = vunpack.c.h.b16 %v3280
    %v4022 = vunpack.c.l.b16 %v3281
    %v4023 = vpack.c.b16 %v3582, %v3575
    %v4024 = vpack.c.b16 %v3583, %v3576
    %v4025 = vpack.c.b16 %v3584, %v3577
    %v4026 = vpack.c.b16 %v3585, %v3578
    %v4027 = vpack.c.b16 %v3586, %v3579
    %v4028 = vpack.c.b16 %v3587, %v3580
    %v4029 = vpack.c.b16 %v3588, %v3581
    %v4030 = vpack.c.b16 %v3596, %v3589
    %v4031 = vpack.c.b16 %v3597, %v3590
    %v4032 = vpack.c.b16 %v3598, %v3591
    %v4033 = vpack.c.b16 %v3599, %v3592
    %v4034 = vpack.c.b16 %v3600, %v3593
    %v4035 = vpack.c.b16 %v3601, %v3594
    %v4036 = vpack.c.b16 %v3602, %v3595
    %v4037 = vpack.c.b16 %v3610, %v3603
    %v4038 = vpack.c.b16 %v3611, %v3604
    %v4039 = vpack.c.b16 %v3612, %v3605
    %v4040 = vpack.c.b16 %v3613, %v3606
    %v4041 = vpack.c.b16 %v3614, %v3607
    %v4042 = vpack.c.b16 %v3615, %v3608
    %v4043 = vpack.c.b16 %v3616, %v3609
    %v4044 = vpack.c.b16 %v3624, %v3617
    %v4045 = vpack.c.b16 %v3625, %v3618
    %v4046 = vpack.c.b16 %v3626, %v3619
    %v4047 = vpack.c.b16 %v3627, %v3620
    %v4048 = vpack.c.b16 %v3628, %v3621
    %v4049 = vpack.c.b16 %v3629, %v3622
    %v4050 = vpack.c.b16 %v3630, %v3623
    %v4051 = vpack.c.b16 %v3638, %v3631
    %v4052 = vpack.c.b16 %v3639, %v3632
    %v4053 = vpack.c.b16 %v3640, %v3633
    %v4054 = vpack.c.b16 %v3641, %v3634
    %v4055 = vpack.c.b16 %v3642, %v3635
    %v4056 = vpack.c.b16 %v3643, %v3636
    %v4057 = vpack.c.b16 %v3644, %v3637
    %v4058 = vpack.c.b16 %v3652, %v3645
    %v4059 = vpack.c.b16 %v3653, %v3646
    %v4060 = vpack.c.b16 %v3654, %v3647
    %v4061 = vpack.c.b16 %v3655, %v3648
    %v4062 = vpack.c.b16 %v3656, %v3649
    %v4063 = vpack.c.b16 %v3657, %v3650
    %v4064 = vpack.c.b16 %v3658, %v3651
    %v4065 = vpack.c.b16 %v3666, %v3659
    %v4066 = vpack.c.b16 %v3667, %v3660
    %v4067 = vpack.c.b16 %v3668, %v3661
    %v4068 = vpack.c.b16 %v3669, %v3662
    %v4069 = vpack.c.b16 %v3670, %v3663
    %v4070 = vpack.c.b16 %v3671, %v3664
    %v4071 = vpack.c.b16 %v3672, %v3665
    %v4072 = vpack.c.b16 %v3680, %v3673
    %v4073 = vpack.c.b16 %v3681, %v3674
    %v4074 = vpack.c.b16 %v3682, %v3675
    %v4075 = vpack.c.b16 %v3683, %v3676
    %v4076 = vpack.c.b16 %v3684, %v3677
    %v4077 = vpack.c.b16 %v3685, %v3678
    %v4078 = vpack.c.b16 %v3686, %v3679
    %v4079 = vpack.c.b16 %v3694, %v3687
    %v4080 = vpack.c.b16 %v3695, %v3688
    %v4081 = vpack.c.b16 %v3696, %v3689
    %v4082 = vpack.c.b16 %v3697, %v3690
    %v4083 = vpack.c.b16 %v3698, %v3691
    %v4084 = vpack.c.b16 %v3699, %v3692
    %v4085 = vpack.c.b16 %v3700, %v3693
    %v4086 = vpack.c.b16 %v3708, %v3701
    %v4087 = vpack.c.b16 %v3709, %v3702
    %v4088 = vpack.c.b16 %v3710, %v3703
    %v4089 = vpack.c.b16 %v3711, %v3704
    %v4090 = vpack.c.b16 %v3712, %v3705
    %v4091 = vpack.c.b16 %v3713, %v3706
    %v4092 = vpack.c.b16 %v3714, %v3707
    %v4093 = vpack.c.b16 %v3722, %v3715
    %v4094 = vpack.c.b16 %v3723, %v3716
    %v4095 = vpack.c.b16 %v3724, %v3717
    %v4096 = vpack.c.b16 %v3725, %v3718
    %v4097 = vpack.c.b16 %v3726, %v3719
    %v4098 = vpack.c.b16 %v3727, %v3720
    %v4099 = vpack.c.b16 %v3728, %v3721
    %v4100 = vpack.c.b16 %v3736, %v3729
    %v4101 = vpack.c.b16 %v3737, %v3730
    %v4102 = vpack.c.b16 %v3738, %v3731
    %v4103 = vpack.c.b16 %v3739, %v3732
    %v4104 = vpack.c.b16 %v3740, %v3733
    %v4105 = vpack.c.b16 %v3741, %v3734
    %v4106 = vpack.c.b16 %v3742, %v3735
    %v4107 = vpack.c.b16 %v3750, %v3743
    %v4108 = vpack.c.b16 %v3751, %v3744
    %v4109 = vpack.c.b16 %v3752, %v3745
    %v4110 = vpack.c.b16 %v3753, %v3746
    %v4111 = vpack.c.b16 %v3754, %v3747
    %v4112 = vpack.c.b16 %v3755, %v3748
    %v4113 = vpack.c.b16 %v3756, %v3749
    %v4114 = vpack.c.b16 %v3764, %v3757
    %v4115 = vpack.c.b16 %v3765, %v3758
    %v4116 = vpack.c.b16 %v3766, %v3759
    %v4117 = vpack.c.b16 %v3767, %v3760
    %v4118 = vpack.c.b16 %v3768, %v3761
    %v4119 = vpack.c.b16 %v3769, %v3762
    %v4120 = vpack.c.b16 %v3770, %v3763
    %v4121 = vpack.c.b16 %v3778, %v3771
    %v4122 = vpack.c.b16 %v3779, %v3772
    %v4123 = vpack.c.b16 %v3780, %v3773
    %v4124 = vpack.c.b16 %v3781, %v3774
    %v4125 = vpack.c.b16 %v3782, %v3775
    %v4126 = vpack.c.b16 %v3783, %v3776
    %v4127 = vpack.c.b16 %v3784, %v3777
    %v4128 = vpack.c.b16 %v3792, %v3785
    %v4129 = vpack.c.b16 %v3793, %v3786
    %v4130 = vpack.c.b16 %v3794, %v3787
    %v4131 = vpack.c.b16 %v3795, %v3788
    %v4132 = vpack.c.b16 %v3796, %v3789
    %v4133 = vpack.c.b16 %v3797, %v3790
    %v4134 = vpack.c.b16 %v3798, %v3791
    %v4135 = vpack.c.b16 %v3806, %v3799
    %v4136 = vpack.c.b16 %v3807, %v3800
    %v4137 = vpack.c.b16 %v3808, %v3801
    %v4138 = vpack.c.b16 %v3809, %v3802
    %v4139 = vpack.c.b16 %v3810, %v3803
    %v4140 = vpack.c.b16 %v3811, %v3804
    %v4141 = vpack.c.b16 %v3812, %v3805
    %v4142 = vpack.c.b16 %v3820, %v3813
    %v4143 = vpack.c.b16 %v3821, %v3814
    %v4144 = vpack.c.b16 %v3822, %v3815
    %v4145 = vpack.c.b16 %v3823, %v3816
    %v4146 = vpack.c.b16 %v3824, %v3817
    %v4147 = vpack.c.b16 %v3825, %v3818
    %v4148 = vpack.c.b16 %v3826, %v3819
    %v4149 = vpack.c.b16 %v3834, %v3827
    %v4150 = vpack.c.b16 %v3835, %v3828
    %v4151 = vpack.c.b16 %v3836, %v3829
    %v4152 = vpack.c.b16 %v3837, %v3830
    %v4153 = vpack.c.b16 %v3838, %v3831
    %v4154 = vpack.c.b16 %v3839, %v3832
    %v4155 = vpack.c.b16 %v3840, %v3833
    %v4156 = vpack.c.b16 %v3848, %v3841
    %v4157 = vpack.c.b16 %v3849, %v3842
    %v4158 = vpack.c.b16 %v3850, %v3843
    %v4159 = vpack.c.b16 %v3851, %v3844
    %v4160 = vpack.c.b16 %v3852, %v3845
    %v4161 = vpack.c.b16 %v3853, %v3846
    %v4162 = vpack.c.b16 %v3854, %v3847
    %v4163 = vpack.c.b16 %v3862, %v3855
    %v4164 = vpack.c.b16 %v3863, %v3856
    %v4165 = vpack.c.b16 %v3864, %v3857
    %v4166 = vpack.c.b16 %v3865, %v3858
    %v4167 = vpack.c.b16 %v3866, %v3859
    %v4168 = vpack.c.b16 %v3867, %v3860
    %v4169 = vpack.c.b16 %v3868, %v3861
    %v4170 = vpack.c.b16 %v3876, %v3869
    %v4171 = vpack.c.b16 %v3877, %v3870
    %v4172 = vpack.c.b16 %v3878, %v3871
    %v4173 = vpack.c.b16 %v3879, %v3872
    %v4174 = vpack.c.b16 %v3880, %v3873
    %v4175 = vpack.c.b16 %v3881, %v3874
    %v4176 = vpack.c.b16 %v3882, %v3875
    %v4177 = vpack.c.b16 %v3890, %v3883
    %v4178 = vpack.c.b16 %v3891, %v3884
    %v4179 = vpack.c.b16 %v3892, %v3885
    %v4180 = vpack.c.b16 %v3893, %v3886
    %v4181 = vpack.c.b16 %v3894, %v3887
    %v4182 = vpack.c.b16 %v3895, %v3888
    %v4183 = vpack.c.b16 %v3896, %v3889
    %v4184 = vpack.c.b16 %v3904, %v3897
    %v4185 = vpack.c.b16 %v3905, %v3898
    %v4186 = vpack.c.b16 %v3906, %v3899
    %v4187 = vpack.c.b16 %v3907, %v3900
    %v4188 = vpack.c.b16 %v3908, %v3901
    %v4189 = vpack.c.b16 %v3909, %v3902
    %v4190 = vpack.c.b16 %v3910, %v3903
    %v4191 = vpack.c.b16 %v3918, %v3911
    %v4192 = vpack.c.b16 %v3919, %v3912
    %v4193 = vpack.c.b16 %v3920, %v3913
    %v4194 = vpack.c.b16 %v3921, %v3914
    %v4195 = vpack.c.b16 %v3922, %v3915
    %v4196 = vpack.c.b16 %v3923, %v3916
    %v4197 = vpack.c.b16 %v3924, %v3917
    %v4198 = vpack.c.b16 %v3932, %v3925
    %v4199 = vpack.c.b16 %v3933, %v3926
    %v4200 = vpack.c.b16 %v3934, %v3927
    %v4201 = vpack.c.b16 %v3935, %v3928
    %v4202 = vpack.c.b16 %v3936, %v3929
    %v4203 = vpack.c.b16 %v3937, %v3930
    %v4204 = vpack.c.b16 %v3938, %v3931
    %v4205 = vpack.c.b16 %v3946, %v3939
    %v4206 = vpack.c.b16 %v3947, %v3940
    %v4207 = vpack.c.b16 %v3948, %v3941
    %v4208 = vpack.c.b16 %v3949, %v3942
    %v4209 = vpack.c.b16 %v3950, %v3943
    %v4210 = vpack.c.b16 %v3951, %v3944
    %v4211 = vpack.c.b16 %v3952, %v3945
    %v4212 = vpack.c.b16 %v3960, %v3953
    %v4213 = vpack.c.b16 %v3961, %v3954
    %v4214 = vpack.c.b16 %v3962, %v3955
    %v4215 = vpack.c.b16 %v3963, %v3956
    %v4216 = vpack.c.b16 %v3964, %v3957
    %v4217 = vpack.c.b16 %v3965, %v3958
    %v4218 = vpack.c.b16 %v3966, %v3959
    %v4219 = vpack.c.b16 %v3974, %v3967
    %v4220 = vpack.c.b16 %v3975, %v3968
    %v4221 = vpack.c.b16 %v3976, %v3969
    %v4222 = vpack.c.b16 %v3977, %v3970
    %v4223 = vpack.c.b16 %v3978, %v3971
    %v4224 = vpack.c.b16 %v3979, %v3972
    %v4225 = vpack.c.b16 %v3980, %v3973
    %v4226 = vpack.c.b16 %v3988, %v3981
    %v4227 = vpack.c.b16 %v3989, %v3982
    %v4228 = vpack.c.b16 %v3990, %v3983
    %v4229 = vpack.c.b16 %v3991, %v3984
    %v4230 = vpack.c.b16 %v3992, %v3985
    %v4231 = vpack.c.b16 %v3993, %v3986
    %v4232 = vpack.c.b16 %v3994, %v3987
    %v4233 = vpack.c.b16 %v4002, %v3995
    %v4234 = vpack.c.b16 %v4003, %v3996
    %v4235 = vpack.c.b16 %v4004, %v3997
    %v4236 = vpack.c.b16 %v4005, %v3998
    %v4237 = vpack.c.b16 %v4006, %v3999
    %v4238 = vpack.c.b16 %v4007, %v4000
    %v4239 = vpack.c.b16 %v4008, %v4001
    %v4240 = vpack.c.b16 %v4016, %v4009
    %v4241 = vpack.c.b16 %v4017, %v4010
    %v4242 = vpack.c.b16 %v4018, %v4011
    %v4243 = vpack.c.b16 %v4019, %v4012
    %v4244 = vpack.c.b16 %v4020, %v4013
    %v4245 = vpack.c.b16 %v4021, %v4014
    %v4246 = vpack.c.b16 %v4022, %v4015
    %4471 = vmatprep.subr.bf16.mxu0 %v4024
    %4472 = vmatpush1.bf16.msra.mxu0 %v4023
    %4473 = vmatprep.subr.bf16.mxu0 %v4031
    %4474 = vmatpush1.bf16.msra.mxu0 %v4030
    %4475 = vmatprep.subr.bf16.mxu0 %v4038
    %4476 = vmatpush1.bf16.msra.mxu0 %v4037
    %4477 = vmatprep.subr.bf16.mxu0 %v4045
    %4478 = vmatpush1.bf16.msra.mxu0 %v4044
    %4479 = vmatprep.subr.bf16.mxu0 %v4052
    %4480 = vmatpush1.bf16.msra.mxu0 %v4051
    %4481 = vmatprep.subr.bf16.mxu0 %v4059
    %4482 = vmatpush1.bf16.msra.mxu0 %v4058
    %4483 = vmatprep.subr.bf16.mxu0 %v4066
    %4484 = vmatpush1.bf16.msra.mxu0 %v4065
    %4485 = vmatprep.subr.bf16.mxu0 %v4073
    %4486 = vmatpush1.bf16.msra.mxu0 %v4072
    %4487 = vmatprep.subr.bf16.mxu0 %v4080
    %4488 = vmatpush1.bf16.msra.mxu0 %v4079
    %4489 = vmatprep.subr.bf16.mxu0 %v4087
    %4490 = vmatpush1.bf16.msra.mxu0 %v4086
    %4491 = vmatprep.subr.bf16.mxu0 %v4094
    %4492 = vmatpush1.bf16.msra.mxu0 %v4093
    %4493 = vmatprep.subr.bf16.mxu0 %v4101
    %4494 = vmatpush1.bf16.msra.mxu0 %v4100
    %4495 = vmatprep.subr.bf16.mxu0 %v4108
    %4496 = vmatpush1.bf16.msra.mxu0 %v4107
    %4497 = vmatprep.subr.bf16.mxu0 %v4115
    %4498 = vmatpush1.bf16.msra.mxu0 %v4114
    %4499 = vmatprep.subr.bf16.mxu0 %v4122
    %4500 = vmatpush1.bf16.msra.mxu0 %v4121
    %4501 = vmatprep.subr.bf16.mxu0 %v4129
    %4502 = vmatpush1.bf16.msra.mxu0 %v4128
    %4503 = vmatprep.mubr.bf16.mxu0 %v3023
    %4504 = vmatmul.mubr.bf16.gmra.mrb[0].mxu0 %v3022
    %v4505 = vpop.f32.mrb[0].mxu0
    %v4506 = vadd.f32 %v3287, %v4505
    %v4507 = vpop.f32.mrb[0].mxu0
    %v4508 = vadd.f32 %v3291, %v4507
    %v4509 = vpop.f32.mrb[0].mxu0
    %v4510 = vadd.f32 %v3287, %v4509
    %v4511 = vpop.f32.mrb[0].mxu0
    %v4512 = vadd.f32 %v3291, %v4511
    %4513 = vdwg.mxu0
    %4514 = vmatprep.subr.bf16.mxu0 %v4136
    %4515 = vmatpush1.bf16.msra.mxu0 %v4135
    %4516 = vmatprep.subr.bf16.mxu0 %v4143
    %4517 = vmatpush1.bf16.msra.mxu0 %v4142
    %4518 = vmatprep.subr.bf16.mxu0 %v4150
    %4519 = vmatpush1.bf16.msra.mxu0 %v4149
    %4520 = vmatprep.subr.bf16.mxu0 %v4157
    %4521 = vmatpush1.bf16.msra.mxu0 %v4156
    %4522 = vmatprep.subr.bf16.mxu0 %v4164
    %4523 = vmatpush1.bf16.msra.mxu0 %v4163
    %4524 = vmatprep.subr.bf16.mxu0 %v4171
    %4525 = vmatpush1.bf16.msra.mxu0 %v4170
    %4526 = vmatprep.subr.bf16.mxu0 %v4178
    %4527 = vmatpush1.bf16.msra.mxu0 %v4177
    %4528 = vmatprep.subr.bf16.mxu0 %v4185
    %4529 = vmatpush1.bf16.msra.mxu0 %v4184
    %4530 = vmatprep.subr.bf16.mxu0 %v4192
    %4531 = vmatpush1.bf16.msra.mxu0 %v4191
    %4532 = vmatprep.subr.bf16.mxu0 %v4199
    %4533 = vmatpush1.bf16.msra.mxu0 %v4198
    %4534 = vmatprep.subr.bf16.mxu0 %v4206
    %4535 = vmatpush1.bf16.msra.mxu0 %v4205
    %4536 = vmatprep.subr.bf16.mxu0 %v4213
    %4537 = vmatpush1.bf16.msra.mxu0 %v4212
    %4538 = vmatprep.subr.bf16.mxu0 %v4220
    %4539 = vmatpush1.bf16.msra.mxu0 %v4219
    %4540 = vmatprep.subr.bf16.mxu0 %v4227
    %4541 = vmatpush1.bf16.msra.mxu0 %v4226
    %4542 = vmatprep.subr.bf16.mxu0 %v4234
    %4543 = vmatpush1.bf16.msra.mxu0 %v4233
    %4544 = vmatprep.subr.bf16.mxu0 %v4241
    %4545 = vmatpush1.bf16.msra.mxu0 %v4240
    %4546 = vmatprep.mubr.bf16.mxu0 %v3025
    %4547 = vmatmul.mubr.bf16.gmra.mrb[0].mxu0 %v3024
    %v4548 = vpop.f32.mrb[0].mxu0
    %v4549 = vadd.f32 %v4506, %v4548
    %v4550 = vpop.f32.mrb[0].mxu0
    %v4551 = vadd.f32 %v4508, %v4550
    %v4552 = vpop.f32.mrb[0].mxu0
    %v4553 = vadd.f32 %v4510, %v4552
    %v4554 = vpop.f32.mrb[0].mxu0
    %v4555 = vadd.f32 %v4512, %v4554
    %4556 = vdwg.mxu0
    %4557 = vmatprep.subr.bf16.mxu0 %v4026
    %4558 = vmatpush1.bf16.msra.mxu0 %v4025
    %4559 = vmatprep.subr.bf16.mxu0 %v4033
    %4560 = vmatpush1.bf16.msra.mxu0 %v4032
    %4561 = vmatprep.subr.bf16.mxu0 %v4040
    %4562 = vmatpush1.bf16.msra.mxu0 %v4039
    %4563 = vmatprep.subr.bf16.mxu0 %v4047
    %4564 = vmatpush1.bf16.msra.mxu0 %v4046
    %4565 = vmatprep.subr.bf16.mxu0 %v4054
    %4566 = vmatpush1.bf16.msra.mxu0 %v4053
    %4567 = vmatprep.subr.bf16.mxu0 %v4061
    %4568 = vmatpush1.bf16.msra.mxu0 %v4060
    %4569 = vmatprep.subr.bf16.mxu0 %v4068
    %4570 = vmatpush1.bf16.msra.mxu0 %v4067
    %4571 = vmatprep.subr.bf16.mxu0 %v4075
    %4572 = vmatpush1.bf16.msra.mxu0 %v4074
    %4573 = vmatprep.subr.bf16.mxu0 %v4082
    %4574 = vmatpush1.bf16.msra.mxu0 %v4081
    %4575 = vmatprep.subr.bf16.mxu0 %v4089
    %4576 = vmatpush1.bf16.msra.mxu0 %v4088
    %4577 = vmatprep.subr.bf16.mxu0 %v4096
    %4578 = vmatpush1.bf16.msra.mxu0 %v4095
    %4579 = vmatprep.subr.bf16.mxu0 %v4103
    %4580 = vmatpush1.bf16.msra.mxu0 %v4102
    %4581 = vmatprep.subr.bf16.mxu0 %v4110
    %4582 = vmatpush1.bf16.msra.mxu0 %v4109
    %4583 = vmatprep.subr.bf16.mxu0 %v4117
    %4584 = vmatpush1.bf16.msra.mxu0 %v4116
    %4585 = vmatprep.subr.bf16.mxu0 %v4124
    %4586 = vmatpush1.bf16.msra.mxu0 %v4123
    %4587 = vmatprep.subr.bf16.mxu0 %v4131
    %4588 = vmatpush1.bf16.msra.mxu0 %v4130
    %4589 = vmatprep.mubr.bf16.mxu0 %v3023
    %4590 = vmatmul.mubr.bf16.gmra.mrb[0].mxu0 %v3022
    %v4591 = vpop.f32.mrb[0].mxu0
    %v4592 = vadd.f32 %v3295, %v4591
    %v4593 = vpop.f32.mrb[0].mxu0
    %v4594 = vadd.f32 %v3299, %v4593
    %v4595 = vpop.f32.mrb[0].mxu0
    %v4596 = vadd.f32 %v3295, %v4595
    %v4597 = vpop.f32.mrb[0].mxu0
    %v4598 = vadd.f32 %v3299, %v4597
    %4599 = vdwg.mxu0
    %4600 = vmatprep.subr.bf16.mxu0 %v4138
    %4601 = vmatpush1.bf16.msra.mxu0 %v4137
    %4602 = vmatprep.subr.bf16.mxu0 %v4145
    %4603 = vmatpush1.bf16.msra.mxu0 %v4144
    %4604 = vmatprep.subr.bf16.mxu0 %v4152
    %4605 = vmatpush1.bf16.msra.mxu0 %v4151
    %4606 = vmatprep.subr.bf16.mxu0 %v4159
    %4607 = vmatpush1.bf16.msra.mxu0 %v4158
    %4608 = vmatprep.subr.bf16.mxu0 %v4166
    %4609 = vmatpush1.bf16.msra.mxu0 %v4165
    %4610 = vmatprep.subr.bf16.mxu0 %v4173
    %4611 = vmatpush1.bf16.msra.mxu0 %v4172
    %4612 = vmatprep.subr.bf16.mxu0 %v4180
    %4613 = vmatpush1.bf16.msra.mxu0 %v4179
    %4614 = vmatprep.subr.bf16.mxu0 %v4187
    %4615 = vmatpush1.bf16.msra.mxu0 %v4186
    %4616 = vmatprep.subr.bf16.mxu0 %v4194
    %4617 = vmatpush1.bf16.msra.mxu0 %v4193
    %4618 = vmatprep.subr.bf16.mxu0 %v4201
    %4619 = vmatpush1.bf16.msra.mxu0 %v4200
    %4620 = vmatprep.subr.bf16.mxu0 %v4208
    %4621 = vmatpush1.bf16.msra.mxu0 %v4207
    %4622 = vmatprep.subr.bf16.mxu0 %v4215
    %4623 = vmatpush1.bf16.msra.mxu0 %v4214
    %4624 = vmatprep.subr.bf16.mxu0 %v4222
    %4625 = vmatpush1.bf16.msra.mxu0 %v4221
    %4626 = vmatprep.subr.bf16.mxu0 %v4229
    %4627 = vmatpush1.bf16.msra.mxu0 %v4228
    %4628 = vmatprep.subr.bf16.mxu0 %v4236
    %4629 = vmatpush1.bf16.msra.mxu0 %v4235
    %4630 = vmatprep.subr.bf16.mxu0 %v4243
    %4631 = vmatpush1.bf16.msra.mxu0 %v4242
    %4632 = vmatprep.mubr.bf16.mxu0 %v3025
    %4633 = vmatmul.mubr.bf16.gmra.mrb[0].mxu0 %v3024
    %v4634 = vpop.f32.mrb[0].mxu0
    %v4635 = vadd.f32 %v4592, %v4634
    %v4636 = vpop.f32.mrb[0].mxu0
    %v4637 = vadd.f32 %v4594, %v4636
    %v4638 = vpop.f32.mrb[0].mxu0
    %v4639 = vadd.f32 %v4596, %v4638
    %v4640 = vpop.f32.mrb[0].mxu0
    %v4641 = vadd.f32 %v4598, %v4640
    %4642 = vdwg.mxu0
    %4643 = vmatprep.subr.bf16.mxu0 %v4028
    %4644 = vmatpush1.bf16.msra.mxu0 %v4027
    %4645 = vmatprep.subr.bf16.mxu0 %v4035
    %4646 = vmatpush1.bf16.msra.mxu0 %v4034
    %4647 = vmatprep.subr.bf16.mxu0 %v4042
    %4648 = vmatpush1.bf16.msra.mxu0 %v4041
    %4649 = vmatprep.subr.bf16.mxu0 %v4049
    %4650 = vmatpush1.bf16.msra.mxu0 %v4048
    %4651 = vmatprep.subr.bf16.mxu0 %v4056
    %4652 = vmatpush1.bf16.msra.mxu0 %v4055
    %4653 = vmatprep.subr.bf16.mxu0 %v4063
    %4654 = vmatpush1.bf16.msra.mxu0 %v4062
    %4655 = vmatprep.subr.bf16.mxu0 %v4070
    %4656 = vmatpush1.bf16.msra.mxu0 %v4069
    %4657 = vmatprep.subr.bf16.mxu0 %v4077
    %4658 = vmatpush1.bf16.msra.mxu0 %v4076
    %4659 = vmatprep.subr.bf16.mxu0 %v4084
    %4660 = vmatpush1.bf16.msra.mxu0 %v4083
    %4661 = vmatprep.subr.bf16.mxu0 %v4091
    %4662 = vmatpush1.bf16.msra.mxu0 %v4090
    %4663 = vmatprep.subr.bf16.mxu0 %v4098
    %4664 = vmatpush1.bf16.msra.mxu0 %v4097
    %4665 = vmatprep.subr.bf16.mxu0 %v4105
    %4666 = vmatpush1.bf16.msra.mxu0 %v4104
    %4667 = vmatprep.subr.bf16.mxu0 %v4112
    %4668 = vmatpush1.bf16.msra.mxu0 %v4111
    %4669 = vmatprep.subr.bf16.mxu0 %v4119
    %4670 = vmatpush1.bf16.msra.mxu0 %v4118
    %4671 = vmatprep.subr.bf16.mxu0 %v4126
    %4672 = vmatpush1.bf16.msra.mxu0 %v4125
    %4673 = vmatprep.subr.bf16.mxu0 %v4133
    %4674 = vmatpush1.bf16.msra.mxu0 %v4132
    %4675 = vmatprep.mubr.bf16.mxu0 %v3023
    %4676 = vmatmul.mubr.bf16.gmra.mrb[0].mxu0 %v3022
    %v4677 = vpop.f32.mrb[0].mxu0
    %v4678 = vadd.f32 %v3303, %v4677
    %v4679 = vpop.f32.mrb[0].mxu0
    %v4680 = vadd.f32 %v3307, %v4679
    %v4681 = vpop.f32.mrb[0].mxu0
    %v4682 = vadd.f32 %v3303, %v4681
    %v4683 = vpop.f32.mrb[0].mxu0
    %v4684 = vadd.f32 %v3307, %v4683
    %4685 = vdwg.mxu0
    %4686 = vmatprep.subr.bf16.mxu0 %v4140
    %4687 = vmatpush1.bf16.msra.mxu0 %v4139
    %4688 = vmatprep.subr.bf16.mxu0 %v4147
    %4689 = vmatpush1.bf16.msra.mxu0 %v4146
    %4690 = vmatprep.subr.bf16.mxu0 %v4154
    %4691 = vmatpush1.bf16.msra.mxu0 %v4153
    %4692 = vmatprep.subr.bf16.mxu0 %v4161
    %4693 = vmatpush1.bf16.msra.mxu0 %v4160
    %4694 = vmatprep.subr.bf16.mxu0 %v4168
    %4695 = vmatpush1.bf16.msra.mxu0 %v4167
    %4696 = vmatprep.subr.bf16.mxu0 %v4175
    %4697 = vmatpush1.bf16.msra.mxu0 %v4174
    %4698 = vmatprep.subr.bf16.mxu0 %v4182
    %4699 = vmatpush1.bf16.msra.mxu0 %v4181
    %4700 = vmatprep.subr.bf16.mxu0 %v4189
    %4701 = vmatpush1.bf16.msra.mxu0 %v4188
    %4702 = vmatprep.subr.bf16.mxu0 %v4196
    %4703 = vmatpush1.bf16.msra.mxu0 %v4195
    %4704 = vmatprep.subr.bf16.mxu0 %v4203
    %4705 = vmatpush1.bf16.msra.mxu0 %v4202
    %4706 = vmatprep.subr.bf16.mxu0 %v4210
    %4707 = vmatpush1.bf16.msra.mxu0 %v4209
    %4708 = vmatprep.subr.bf16.mxu0 %v4217
    %4709 = vmatpush1.bf16.msra.mxu0 %v4216
    %4710 = vmatprep.subr.bf16.mxu0 %v4224
    %4711 = vmatpush1.bf16.msra.mxu0 %v4223
    %4712 = vmatprep.subr.bf16.mxu0 %v4231
    %4713 = vmatpush1.bf16.msra.mxu0 %v4230
    %4714 = vmatprep.subr.bf16.mxu0 %v4238
    %4715 = vmatpush1.bf16.msra.mxu0 %v4237
    %4716 = vmatprep.subr.bf16.mxu0 %v4245
    %4717 = vmatpush1.bf16.msra.mxu0 %v4244
    %4718 = vmatprep.mubr.bf16.mxu0 %v3025
    %4719 = vmatmul.mubr.bf16.gmra.mrb[0].mxu0 %v3024
    %v4720 = vpop.f32.mrb[0].mxu0
    %v4721 = vadd.f32 %v4678, %v4720
    %v4722 = vpop.f32.mrb[0].mxu0
    %v4723 = vadd.f32 %v4680, %v4722
    %v4724 = vpop.f32.mrb[0].mxu0
    %v4725 = vadd.f32 %v4682, %v4724
    %v4726 = vpop.f32.mrb[0].mxu0
    %v4727 = vadd.f32 %v4684, %v4726
    %4728 = vdwg.mxu0
    %4729 = vmatprep.subr.bf16.mxu0 0
    %4730 = vmatpush1.bf16.msra.mxu0 %v4029
    %4731 = vmatprep.subr.bf16.mxu0 0
    %4732 = vmatpush1.bf16.msra.mxu0 %v4036
    %4733 = vmatprep.subr.bf16.mxu0 0
    %4734 = vmatpush1.bf16.msra.mxu0 %v4043
    %4735 = vmatprep.subr.bf16.mxu0 0
    %4736 = vmatpush1.bf16.msra.mxu0 %v4050
    %4737 = vmatprep.subr.bf16.mxu0 0
    %4738 = vmatpush1.bf16.msra.mxu0 %v4057
    %4739 = vmatprep.subr.bf16.mxu0 0
    %4740 = vmatpush1.bf16.msra.mxu0 %v4064
    %4741 = vmatprep.subr.bf16.mxu0 0
    %4742 = vmatpush1.bf16.msra.mxu0 %v4071
    %4743 = vmatprep.subr.bf16.mxu0 0
    %4744 = vmatpush1.bf16.msra.mxu0 %v4078
    %4745 = vmatprep.subr.bf16.mxu0 0
    %4746 = vmatpush1.bf16.msra.mxu0 %v4085
    %4747 = vmatprep.subr.bf16.mxu0 0
    %4748 = vmatpush1.bf16.msra.mxu0 %v4092
    %4749 = vmatprep.subr.bf16.mxu0 0
    %4750 = vmatpush1.bf16.msra.mxu0 %v4099
    %4751 = vmatprep.subr.bf16.mxu0 0
    %4752 = vmatpush1.bf16.msra.mxu0 %v4106
    %4753 = vmatprep.subr.bf16.mxu0 0
    %4754 = vmatpush1.bf16.msra.mxu0 %v4113
    %4755 = vmatprep.subr.bf16.mxu0 0
    %4756 = vmatpush1.bf16.msra.mxu0 %v4120
    %4757 = vmatprep.subr.bf16.mxu0 0
    %4758 = vmatpush1.bf16.msra.mxu0 %v4127
    %4759 = vmatprep.subr.bf16.mxu0 0
    %4760 = vmatpush1.bf16.msra.mxu0 %v4134
    %4761 = vmatprep.mubr.bf16.mxu0 %v3023
    %4762 = vmatmul.mubr.bf16.gmra.mrb[0].mxu0 %v3022
    %v4763 = vpop.f32.mrb[0].mxu0
    %v4764 = vadd.f32 %v3311, %v4763
    %v4765 = vpop.f32.mrb[0].mxu0
    %v4766 = vpop.f32.mrb[0].mxu0
    %v4767 = vadd.f32 %v3311, %v4766
    %v4768 = vpop.f32.mrb[0].mxu0
    %4769 = vdwg.mxu0
    %4770 = vmatprep.subr.bf16.mxu0 0
    %4771 = vmatpush1.bf16.msra.mxu0 %v4141
    %4772 = vmatprep.subr.bf16.mxu0 0
    %4773 = vmatpush1.bf16.msra.mxu0 %v4148
    %4774 = vmatprep.subr.bf16.mxu0 0
    %4775 = vmatpush1.bf16.msra.mxu0 %v4155
    %4776 = vmatprep.subr.bf16.mxu0 0
    %4777 = vmatpush1.bf16.msra.mxu0 %v4162
    %4778 = vmatprep.subr.bf16.mxu0 0
    %4779 = vmatpush1.bf16.msra.mxu0 %v4169
    %4780 = vmatprep.subr.bf16.mxu0 0
    %4781 = vmatpush1.bf16.msra.mxu0 %v4176
    %4782 = vmatprep.subr.bf16.mxu0 0
    %4783 = vmatpush1.bf16.msra.mxu0 %v4183
    %4784 = vmatprep.subr.bf16.mxu0 0
    %4785 = vmatpush1.bf16.msra.mxu0 %v4190
    %4786 = vmatprep.subr.bf16.mxu0 0
    %4787 = vmatpush1.bf16.msra.mxu0 %v4197
    %4788 = vmatprep.subr.bf16.mxu0 0
    %4789 = vmatpush1.bf16.msra.mxu0 %v4204
    %4790 = vmatprep.subr.bf16.mxu0 0
    %4791 = vmatpush1.bf16.msra.mxu0 %v4211
    %4792 = vmatprep.subr.bf16.mxu0 0
    %4793 = vmatpush1.bf16.msra.mxu0 %v4218
    %4794 = vmatprep.subr.bf16.mxu0 0
    %4795 = vmatpush1.bf16.msra.mxu0 %v4225
    %4796 = vmatprep.subr.bf16.mxu0 0
    %4797 = vmatpush1.bf16.msra.mxu0 %v4232
    %4798 = vmatprep.subr.bf16.mxu0 0
    %4799 = vmatpush1.bf16.msra.mxu0 %v4239
    %4800 = vmatprep.subr.bf16.mxu0 0
    %4801 = vmatpush1.bf16.msra.mxu0 %v4246
    %4802 = vmatprep.mubr.bf16.mxu0 %v3025
    %4803 = vmatmul.mubr.bf16.gmra.mrb[0].mxu0 %v3024
    %v4804 = vpop.f32.mrb[0].mxu0
    %v4805 = vadd.f32 %v4764, %v4804
    %v4806 = vpop.f32.mrb[0].mxu0
    %v4807 = vpop.f32.mrb[0].mxu0
    %v4808 = vadd.f32 %v4767, %v4807
    %v4809 = vpop.f32.mrb[0].mxu0
    %4810 = vdwg.mxu0
    %v4811 = vadd.f32 %v34, %v4549
    %v4812 = vadd.f32 %v35, %v4551
    %v4813 = vadd.f32 %v36, %v4635
    %v4814 = vadd.f32 %v37, %v4637
    %v4815 = vadd.f32 %v38, %v4721
    %v4816 = vadd.f32 %v39, %v4723
    %v4817 = vadd.f32 %v40, %v4805
    %v4818 = vadd.f32 %v41, %v4553
    %v4819 = vadd.f32 %v42, %v4555
    %v4820 = vadd.f32 %v43, %v4639
    %v4821 = vadd.f32 %v44, %v4641
    %v4822 = vadd.f32 %v45, %v4725
    %v4823 = vadd.f32 %v46, %v4727
    %v4824 = vadd.f32 %v47, %v4808
    %4825 = vst [vmem:[#allocation2] sm:$0xff] %v4811
    %4826 = vst [vmem:[#allocation2 + $0x8] sm:$0xff] %v4812
    %4827 = vst [vmem:[#allocation2 + $0x10] sm:$0xff] %v4813
    %4828 = vst [vmem:[#allocation2 + $0x18] sm:$0xff] %v4814
    %4829 = vst [vmem:[#allocation2 + $0x20] sm:$0xff] %v4815
    %4830 = vst [vmem:[#allocation2 + $0x28] sm:$0xff] %v4816
    %4831 = vst.msk [vmem:[#allocation2 + $0x30] sm:$0xff] %vm84, %v4817
    %4832 = vst [vmem:[#allocation2 + $0x38] sm:$0xff] %v4818
    %4833 = vst [vmem:[#allocation2 + $0x40] sm:$0xff] %v4819
    %4834 = vst [vmem:[#allocation2 + $0x48] sm:$0xff] %v4820
    %4835 = vst [vmem:[#allocation2 + $0x50] sm:$0xff] %v4821
    %4836 = vst [vmem:[#allocation2 + $0x58] sm:$0xff] %v4822
    %4837 = vst [vmem:[#allocation2 + $0x60] sm:$0xff] %v4823
    %4838 = vst.msk [vmem:[#allocation2 + $0x68] sm:$0xff] %vm84, %v4824
    // Predicated region
    $region38: #{tokenmix.1} parent=1 // pred_check
      _
    $region39: #{tokenmix.1} parent=1 // pred_check_branch
      %4840 = sbr.rel (0) target = $region41
    $region40: #{tokenmix.1} parent=1 // pred_region
      %s4842 = ssub.s32 1792, 1792
      %4843 = vsyncadd [#allocation3], %s4842
      %s4844 = sshll.u32 [#allocation2], 4
      %s4845 = int_to_ptr.vmem [resolvable:$true] %s4844
      %4850 = dma.vmem_to_hbm [thread:$0]  %s4845, 1792, %s9, [#allocation3], 896, 896, 56
    $region41: #{tokenmix.1} parent=1 // pred_fallthru
      _
    // Predicated region
    $region42: #{tokenmix.1} parent=1 // pred_check
      _
    $region43: #{tokenmix.1} parent=1 // pred_check_branch
      %4852 = sbr.rel (0) target = $region45
    $region44: #{tokenmix.1} parent=1 // pred_region
      %4853 = dma.done [#allocation3], 1792
    $region45: #{tokenmix.1} parent=1 // pred_fallthru
      _
    %4854 = vsyncpa [#allocation3], 1

</llo_original>
